<compile_context>
chip_gen: v6e
topology: v6e:2x2x1
jax: 0.10.0
libtpu: 0.0.40
codegen_flags: <defaults>
</compile_context>

<pallas_src>
import math
from functools import partial

import numpy as np
import jax
import jax.numpy as jnp
from jax import lax
from jax.experimental import pallas as pl
from jax.experimental.pallas import tpu as pltpu


# ----------------------------------------------------------------------------
# Config
# ----------------------------------------------------------------------------

class Config:
    vocab_size = 512
    d_model = 64
    n_layers = 2
    n_heads = 4
    n_kv_heads = 2
    d_ff = 128
    max_seq_len = 64
    rope_base = 10000.0
    eps = 1e-6


# ----------------------------------------------------------------------------
# Single fused kernel: all layers + final norm + tied logits
# ----------------------------------------------------------------------------

def _transformer_kernel(eps, B, T, H, KVH, hd, F, L, scale,
                        x_ref, cos_ref, sin_ref,
                        wqkv_ref, wrot_ref, wo_ref,
                        n1_ref, n2_ref, w12_ref, w3_ref,
                        nf_ref, wout_ref, o_ref):
    Dq = H * hd
    Dk = KVH * hd
    group = H // KVH
    M = B * T

    x = x_ref[...]                                        # (M, D) f32 residual

    # RoPE tables (T, Dq+2Dk) -> tile over batch once (rows are batch-major).
    cos_m = jnp.concatenate([cos_ref[...]] * B, axis=0)   # (M, Dq+2Dk) f32
    sin_m = jnp.concatenate([sin_ref[...]] * B, axis=0)

    # Causal mask shared by all layers / heads.
    rowp = lax.broadcasted_iota(jnp.int32, (T, T), 0)
    colp = lax.broadcasted_iota(jnp.int32, (T, T), 1)
    causal = (colp <= rowp)[None, :, :]                   # (1, T, T)

    for l in range(L):                                    # static unroll (L=2)
        # ---- RMSNorm 1 + merged QKV projection + RoPE ------------------
        ms = jnp.mean(x * x, axis=-1, keepdims=True)
        xb = (x * lax.rsqrt(ms + eps) * n1_ref[l]).astype(jnp.bfloat16)

        qkv = jnp.dot(xb, wqkv_ref[l], preferred_element_type=jnp.float32)
        qkv_rot = jnp.dot(xb, wrot_ref[l], preferred_element_type=jnp.float32)
        # rotate_half folded into wrot; v columns have cos=1 / sin=0.
        qkv = qkv * cos_m + qkv_rot * sin_m                # (M, Dq+2Dk) f32

        qkv3 = qkv.astype(jnp.bfloat16).reshape(B, T, Dq + 2 * Dk)
        q3 = qkv3[:, :, :Dq]                               # (B, T, Dq)
        k3 = qkv3[:, :, Dq:Dq + Dk]                        # (B, T, Dk)
        v3 = qkv3[:, :, Dq + Dk:]                          # (B, T, Dk)

        # ---- GQA causal attention (batched over B, looped over heads) --
        heads = []
        for h in range(H):                                 # static unroll
            kvh = h // group                               # GQA K/V reuse
            qh = q3[:, :, h * hd:(h + 1) * hd]             # (B, T, hd)
            kh = k3[:, :, kvh * hd:(kvh + 1) * hd]
            vh = v3[:, :, kvh * hd:(kvh + 1) * hd]
            s = jnp.einsum("bqd,bkd->bqk", qh, kh,
                           preferred_element_type=jnp.float32) * scale
            s = jnp.where(causal, s, -1e30)
            m = jnp.max(s, axis=-1, keepdims=True)
            p = jnp.exp(s - m)
            p = p / jnp.sum(p, axis=-1, keepdims=True)      # exact softmax
            heads.append(jnp.einsum("bqk,bkd->bqd", p.astype(jnp.bfloat16), vh,
                                    preferred_element_type=jnp.float32))
        attn = jnp.concatenate(heads, axis=-1)              # (B, T, Dq) f32
        attn = attn.reshape(M, Dq).astype(jnp.bfloat16)

        # ---- o-projection + residual ------------------------------------
        x = x + jnp.dot(attn, wo_ref[l], preferred_element_type=jnp.float32)

        # ---- RMSNorm 2 + SwiGLU (merged w1|w2) + residual ----------------
        ms = jnp.mean(x * x, axis=-1, keepdims=True)
        hb = (x * lax.rsqrt(ms + eps) * n2_ref[l]).astype(jnp.bfloat16)
        h12 = jnp.dot(hb, w12_ref[l], preferred_element_type=jnp.float32)
        h1 = h12[:, :F]                                     # tile-aligned split
        h2 = h12[:, F:]
        g = (h1 * jax.nn.sigmoid(h1)) * h2                  # SiLU gate (f32)
        x = x + jnp.dot(g.astype(jnp.bfloat16), w3_ref[l],
                        preferred_element_type=jnp.float32)

    # ---- final RMSNorm + tied-embedding logits (lane-dense V=512 store) --
    ms = jnp.mean(x * x, axis=-1, keepdims=True)
    xb = (x * lax.rsqrt(ms + eps) * nf_ref[...]).astype(jnp.bfloat16)
    o_ref[...] = jnp.dot(xb, wout_ref[...], preferred_element_type=jnp.float32)


# ----------------------------------------------------------------------------
# Parameter / table construction
# ----------------------------------------------------------------------------

def _rot_blockdiag(head_dim, n_heads):
    """Block-diagonal +-1 matrix R such that x @ R == rotate_half(x) per head."""
    half = head_dim // 2
    r = np.zeros((head_dim, head_dim), np.float32)
    r[np.arange(half) + half, np.arange(half)] = -1.0   # first half <- -x2
    r[np.arange(half), np.arange(half) + half] = 1.0    # second half <- x1
    return np.kron(np.eye(n_heads, dtype=np.float32), r)


def rope_tables(head_dim, T, H, KVH, base=10000.0):
    """cos/sin laid out over the merged QKV slab columns:
    [q heads | k heads | v heads], v columns get cos=1 / sin=0 (pass-through)."""
    inv_freq = 1.0 / (base ** (jnp.arange(0, head_dim, 2, dtype=jnp.float32)
                               / head_dim))
    t = jnp.arange(T, dtype=jnp.float32)
    freqs = jnp.einsum("i,j->ij", t, inv_freq)              # (T, hd/2)
    emb = jnp.concatenate([freqs, freqs], axis=-1)          # (T, hd)
    cos, sin = jnp.cos(emb), jnp.sin(emb)
    Dk = KVH * head_dim
    cos_full = jnp.concatenate([jnp.tile(cos, (1, H)), jnp.tile(cos, (1, KVH)),
                                jnp.ones((T, Dk), jnp.float32)], axis=1)
    sin_full = jnp.concatenate([jnp.tile(sin, (1, H)), jnp.tile(sin, (1, KVH)),
                                jnp.zeros((T, Dk), jnp.float32)], axis=1)
    return cos_full, sin_full                               # (T, Dq+2Dk)


def init_params(key, cfg: Config):
    D, F, V = cfg.d_model, cfg.d_ff, cfg.vocab_size
    H, KVH = cfg.n_heads, cfg.n_kv_heads
    hd = D // H
    L = cfg.n_layers

    def normal(k, shape):
        return 0.02 * jax.random.normal(k, shape, dtype=jnp.float32)

    keys = jax.random.split(key, 1 + L)
    # matches torch: Embedding ~ N(0, 0.02), then weight *= sqrt(d_model);
    # the SAME scaled matrix is tied to the output head.
    emb = normal(keys[0], (V, D)) * math.sqrt(D)

    rot_q = jnp.asarray(_rot_blockdiag(hd, H))               # (Dq, Dq)
    rot_k = jnp.asarray(_rot_blockdiag(hd, KVH))             # (Dk, Dk)

    wqkv, wrot, wo, w12, w3, n1, n2 = [], [], [], [], [], [], []
    for li in range(L):
        lk = jax.random.split(keys[1 + li], 7)
        wq = normal(lk[0], (D, H * hd))
        wk = normal(lk[1], (D, KVH * hd))
        wv = normal(lk[2], (D, KVH * hd))
        # merged QKV weight and its rotate_half-folded companion (exact
        # column permutation + sign flip; v block zero: RoPE skips v).
        wqkv.append(jnp.concatenate([wq, wk, wv], axis=1))
        wrot.append(jnp.concatenate([wq @ rot_q, wk @ rot_k,
                                     jnp.zeros_like(wv)], axis=1))
        wo.append(normal(lk[3], (H * hd, D)))
        w12.append(jnp.concatenate([normal(lk[4], (D, F)),
                                    normal(lk[5], (D, F))], axis=1))
        w3.append(normal(lk[6], (F, D)))
        n1.append(jnp.ones((1, D), jnp.float32))
        n2.append(jnp.ones((1, D), jnp.float32))

    return {
        "emb": emb,                                     # f32 gather table
        "emb_out": emb.T.astype(jnp.bfloat16),          # (D, V) tied head
        "norm": jnp.ones((1, D), jnp.float32),
        "wqkv": jnp.stack(wqkv).astype(jnp.bfloat16),   # (L, D, Dq+2Dk)
        "wrot": jnp.stack(wrot).astype(jnp.bfloat16),   # (L, D, Dq+2Dk)
        "wo": jnp.stack(wo).astype(jnp.bfloat16),       # (L, Dq, D)
        "w12": jnp.stack(w12).astype(jnp.bfloat16),     # (L, D, 2F)
        "w3": jnp.stack(w3).astype(jnp.bfloat16),       # (L, F, D)
        "norm1": jnp.stack(n1),                         # (L, 1, D) f32
        "norm2": jnp.stack(n2),                         # (L, 1, D) f32
    }


# ----------------------------------------------------------------------------
# Forward pass (embedding gather in JAX glue, everything else fused)
# ----------------------------------------------------------------------------

def forward(params, input_ids, cfg: Config):
    B, T = input_ids.shape
    D = cfg.d_model
    H, KVH = cfg.n_heads, cfg.n_kv_heads
    hd = D // H
    V, F, L = cfg.vocab_size, cfg.d_ff, cfg.n_layers
    M = B * T
    scale = hd ** -0.5

    # Token embedding lookup (dynamic row gather) kept in plain JAX glue.
    x0 = jnp.take(params["emb"], input_ids.reshape(-1), axis=0)   # (M, D) f32

    cos, sin = rope_tables(hd, T, H, KVH, cfg.rope_base)          # (T, Dq+2Dk)

    kernel = partial(_transformer_kernel, cfg.eps, B, T, H, KVH, hd, F, L, scale)
    vmem = lambda: pl.BlockSpec(memory_space=pltpu.MemorySpace.VMEM)
    logits = pl.pallas_call(
        kernel,
        in_specs=[vmem() for _ in range(12)],
        out_specs=vmem(),
        out_shape=jax.ShapeDtypeStruct((M, V), jnp.float32),
    )(x0, cos, sin,
      params["wqkv"], params["wrot"], params["wo"],
      params["norm1"], params["norm2"], params["w12"], params["w3"],
      params["norm"], params["emb_out"])
    return logits.reshape(B, T, V)


if __name__ == "__main__":
    cfg = Config()
    key = jax.random.PRNGKey(0)
    pkey, dkey = jax.random.split(key)

    params = init_params(pkey, cfg)

    B, T = 2, 8
    input_ids = jax.random.randint(dkey, (B, T), 0, cfg.vocab_size,
                                   dtype=jnp.int32)

    fwd = jax.jit(partial(forward, cfg=cfg))
    logits = fwd(params, input_ids)
    jax.block_until_ready(logits)

    assert logits.shape == (B, T, cfg.vocab_size)
    assert bool(jnp.all(jnp.isfinite(logits)))
    print("KERNEL_OK")
</pallas_src>

<mosaic_0001>
module attributes {stable_mosaic.version = 11 : i64} {
  func.func @_transformer_kernel(%arg0: memref<16x64xf32, #tpu.memory_space<vmem>>, %arg1: memref<8x128xf32, #tpu.memory_space<vmem>>, %arg2: memref<8x128xf32, #tpu.memory_space<vmem>>, %arg3: memref<2x64x128xbf16, #tpu.memory_space<vmem>>, %arg4: memref<2x64x128xbf16, #tpu.memory_space<vmem>>, %arg5: memref<2x64x64xbf16, #tpu.memory_space<vmem>>, %arg6: memref<2x1x64xf32, #tpu.memory_space<vmem>>, %arg7: memref<2x1x64xf32, #tpu.memory_space<vmem>>, %arg8: memref<2x64x256xbf16, #tpu.memory_space<vmem>>, %arg9: memref<2x128x64xbf16, #tpu.memory_space<vmem>>, %arg10: memref<1x64xf32, #tpu.memory_space<vmem>>, %arg11: memref<64x512xbf16, #tpu.memory_space<vmem>>, %arg12: memref<16x512xf32, #tpu.memory_space<vmem>>) attributes {dimension_semantics = [], scalar_prefetch = 0 : i64, scratch_operands = 0 : i64, tpu.core_type = #tpu.core_type<tc>} {
    %c0 = arith.constant 0 : index
    %c0_0 = arith.constant 0 : index
    %0 = vector.load %arg0[%c0, %c0_0] : memref<16x64xf32, #tpu.memory_space<vmem>>, vector<16x64xf32>
    %c0_1 = arith.constant 0 : index
    %c0_2 = arith.constant 0 : index
    %1 = vector.load %arg1[%c0_1, %c0_2] : memref<8x128xf32, #tpu.memory_space<vmem>>, vector<8x128xf32>
    %2 = tpu.concatenate %1, %1 in 0 : vector<8x128xf32>, vector<8x128xf32> -> vector<16x128xf32>
    %c0_3 = arith.constant 0 : index
    %c0_4 = arith.constant 0 : index
    %3 = vector.load %arg2[%c0_3, %c0_4] : memref<8x128xf32, #tpu.memory_space<vmem>>, vector<8x128xf32>
    %4 = tpu.concatenate %3, %3 in 0 : vector<8x128xf32>, vector<8x128xf32> -> vector<16x128xf32>
    %5 = tpu.iota {dimensions = array<i32: 0>} : vector<8x8xi32>
    %6 = tpu.iota {dimensions = array<i32: 1>} : vector<8x8xi32>
    %7 = arith.cmpi sle, %6, %5 : vector<8x8xi32>
    %8 = vector.shape_cast %7 : vector<8x8xi1> to vector<1x8x8xi1>
    %9 = arith.mulf %0, %0 : vector<16x64xf32>
    %cst = arith.constant dense<0.000000e+00> : vector<16xf32>
    %10 = vector.multi_reduction <add>, %9, %cst [1] : vector<16x64xf32> to vector<16xf32>
    %11 = vector.shape_cast %10 : vector<16xf32> to vector<16x1xf32>
    %cst_5 = arith.constant 6.400000e+01 : f32
    %12 = vector.broadcast %cst_5 : f32 to vector<16x1xf32>
    %13 = arith.divf %11, %12 : vector<16x1xf32>
    %cst_6 = arith.constant 9.99999997E-7 : f32
    %14 = vector.broadcast %cst_6 : f32 to vector<16x1xf32>
    %15 = arith.addf %13, %14 : vector<16x1xf32>
    %16 = math.rsqrt %15 : vector<16x1xf32>
    %17 = vector.broadcast %16 : vector<16x1xf32> to vector<16x64xf32>
    %18 = arith.mulf %0, %17 : vector<16x64xf32>
    %c0_7 = arith.constant 0 : index
    %c0_8 = arith.constant 0 : index
    %c0_9 = arith.constant 0 : index
    %19 = vector.load %arg6[%c0_7, %c0_8, %c0_9] : memref<2x1x64xf32, #tpu.memory_space<vmem>>, vector<1x1x64xf32>
    %20 = vector.shape_cast %19 : vector<1x1x64xf32> to vector<1x64xf32>
    %21 = vector.broadcast %20 : vector<1x64xf32> to vector<16x64xf32>
    %22 = arith.mulf %18, %21 : vector<16x64xf32>
    %23 = arith.truncf %22 : vector<16x64xf32> to vector<16x64xbf16>
    %c0_10 = arith.constant 0 : index
    %c0_11 = arith.constant 0 : index
    %c0_12 = arith.constant 0 : index
    %24 = vector.load %arg3[%c0_10, %c0_11, %c0_12] : memref<2x64x128xbf16, #tpu.memory_space<vmem>>, vector<1x64x128xbf16>
    %25 = vector.shape_cast %24 : vector<1x64x128xbf16> to vector<64x128xbf16>
    %cst_13 = arith.constant dense<0.000000e+00> : vector<16x128xf32>
    %26 = tpu.matmul %23, %25, %cst_13 {dimension_numbers = #tpu.dot_dimension_numbers<[1], [0], [0], [1], [0, 0, 1, 1], [], []>} : vector<16x64xbf16>, vector<64x128xbf16>, vector<16x128xf32> -> vector<16x128xf32>
    %c0_14 = arith.constant 0 : index
    %c0_15 = arith.constant 0 : index
    %c0_16 = arith.constant 0 : index
    %27 = vector.load %arg4[%c0_14, %c0_15, %c0_16] : memref<2x64x128xbf16, #tpu.memory_space<vmem>>, vector<1x64x128xbf16>
    %28 = vector.shape_cast %27 : vector<1x64x128xbf16> to vector<64x128xbf16>
    %cst_17 = arith.constant dense<0.000000e+00> : vector<16x128xf32>
    %29 = tpu.matmul %23, %28, %cst_17 {dimension_numbers = #tpu.dot_dimension_numbers<[1], [0], [0], [1], [0, 0, 1, 1], [], []>} : vector<16x64xbf16>, vector<64x128xbf16>, vector<16x128xf32> -> vector<16x128xf32>
    %30 = arith.mulf %26, %2 : vector<16x128xf32>
    %31 = arith.mulf %29, %4 : vector<16x128xf32>
    %32 = arith.addf %30, %31 : vector<16x128xf32>
    %33 = arith.truncf %32 : vector<16x128xf32> to vector<16x128xbf16>
    %34 = vector.shape_cast %33 : vector<16x128xbf16> to vector<2x8x128xbf16>
    %35 = vector.extract_strided_slice %34 {offsets = [0, 0, 0], sizes = [2, 8, 64], strides = [1, 1, 1]} : vector<2x8x128xbf16> to vector<2x8x64xbf16>
    %36 = vector.extract_strided_slice %34 {offsets = [0, 0, 64], sizes = [2, 8, 32], strides = [1, 1, 1]} : vector<2x8x128xbf16> to vector<2x8x32xbf16>
    %37 = vector.extract_strided_slice %34 {offsets = [0, 0, 96], sizes = [2, 8, 32], strides = [1, 1, 1]} : vector<2x8x128xbf16> to vector<2x8x32xbf16>
    %38 = vector.extract_strided_slice %35 {offsets = [0, 0, 0], sizes = [2, 8, 16], strides = [1, 1, 1]} : vector<2x8x64xbf16> to vector<2x8x16xbf16>
    %39 = vector.extract_strided_slice %36 {offsets = [0, 0, 0], sizes = [2, 8, 16], strides = [1, 1, 1]} : vector<2x8x32xbf16> to vector<2x8x16xbf16>
    %40 = vector.extract_strided_slice %37 {offsets = [0, 0, 0], sizes = [2, 8, 16], strides = [1, 1, 1]} : vector<2x8x32xbf16> to vector<2x8x16xbf16>
    "tpu.trace_start"() <{level = 10 : i32, message = "bqd,bkd->bqk"}> : () -> ()
    %cst_18 = arith.constant dense<0.000000e+00> : vector<2x8x8xf32>
    %41 = tpu.matmul %38, %39, %cst_18 {dimension_numbers = #tpu.dot_dimension_numbers<[2], [2], [1], [1], [0, 0, 0, 1, 1, 1], [0], [0]>} : vector<2x8x16xbf16>, vector<2x8x16xbf16>, vector<2x8x8xf32> -> vector<2x8x8xf32>
    "tpu.trace_stop"() : () -> ()
    %cst_19 = arith.constant 2.500000e-01 : f32
    %42 = vector.broadcast %cst_19 : f32 to vector<2x8x8xf32>
    %43 = arith.mulf %41, %42 : vector<2x8x8xf32>
    %cst_20 = arith.constant -1.000000e+30 : f32
    %44 = vector.shape_cast %8 : vector<1x8x8xi1> to vector<1x8x8xi1>
    %45 = vector.broadcast %44 : vector<1x8x8xi1> to vector<2x8x8xi1>
    %46 = vector.broadcast %cst_20 : f32 to vector<2x8x8xf32>
    %47 = arith.select %45, %43, %46 : vector<2x8x8xi1>, vector<2x8x8xf32>
    %cst_21 = arith.constant dense<0xFF800000> : vector<2x8xf32>
    %48 = vector.multi_reduction <maximumf>, %47, %cst_21 [2] : vector<2x8x8xf32> to vector<2x8xf32>
    %49 = vector.shape_cast %48 : vector<2x8xf32> to vector<2x8x1xf32>
    %50 = vector.broadcast %49 : vector<2x8x1xf32> to vector<2x8x8xf32>
    %51 = arith.subf %47, %50 : vector<2x8x8xf32>
    %52 = math.exp %51 : vector<2x8x8xf32>
    %cst_22 = arith.constant dense<0.000000e+00> : vector<2x8xf32>
    %53 = vector.multi_reduction <add>, %52, %cst_22 [2] : vector<2x8x8xf32> to vector<2x8xf32>
    %54 = vector.shape_cast %53 : vector<2x8xf32> to vector<2x8x1xf32>
    %55 = vector.broadcast %54 : vector<2x8x1xf32> to vector<2x8x8xf32>
    %56 = arith.divf %52, %55 : vector<2x8x8xf32>
    %57 = arith.truncf %56 : vector<2x8x8xf32> to vector<2x8x8xbf16>
    "tpu.trace_start"() <{level = 10 : i32, message = "bqk,bkd->bqd"}> : () -> ()
    %cst_23 = arith.constant dense<0.000000e+00> : vector<2x8x16xf32>
    %58 = tpu.matmul %57, %40, %cst_23 {dimension_numbers = #tpu.dot_dimension_numbers<[2], [1], [1], [2], [0, 0, 0, 1, 1, 2], [0], [0]>} : vector<2x8x8xbf16>, vector<2x8x16xbf16>, vector<2x8x16xf32> -> vector<2x8x16xf32>
    "tpu.trace_stop"() : () -> ()
    %59 = vector.extract_strided_slice %35 {offsets = [0, 0, 16], sizes = [2, 8, 16], strides = [1, 1, 1]} : vector<2x8x64xbf16> to vector<2x8x16xbf16>
    %60 = vector.extract_strided_slice %36 {offsets = [0, 0, 0], sizes = [2, 8, 16], strides = [1, 1, 1]} : vector<2x8x32xbf16> to vector<2x8x16xbf16>
    %61 = vector.extract_strided_slice %37 {offsets = [0, 0, 0], sizes = [2, 8, 16], strides = [1, 1, 1]} : vector<2x8x32xbf16> to vector<2x8x16xbf16>
    "tpu.trace_start"() <{level = 10 : i32, message = "bqd,bkd->bqk"}> : () -> ()
    %cst_24 = arith.constant dense<0.000000e+00> : vector<2x8x8xf32>
    %62 = tpu.matmul %59, %60, %cst_24 {dimension_numbers = #tpu.dot_dimension_numbers<[2], [2], [1], [1], [0, 0, 0, 1, 1, 1], [0], [0]>} : vector<2x8x16xbf16>, vector<2x8x16xbf16>, vector<2x8x8xf32> -> vector<2x8x8xf32>
    "tpu.trace_stop"() : () -> ()
    %cst_25 = arith.constant 2.500000e-01 : f32
    %63 = vector.broadcast %cst_25 : f32 to vector<2x8x8xf32>
    %64 = arith.mulf %62, %63 : vector<2x8x8xf32>
    %cst_26 = arith.constant -1.000000e+30 : f32
    %65 = vector.shape_cast %8 : vector<1x8x8xi1> to vector<1x8x8xi1>
    %66 = vector.broadcast %65 : vector<1x8x8xi1> to vector<2x8x8xi1>
    %67 = vector.broadcast %cst_26 : f32 to vector<2x8x8xf32>
    %68 = arith.select %66, %64, %67 : vector<2x8x8xi1>, vector<2x8x8xf32>
    %cst_27 = arith.constant dense<0xFF800000> : vector<2x8xf32>
    %69 = vector.multi_reduction <maximumf>, %68, %cst_27 [2] : vector<2x8x8xf32> to vector<2x8xf32>
    %70 = vector.shape_cast %69 : vector<2x8xf32> to vector<2x8x1xf32>
    %71 = vector.broadcast %70 : vector<2x8x1xf32> to vector<2x8x8xf32>
    %72 = arith.subf %68, %71 : vector<2x8x8xf32>
    %73 = math.exp %72 : vector<2x8x8xf32>
    %cst_28 = arith.constant dense<0.000000e+00> : vector<2x8xf32>
    %74 = vector.multi_reduction <add>, %73, %cst_28 [2] : vector<2x8x8xf32> to vector<2x8xf32>
    %75 = vector.shape_cast %74 : vector<2x8xf32> to vector<2x8x1xf32>
    %76 = vector.broadcast %75 : vector<2x8x1xf32> to vector<2x8x8xf32>
    %77 = arith.divf %73, %76 : vector<2x8x8xf32>
    %78 = arith.truncf %77 : vector<2x8x8xf32> to vector<2x8x8xbf16>
    "tpu.trace_start"() <{level = 10 : i32, message = "bqk,bkd->bqd"}> : () -> ()
    %cst_29 = arith.constant dense<0.000000e+00> : vector<2x8x16xf32>
    %79 = tpu.matmul %78, %61, %cst_29 {dimension_numbers = #tpu.dot_dimension_numbers<[2], [1], [1], [2], [0, 0, 0, 1, 1, 2], [0], [0]>} : vector<2x8x8xbf16>, vector<2x8x16xbf16>, vector<2x8x16xf32> -> vector<2x8x16xf32>
    "tpu.trace_stop"() : () -> ()
    %80 = vector.extract_strided_slice %35 {offsets = [0, 0, 32], sizes = [2, 8, 16], strides = [1, 1, 1]} : vector<2x8x64xbf16> to vector<2x8x16xbf16>
    %81 = vector.extract_strided_slice %36 {offsets = [0, 0, 16], sizes = [2, 8, 16], strides = [1, 1, 1]} : vector<2x8x32xbf16> to vector<2x8x16xbf16>
    %82 = vector.extract_strided_slice %37 {offsets = [0, 0, 16], sizes = [2, 8, 16], strides = [1, 1, 1]} : vector<2x8x32xbf16> to vector<2x8x16xbf16>
    "tpu.trace_start"() <{level = 10 : i32, message = "bqd,bkd->bqk"}> : () -> ()
    %cst_30 = arith.constant dense<0.000000e+00> : vector<2x8x8xf32>
    %83 = tpu.matmul %80, %81, %cst_30 {dimension_numbers = #tpu.dot_dimension_numbers<[2], [2], [1], [1], [0, 0, 0, 1, 1, 1], [0], [0]>} : vector<2x8x16xbf16>, vector<2x8x16xbf16>, vector<2x8x8xf32> -> vector<2x8x8xf32>
    "tpu.trace_stop"() : () -> ()
    %cst_31 = arith.constant 2.500000e-01 : f32
    %84 = vector.broadcast %cst_31 : f32 to vector<2x8x8xf32>
    %85 = arith.mulf %83, %84 : vector<2x8x8xf32>
    %cst_32 = arith.constant -1.000000e+30 : f32
    %86 = vector.shape_cast %8 : vector<1x8x8xi1> to vector<1x8x8xi1>
    %87 = vector.broadcast %86 : vector<1x8x8xi1> to vector<2x8x8xi1>
    %88 = vector.broadcast %cst_32 : f32 to vector<2x8x8xf32>
    %89 = arith.select %87, %85, %88 : vector<2x8x8xi1>, vector<2x8x8xf32>
    %cst_33 = arith.constant dense<0xFF800000> : vector<2x8xf32>
    %90 = vector.multi_reduction <maximumf>, %89, %cst_33 [2] : vector<2x8x8xf32> to vector<2x8xf32>
    %91 = vector.shape_cast %90 : vector<2x8xf32> to vector<2x8x1xf32>
    %92 = vector.broadcast %91 : vector<2x8x1xf32> to vector<2x8x8xf32>
    %93 = arith.subf %89, %92 : vector<2x8x8xf32>
    %94 = math.exp %93 : vector<2x8x8xf32>
    %cst_34 = arith.constant dense<0.000000e+00> : vector<2x8xf32>
    %95 = vector.multi_reduction <add>, %94, %cst_34 [2] : vector<2x8x8xf32> to vector<2x8xf32>
    %96 = vector.shape_cast %95 : vector<2x8xf32> to vector<2x8x1xf32>
    %97 = vector.broadcast %96 : vector<2x8x1xf32> to vector<2x8x8xf32>
    %98 = arith.divf %94, %97 : vector<2x8x8xf32>
    %99 = arith.truncf %98 : vector<2x8x8xf32> to vector<2x8x8xbf16>
    "tpu.trace_start"() <{level = 10 : i32, message = "bqk,bkd->bqd"}> : () -> ()
    %cst_35 = arith.constant dense<0.000000e+00> : vector<2x8x16xf32>
    %100 = tpu.matmul %99, %82, %cst_35 {dimension_numbers = #tpu.dot_dimension_numbers<[2], [1], [1], [2], [0, 0, 0, 1, 1, 2], [0], [0]>} : vector<2x8x8xbf16>, vector<2x8x16xbf16>, vector<2x8x16xf32> -> vector<2x8x16xf32>
    "tpu.trace_stop"() : () -> ()
    %101 = vector.extract_strided_slice %35 {offsets = [0, 0, 48], sizes = [2, 8, 16], strides = [1, 1, 1]} : vector<2x8x64xbf16> to vector<2x8x16xbf16>
    %102 = vector.extract_strided_slice %36 {offsets = [0, 0, 16], sizes = [2, 8, 16], strides = [1, 1, 1]} : vector<2x8x32xbf16> to vector<2x8x16xbf16>
    %103 = vector.extract_strided_slice %37 {offsets = [0, 0, 16], sizes = [2, 8, 16], strides = [1, 1, 1]} : vector<2x8x32xbf16> to vector<2x8x16xbf16>
    "tpu.trace_start"() <{level = 10 : i32, message = "bqd,bkd->bqk"}> : () -> ()
    %cst_36 = arith.constant dense<0.000000e+00> : vector<2x8x8xf32>
    %104 = tpu.matmul %101, %102, %cst_36 {dimension_numbers = #tpu.dot_dimension_numbers<[2], [2], [1], [1], [0, 0, 0, 1, 1, 1], [0], [0]>} : vector<2x8x16xbf16>, vector<2x8x16xbf16>, vector<2x8x8xf32> -> vector<2x8x8xf32>
    "tpu.trace_stop"() : () -> ()
    %cst_37 = arith.constant 2.500000e-01 : f32
    %105 = vector.broadcast %cst_37 : f32 to vector<2x8x8xf32>
    %106 = arith.mulf %104, %105 : vector<2x8x8xf32>
    %cst_38 = arith.constant -1.000000e+30 : f32
    %107 = vector.shape_cast %8 : vector<1x8x8xi1> to vector<1x8x8xi1>
    %108 = vector.broadcast %107 : vector<1x8x8xi1> to vector<2x8x8xi1>
    %109 = vector.broadcast %cst_38 : f32 to vector<2x8x8xf32>
    %110 = arith.select %108, %106, %109 : vector<2x8x8xi1>, vector<2x8x8xf32>
    %cst_39 = arith.constant dense<0xFF800000> : vector<2x8xf32>
    %111 = vector.multi_reduction <maximumf>, %110, %cst_39 [2] : vector<2x8x8xf32> to vector<2x8xf32>
    %112 = vector.shape_cast %111 : vector<2x8xf32> to vector<2x8x1xf32>
    %113 = vector.broadcast %112 : vector<2x8x1xf32> to vector<2x8x8xf32>
    %114 = arith.subf %110, %113 : vector<2x8x8xf32>
    %115 = math.exp %114 : vector<2x8x8xf32>
    %cst_40 = arith.constant dense<0.000000e+00> : vector<2x8xf32>
    %116 = vector.multi_reduction <add>, %115, %cst_40 [2] : vector<2x8x8xf32> to vector<2x8xf32>
    %117 = vector.shape_cast %116 : vector<2x8xf32> to vector<2x8x1xf32>
    %118 = vector.broadcast %117 : vector<2x8x1xf32> to vector<2x8x8xf32>
    %119 = arith.divf %115, %118 : vector<2x8x8xf32>
    %120 = arith.truncf %119 : vector<2x8x8xf32> to vector<2x8x8xbf16>
    "tpu.trace_start"() <{level = 10 : i32, message = "bqk,bkd->bqd"}> : () -> ()
    %cst_41 = arith.constant dense<0.000000e+00> : vector<2x8x16xf32>
    %121 = tpu.matmul %120, %103, %cst_41 {dimension_numbers = #tpu.dot_dimension_numbers<[2], [1], [1], [2], [0, 0, 0, 1, 1, 2], [0], [0]>} : vector<2x8x8xbf16>, vector<2x8x16xbf16>, vector<2x8x16xf32> -> vector<2x8x16xf32>
    "tpu.trace_stop"() : () -> ()
    %122 = tpu.concatenate %58, %79, %100, %121 in 2 : vector<2x8x16xf32>, vector<2x8x16xf32>, vector<2x8x16xf32>, vector<2x8x16xf32> -> vector<2x8x64xf32>
    %123 = vector.shape_cast %122 : vector<2x8x64xf32> to vector<16x64xf32>
    %124 = arith.truncf %123 : vector<16x64xf32> to vector<16x64xbf16>
    %c0_42 = arith.constant 0 : index
    %c0_43 = arith.constant 0 : index
    %c0_44 = arith.constant 0 : index
    %125 = vector.load %arg5[%c0_42, %c0_43, %c0_44] : memref<2x64x64xbf16, #tpu.memory_space<vmem>>, vector<1x64x64xbf16>
    %126 = vector.shape_cast %125 : vector<1x64x64xbf16> to vector<64x64xbf16>
    %cst_45 = arith.constant dense<0.000000e+00> : vector<16x64xf32>
    %127 = tpu.matmul %124, %126, %cst_45 {dimension_numbers = #tpu.dot_dimension_numbers<[1], [0], [0], [1], [0, 0, 1, 1], [], []>} : vector<16x64xbf16>, vector<64x64xbf16>, vector<16x64xf32> -> vector<16x64xf32>
    %128 = arith.addf %0, %127 : vector<16x64xf32>
    %129 = arith.mulf %128, %128 : vector<16x64xf32>
    %cst_46 = arith.constant dense<0.000000e+00> : vector<16xf32>
    %130 = vector.multi_reduction <add>, %129, %cst_46 [1] : vector<16x64xf32> to vector<16xf32>
    %131 = vector.shape_cast %130 : vector<16xf32> to vector<16x1xf32>
    %cst_47 = arith.constant 6.400000e+01 : f32
    %132 = vector.broadcast %cst_47 : f32 to vector<16x1xf32>
    %133 = arith.divf %131, %132 : vector<16x1xf32>
    %cst_48 = arith.constant 9.99999997E-7 : f32
    %134 = vector.broadcast %cst_48 : f32 to vector<16x1xf32>
    %135 = arith.addf %133, %134 : vector<16x1xf32>
    %136 = math.rsqrt %135 : vector<16x1xf32>
    %137 = vector.broadcast %136 : vector<16x1xf32> to vector<16x64xf32>
    %138 = arith.mulf %128, %137 : vector<16x64xf32>
    %c0_49 = arith.constant 0 : index
    %c0_50 = arith.constant 0 : index
    %c0_51 = arith.constant 0 : index
    %139 = vector.load %arg7[%c0_49, %c0_50, %c0_51] : memref<2x1x64xf32, #tpu.memory_space<vmem>>, vector<1x1x64xf32>
    %140 = vector.shape_cast %139 : vector<1x1x64xf32> to vector<1x64xf32>
    %141 = vector.broadcast %140 : vector<1x64xf32> to vector<16x64xf32>
    %142 = arith.mulf %138, %141 : vector<16x64xf32>
    %143 = arith.truncf %142 : vector<16x64xf32> to vector<16x64xbf16>
    %c0_52 = arith.constant 0 : index
    %c0_53 = arith.constant 0 : index
    %c0_54 = arith.constant 0 : index
    %144 = vector.load %arg8[%c0_52, %c0_53, %c0_54] : memref<2x64x256xbf16, #tpu.memory_space<vmem>>, vector<1x64x256xbf16>
    %145 = vector.shape_cast %144 : vector<1x64x256xbf16> to vector<64x256xbf16>
    %cst_55 = arith.constant dense<0.000000e+00> : vector<16x256xf32>
    %146 = tpu.matmul %143, %145, %cst_55 {dimension_numbers = #tpu.dot_dimension_numbers<[1], [0], [0], [1], [0, 0, 1, 1], [], []>} : vector<16x64xbf16>, vector<64x256xbf16>, vector<16x256xf32> -> vector<16x256xf32>
    %147 = vector.extract_strided_slice %146 {offsets = [0, 0], sizes = [16, 128], strides = [1, 1]} : vector<16x256xf32> to vector<16x128xf32>
    %148 = vector.extract_strided_slice %146 {offsets = [0, 128], sizes = [16, 128], strides = [1, 1]} : vector<16x256xf32> to vector<16x128xf32>
    %149 = arith.negf %147 : vector<16x128xf32>
    %150 = math.exp %149 : vector<16x128xf32>
    %cst_56 = arith.constant 1.000000e+00 : f32
    %151 = vector.broadcast %cst_56 : f32 to vector<16x128xf32>
    %152 = arith.addf %151, %150 : vector<16x128xf32>
    %153 = arith.divf %151, %152 : vector<16x128xf32>
    %154 = arith.mulf %147, %153 : vector<16x128xf32>
    %155 = arith.mulf %154, %148 : vector<16x128xf32>
    %156 = arith.truncf %155 : vector<16x128xf32> to vector<16x128xbf16>
    %c0_57 = arith.constant 0 : index
    %c0_58 = arith.constant 0 : index
    %c0_59 = arith.constant 0 : index
    %157 = vector.load %arg9[%c0_57, %c0_58, %c0_59] : memref<2x128x64xbf16, #tpu.memory_space<vmem>>, vector<1x128x64xbf16>
    %158 = vector.shape_cast %157 : vector<1x128x64xbf16> to vector<128x64xbf16>
    %cst_60 = arith.constant dense<0.000000e+00> : vector<16x64xf32>
    %159 = tpu.matmul %156, %158, %cst_60 {dimension_numbers = #tpu.dot_dimension_numbers<[1], [0], [0], [1], [0, 0, 1, 1], [], []>} : vector<16x128xbf16>, vector<128x64xbf16>, vector<16x64xf32> -> vector<16x64xf32>
    %160 = arith.addf %128, %159 : vector<16x64xf32>
    %161 = arith.mulf %160, %160 : vector<16x64xf32>
    %cst_61 = arith.constant dense<0.000000e+00> : vector<16xf32>
    %162 = vector.multi_reduction <add>, %161, %cst_61 [1] : vector<16x64xf32> to vector<16xf32>
    %163 = vector.shape_cast %162 : vector<16xf32> to vector<16x1xf32>
    %cst_62 = arith.constant 6.400000e+01 : f32
    %164 = vector.broadcast %cst_62 : f32 to vector<16x1xf32>
    %165 = arith.divf %163, %164 : vector<16x1xf32>
    %cst_63 = arith.constant 9.99999997E-7 : f32
    %166 = vector.broadcast %cst_63 : f32 to vector<16x1xf32>
    %167 = arith.addf %165, %166 : vector<16x1xf32>
    %168 = math.rsqrt %167 : vector<16x1xf32>
    %169 = vector.broadcast %168 : vector<16x1xf32> to vector<16x64xf32>
    %170 = arith.mulf %160, %169 : vector<16x64xf32>
    %c1 = arith.constant 1 : index
    %c0_64 = arith.constant 0 : index
    %c0_65 = arith.constant 0 : index
    %171 = vector.load %arg6[%c1, %c0_64, %c0_65] : memref<2x1x64xf32, #tpu.memory_space<vmem>>, vector<1x1x64xf32>
    %172 = vector.shape_cast %171 : vector<1x1x64xf32> to vector<1x64xf32>
    %173 = vector.broadcast %172 : vector<1x64xf32> to vector<16x64xf32>
    %174 = arith.mulf %170, %173 : vector<16x64xf32>
    %175 = arith.truncf %174 : vector<16x64xf32> to vector<16x64xbf16>
    %c1_66 = arith.constant 1 : index
    %c0_67 = arith.constant 0 : index
    %c0_68 = arith.constant 0 : index
    %176 = vector.load %arg3[%c1_66, %c0_67, %c0_68] : memref<2x64x128xbf16, #tpu.memory_space<vmem>>, vector<1x64x128xbf16>
    %177 = vector.shape_cast %176 : vector<1x64x128xbf16> to vector<64x128xbf16>
    %cst_69 = arith.constant dense<0.000000e+00> : vector<16x128xf32>
    %178 = tpu.matmul %175, %177, %cst_69 {dimension_numbers = #tpu.dot_dimension_numbers<[1], [0], [0], [1], [0, 0, 1, 1], [], []>} : vector<16x64xbf16>, vector<64x128xbf16>, vector<16x128xf32> -> vector<16x128xf32>
    %c1_70 = arith.constant 1 : index
    %c0_71 = arith.constant 0 : index
    %c0_72 = arith.constant 0 : index
    %179 = vector.load %arg4[%c1_70, %c0_71, %c0_72] : memref<2x64x128xbf16, #tpu.memory_space<vmem>>, vector<1x64x128xbf16>
    %180 = vector.shape_cast %179 : vector<1x64x128xbf16> to vector<64x128xbf16>
    %cst_73 = arith.constant dense<0.000000e+00> : vector<16x128xf32>
    %181 = tpu.matmul %175, %180, %cst_73 {dimension_numbers = #tpu.dot_dimension_numbers<[1], [0], [0], [1], [0, 0, 1, 1], [], []>} : vector<16x64xbf16>, vector<64x128xbf16>, vector<16x128xf32> -> vector<16x128xf32>
    %182 = arith.mulf %178, %2 : vector<16x128xf32>
    %183 = arith.mulf %181, %4 : vector<16x128xf32>
    %184 = arith.addf %182, %183 : vector<16x128xf32>
    %185 = arith.truncf %184 : vector<16x128xf32> to vector<16x128xbf16>
    %186 = vector.shape_cast %185 : vector<16x128xbf16> to vector<2x8x128xbf16>
    %187 = vector.extract_strided_slice %186 {offsets = [0, 0, 0], sizes = [2, 8, 64], strides = [1, 1, 1]} : vector<2x8x128xbf16> to vector<2x8x64xbf16>
    %188 = vector.extract_strided_slice %186 {offsets = [0, 0, 64], sizes = [2, 8, 32], strides = [1, 1, 1]} : vector<2x8x128xbf16> to vector<2x8x32xbf16>
    %189 = vector.extract_strided_slice %186 {offsets = [0, 0, 96], sizes = [2, 8, 32], strides = [1, 1, 1]} : vector<2x8x128xbf16> to vector<2x8x32xbf16>
    %190 = vector.extract_strided_slice %187 {offsets = [0, 0, 0], sizes = [2, 8, 16], strides = [1, 1, 1]} : vector<2x8x64xbf16> to vector<2x8x16xbf16>
    %191 = vector.extract_strided_slice %188 {offsets = [0, 0, 0], sizes = [2, 8, 16], strides = [1, 1, 1]} : vector<2x8x32xbf16> to vector<2x8x16xbf16>
    %192 = vector.extract_strided_slice %189 {offsets = [0, 0, 0], sizes = [2, 8, 16], strides = [1, 1, 1]} : vector<2x8x32xbf16> to vector<2x8x16xbf16>
    "tpu.trace_start"() <{level = 10 : i32, message = "bqd,bkd->bqk"}> : () -> ()
    %cst_74 = arith.constant dense<0.000000e+00> : vector<2x8x8xf32>
    %193 = tpu.matmul %190, %191, %cst_74 {dimension_numbers = #tpu.dot_dimension_numbers<[2], [2], [1], [1], [0, 0, 0, 1, 1, 1], [0], [0]>} : vector<2x8x16xbf16>, vector<2x8x16xbf16>, vector<2x8x8xf32> -> vector<2x8x8xf32>
    "tpu.trace_stop"() : () -> ()
    %cst_75 = arith.constant 2.500000e-01 : f32
    %194 = vector.broadcast %cst_75 : f32 to vector<2x8x8xf32>
    %195 = arith.mulf %193, %194 : vector<2x8x8xf32>
    %cst_76 = arith.constant -1.000000e+30 : f32
    %196 = vector.shape_cast %8 : vector<1x8x8xi1> to vector<1x8x8xi1>
    %197 = vector.broadcast %196 : vector<1x8x8xi1> to vector<2x8x8xi1>
    %198 = vector.broadcast %cst_76 : f32 to vector<2x8x8xf32>
    %199 = arith.select %197, %195, %198 : vector<2x8x8xi1>, vector<2x8x8xf32>
    %cst_77 = arith.constant dense<0xFF800000> : vector<2x8xf32>
    %200 = vector.multi_reduction <maximumf>, %199, %cst_77 [2] : vector<2x8x8xf32> to vector<2x8xf32>
    %201 = vector.shape_cast %200 : vector<2x8xf32> to vector<2x8x1xf32>
    %202 = vector.broadcast %201 : vector<2x8x1xf32> to vector<2x8x8xf32>
    %203 = arith.subf %199, %202 : vector<2x8x8xf32>
    %204 = math.exp %203 : vector<2x8x8xf32>
    %cst_78 = arith.constant dense<0.000000e+00> : vector<2x8xf32>
    %205 = vector.multi_reduction <add>, %204, %cst_78 [2] : vector<2x8x8xf32> to vector<2x8xf32>
    %206 = vector.shape_cast %205 : vector<2x8xf32> to vector<2x8x1xf32>
    %207 = vector.broadcast %206 : vector<2x8x1xf32> to vector<2x8x8xf32>
    %208 = arith.divf %204, %207 : vector<2x8x8xf32>
    %209 = arith.truncf %208 : vector<2x8x8xf32> to vector<2x8x8xbf16>
    "tpu.trace_start"() <{level = 10 : i32, message = "bqk,bkd->bqd"}> : () -> ()
    %cst_79 = arith.constant dense<0.000000e+00> : vector<2x8x16xf32>
    %210 = tpu.matmul %209, %192, %cst_79 {dimension_numbers = #tpu.dot_dimension_numbers<[2], [1], [1], [2], [0, 0, 0, 1, 1, 2], [0], [0]>} : vector<2x8x8xbf16>, vector<2x8x16xbf16>, vector<2x8x16xf32> -> vector<2x8x16xf32>
    "tpu.trace_stop"() : () -> ()
    %211 = vector.extract_strided_slice %187 {offsets = [0, 0, 16], sizes = [2, 8, 16], strides = [1, 1, 1]} : vector<2x8x64xbf16> to vector<2x8x16xbf16>
    %212 = vector.extract_strided_slice %188 {offsets = [0, 0, 0], sizes = [2, 8, 16], strides = [1, 1, 1]} : vector<2x8x32xbf16> to vector<2x8x16xbf16>
    %213 = vector.extract_strided_slice %189 {offsets = [0, 0, 0], sizes = [2, 8, 16], strides = [1, 1, 1]} : vector<2x8x32xbf16> to vector<2x8x16xbf16>
    "tpu.trace_start"() <{level = 10 : i32, message = "bqd,bkd->bqk"}> : () -> ()
    %cst_80 = arith.constant dense<0.000000e+00> : vector<2x8x8xf32>
    %214 = tpu.matmul %211, %212, %cst_80 {dimension_numbers = #tpu.dot_dimension_numbers<[2], [2], [1], [1], [0, 0, 0, 1, 1, 1], [0], [0]>} : vector<2x8x16xbf16>, vector<2x8x16xbf16>, vector<2x8x8xf32> -> vector<2x8x8xf32>
    "tpu.trace_stop"() : () -> ()
    %cst_81 = arith.constant 2.500000e-01 : f32
    %215 = vector.broadcast %cst_81 : f32 to vector<2x8x8xf32>
    %216 = arith.mulf %214, %215 : vector<2x8x8xf32>
    %cst_82 = arith.constant -1.000000e+30 : f32
    %217 = vector.shape_cast %8 : vector<1x8x8xi1> to vector<1x8x8xi1>
    %218 = vector.broadcast %217 : vector<1x8x8xi1> to vector<2x8x8xi1>
    %219 = vector.broadcast %cst_82 : f32 to vector<2x8x8xf32>
    %220 = arith.select %218, %216, %219 : vector<2x8x8xi1>, vector<2x8x8xf32>
    %cst_83 = arith.constant dense<0xFF800000> : vector<2x8xf32>
    %221 = vector.multi_reduction <maximumf>, %220, %cst_83 [2] : vector<2x8x8xf32> to vector<2x8xf32>
    %222 = vector.shape_cast %221 : vector<2x8xf32> to vector<2x8x1xf32>
    %223 = vector.broadcast %222 : vector<2x8x1xf32> to vector<2x8x8xf32>
    %224 = arith.subf %220, %223 : vector<2x8x8xf32>
    %225 = math.exp %224 : vector<2x8x8xf32>
    %cst_84 = arith.constant dense<0.000000e+00> : vector<2x8xf32>
    %226 = vector.multi_reduction <add>, %225, %cst_84 [2] : vector<2x8x8xf32> to vector<2x8xf32>
    %227 = vector.shape_cast %226 : vector<2x8xf32> to vector<2x8x1xf32>
    %228 = vector.broadcast %227 : vector<2x8x1xf32> to vector<2x8x8xf32>
    %229 = arith.divf %225, %228 : vector<2x8x8xf32>
    %230 = arith.truncf %229 : vector<2x8x8xf32> to vector<2x8x8xbf16>
    "tpu.trace_start"() <{level = 10 : i32, message = "bqk,bkd->bqd"}> : () -> ()
    %cst_85 = arith.constant dense<0.000000e+00> : vector<2x8x16xf32>
    %231 = tpu.matmul %230, %213, %cst_85 {dimension_numbers = #tpu.dot_dimension_numbers<[2], [1], [1], [2], [0, 0, 0, 1, 1, 2], [0], [0]>} : vector<2x8x8xbf16>, vector<2x8x16xbf16>, vector<2x8x16xf32> -> vector<2x8x16xf32>
    "tpu.trace_stop"() : () -> ()
    %232 = vector.extract_strided_slice %187 {offsets = [0, 0, 32], sizes = [2, 8, 16], strides = [1, 1, 1]} : vector<2x8x64xbf16> to vector<2x8x16xbf16>
    %233 = vector.extract_strided_slice %188 {offsets = [0, 0, 16], sizes = [2, 8, 16], strides = [1, 1, 1]} : vector<2x8x32xbf16> to vector<2x8x16xbf16>
    %234 = vector.extract_strided_slice %189 {offsets = [0, 0, 16], sizes = [2, 8, 16], strides = [1, 1, 1]} : vector<2x8x32xbf16> to vector<2x8x16xbf16>
    "tpu.trace_start"() <{level = 10 : i32, message = "bqd,bkd->bqk"}> : () -> ()
    %cst_86 = arith.constant dense<0.000000e+00> : vector<2x8x8xf32>
    %235 = tpu.matmul %232, %233, %cst_86 {dimension_numbers = #tpu.dot_dimension_numbers<[2], [2], [1], [1], [0, 0, 0, 1, 1, 1], [0], [0]>} : vector<2x8x16xbf16>, vector<2x8x16xbf16>, vector<2x8x8xf32> -> vector<2x8x8xf32>
    "tpu.trace_stop"() : () -> ()
    %cst_87 = arith.constant 2.500000e-01 : f32
    %236 = vector.broadcast %cst_87 : f32 to vector<2x8x8xf32>
    %237 = arith.mulf %235, %236 : vector<2x8x8xf32>
    %cst_88 = arith.constant -1.000000e+30 : f32
    %238 = vector.shape_cast %8 : vector<1x8x8xi1> to vector<1x8x8xi1>
    %239 = vector.broadcast %238 : vector<1x8x8xi1> to vector<2x8x8xi1>
    %240 = vector.broadcast %cst_88 : f32 to vector<2x8x8xf32>
    %241 = arith.select %239, %237, %240 : vector<2x8x8xi1>, vector<2x8x8xf32>
    %cst_89 = arith.constant dense<0xFF800000> : vector<2x8xf32>
    %242 = vector.multi_reduction <maximumf>, %241, %cst_89 [2] : vector<2x8x8xf32> to vector<2x8xf32>
    %243 = vector.shape_cast %242 : vector<2x8xf32> to vector<2x8x1xf32>
    %244 = vector.broadcast %243 : vector<2x8x1xf32> to vector<2x8x8xf32>
    %245 = arith.subf %241, %244 : vector<2x8x8xf32>
    %246 = math.exp %245 : vector<2x8x8xf32>
    %cst_90 = arith.constant dense<0.000000e+00> : vector<2x8xf32>
    %247 = vector.multi_reduction <add>, %246, %cst_90 [2] : vector<2x8x8xf32> to vector<2x8xf32>
    %248 = vector.shape_cast %247 : vector<2x8xf32> to vector<2x8x1xf32>
    %249 = vector.broadcast %248 : vector<2x8x1xf32> to vector<2x8x8xf32>
    %250 = arith.divf %246, %249 : vector<2x8x8xf32>
    %251 = arith.truncf %250 : vector<2x8x8xf32> to vector<2x8x8xbf16>
    "tpu.trace_start"() <{level = 10 : i32, message = "bqk,bkd->bqd"}> : () -> ()
    %cst_91 = arith.constant dense<0.000000e+00> : vector<2x8x16xf32>
    %252 = tpu.matmul %251, %234, %cst_91 {dimension_numbers = #tpu.dot_dimension_numbers<[2], [1], [1], [2], [0, 0, 0, 1, 1, 2], [0], [0]>} : vector<2x8x8xbf16>, vector<2x8x16xbf16>, vector<2x8x16xf32> -> vector<2x8x16xf32>
    "tpu.trace_stop"() : () -> ()
    %253 = vector.extract_strided_slice %187 {offsets = [0, 0, 48], sizes = [2, 8, 16], strides = [1, 1, 1]} : vector<2x8x64xbf16> to vector<2x8x16xbf16>
    %254 = vector.extract_strided_slice %188 {offsets = [0, 0, 16], sizes = [2, 8, 16], strides = [1, 1, 1]} : vector<2x8x32xbf16> to vector<2x8x16xbf16>
    %255 = vector.extract_strided_slice %189 {offsets = [0, 0, 16], sizes = [2, 8, 16], strides = [1, 1, 1]} : vector<2x8x32xbf16> to vector<2x8x16xbf16>
    "tpu.trace_start"() <{level = 10 : i32, message = "bqd,bkd->bqk"}> : () -> ()
    %cst_92 = arith.constant dense<0.000000e+00> : vector<2x8x8xf32>
    %256 = tpu.matmul %253, %254, %cst_92 {dimension_numbers = #tpu.dot_dimension_numbers<[2], [2], [1], [1], [0, 0, 0, 1, 1, 1], [0], [0]>} : vector<2x8x16xbf16>, vector<2x8x16xbf16>, vector<2x8x8xf32> -> vector<2x8x8xf32>
    "tpu.trace_stop"() : () -> ()
    %cst_93 = arith.constant 2.500000e-01 : f32
    %257 = vector.broadcast %cst_93 : f32 to vector<2x8x8xf32>
    %258 = arith.mulf %256, %257 : vector<2x8x8xf32>
    %cst_94 = arith.constant -1.000000e+30 : f32
    %259 = vector.shape_cast %8 : vector<1x8x8xi1> to vector<1x8x8xi1>
    %260 = vector.broadcast %259 : vector<1x8x8xi1> to vector<2x8x8xi1>
    %261 = vector.broadcast %cst_94 : f32 to vector<2x8x8xf32>
    %262 = arith.select %260, %258, %261 : vector<2x8x8xi1>, vector<2x8x8xf32>
    %cst_95 = arith.constant dense<0xFF800000> : vector<2x8xf32>
    %263 = vector.multi_reduction <maximumf>, %262, %cst_95 [2] : vector<2x8x8xf32> to vector<2x8xf32>
    %264 = vector.shape_cast %263 : vector<2x8xf32> to vector<2x8x1xf32>
    %265 = vector.broadcast %264 : vector<2x8x1xf32> to vector<2x8x8xf32>
    %266 = arith.subf %262, %265 : vector<2x8x8xf32>
    %267 = math.exp %266 : vector<2x8x8xf32>
    %cst_96 = arith.constant dense<0.000000e+00> : vector<2x8xf32>
    %268 = vector.multi_reduction <add>, %267, %cst_96 [2] : vector<2x8x8xf32> to vector<2x8xf32>
    %269 = vector.shape_cast %268 : vector<2x8xf32> to vector<2x8x1xf32>
    %270 = vector.broadcast %269 : vector<2x8x1xf32> to vector<2x8x8xf32>
    %271 = arith.divf %267, %270 : vector<2x8x8xf32>
    %272 = arith.truncf %271 : vector<2x8x8xf32> to vector<2x8x8xbf16>
    "tpu.trace_start"() <{level = 10 : i32, message = "bqk,bkd->bqd"}> : () -> ()
    %cst_97 = arith.constant dense<0.000000e+00> : vector<2x8x16xf32>
    %273 = tpu.matmul %272, %255, %cst_97 {dimension_numbers = #tpu.dot_dimension_numbers<[2], [1], [1], [2], [0, 0, 0, 1, 1, 2], [0], [0]>} : vector<2x8x8xbf16>, vector<2x8x16xbf16>, vector<2x8x16xf32> -> vector<2x8x16xf32>
    "tpu.trace_stop"() : () -> ()
    %274 = tpu.concatenate %210, %231, %252, %273 in 2 : vector<2x8x16xf32>, vector<2x8x16xf32>, vector<2x8x16xf32>, vector<2x8x16xf32> -> vector<2x8x64xf32>
    %275 = vector.shape_cast %274 : vector<2x8x64xf32> to vector<16x64xf32>
    %276 = arith.truncf %275 : vector<16x64xf32> to vector<16x64xbf16>
    %c1_98 = arith.constant 1 : index
    %c0_99 = arith.constant 0 : index
    %c0_100 = arith.constant 0 : index
    %277 = vector.load %arg5[%c1_98, %c0_99, %c0_100] : memref<2x64x64xbf16, #tpu.memory_space<vmem>>, vector<1x64x64xbf16>
    %278 = vector.shape_cast %277 : vector<1x64x64xbf16> to vector<64x64xbf16>
    %cst_101 = arith.constant dense<0.000000e+00> : vector<16x64xf32>
    %279 = tpu.matmul %276, %278, %cst_101 {dimension_numbers = #tpu.dot_dimension_numbers<[1], [0], [0], [1], [0, 0, 1, 1], [], []>} : vector<16x64xbf16>, vector<64x64xbf16>, vector<16x64xf32> -> vector<16x64xf32>
    %280 = arith.addf %160, %279 : vector<16x64xf32>
    %281 = arith.mulf %280, %280 : vector<16x64xf32>
    %cst_102 = arith.constant dense<0.000000e+00> : vector<16xf32>
    %282 = vector.multi_reduction <add>, %281, %cst_102 [1] : vector<16x64xf32> to vector<16xf32>
    %283 = vector.shape_cast %282 : vector<16xf32> to vector<16x1xf32>
    %cst_103 = arith.constant 6.400000e+01 : f32
    %284 = vector.broadcast %cst_103 : f32 to vector<16x1xf32>
    %285 = arith.divf %283, %284 : vector<16x1xf32>
    %cst_104 = arith.constant 9.99999997E-7 : f32
    %286 = vector.broadcast %cst_104 : f32 to vector<16x1xf32>
    %287 = arith.addf %285, %286 : vector<16x1xf32>
    %288 = math.rsqrt %287 : vector<16x1xf32>
    %289 = vector.broadcast %288 : vector<16x1xf32> to vector<16x64xf32>
    %290 = arith.mulf %280, %289 : vector<16x64xf32>
    %c1_105 = arith.constant 1 : index
    %c0_106 = arith.constant 0 : index
    %c0_107 = arith.constant 0 : index
    %291 = vector.load %arg7[%c1_105, %c0_106, %c0_107] : memref<2x1x64xf32, #tpu.memory_space<vmem>>, vector<1x1x64xf32>
    %292 = vector.shape_cast %291 : vector<1x1x64xf32> to vector<1x64xf32>
    %293 = vector.broadcast %292 : vector<1x64xf32> to vector<16x64xf32>
    %294 = arith.mulf %290, %293 : vector<16x64xf32>
    %295 = arith.truncf %294 : vector<16x64xf32> to vector<16x64xbf16>
    %c1_108 = arith.constant 1 : index
    %c0_109 = arith.constant 0 : index
    %c0_110 = arith.constant 0 : index
    %296 = vector.load %arg8[%c1_108, %c0_109, %c0_110] : memref<2x64x256xbf16, #tpu.memory_space<vmem>>, vector<1x64x256xbf16>
    %297 = vector.shape_cast %296 : vector<1x64x256xbf16> to vector<64x256xbf16>
    %cst_111 = arith.constant dense<0.000000e+00> : vector<16x256xf32>
    %298 = tpu.matmul %295, %297, %cst_111 {dimension_numbers = #tpu.dot_dimension_numbers<[1], [0], [0], [1], [0, 0, 1, 1], [], []>} : vector<16x64xbf16>, vector<64x256xbf16>, vector<16x256xf32> -> vector<16x256xf32>
    %299 = vector.extract_strided_slice %298 {offsets = [0, 0], sizes = [16, 128], strides = [1, 1]} : vector<16x256xf32> to vector<16x128xf32>
    %300 = vector.extract_strided_slice %298 {offsets = [0, 128], sizes = [16, 128], strides = [1, 1]} : vector<16x256xf32> to vector<16x128xf32>
    %301 = arith.negf %299 : vector<16x128xf32>
    %302 = math.exp %301 : vector<16x128xf32>
    %cst_112 = arith.constant 1.000000e+00 : f32
    %303 = vector.broadcast %cst_112 : f32 to vector<16x128xf32>
    %304 = arith.addf %303, %302 : vector<16x128xf32>
    %305 = arith.divf %303, %304 : vector<16x128xf32>
    %306 = arith.mulf %299, %305 : vector<16x128xf32>
    %307 = arith.mulf %306, %300 : vector<16x128xf32>
    %308 = arith.truncf %307 : vector<16x128xf32> to vector<16x128xbf16>
    %c1_113 = arith.constant 1 : index
    %c0_114 = arith.constant 0 : index
    %c0_115 = arith.constant 0 : index
    %309 = vector.load %arg9[%c1_113, %c0_114, %c0_115] : memref<2x128x64xbf16, #tpu.memory_space<vmem>>, vector<1x128x64xbf16>
    %310 = vector.shape_cast %309 : vector<1x128x64xbf16> to vector<128x64xbf16>
    %cst_116 = arith.constant dense<0.000000e+00> : vector<16x64xf32>
    %311 = tpu.matmul %308, %310, %cst_116 {dimension_numbers = #tpu.dot_dimension_numbers<[1], [0], [0], [1], [0, 0, 1, 1], [], []>} : vector<16x128xbf16>, vector<128x64xbf16>, vector<16x64xf32> -> vector<16x64xf32>
    %312 = arith.addf %280, %311 : vector<16x64xf32>
    %313 = arith.mulf %312, %312 : vector<16x64xf32>
    %cst_117 = arith.constant dense<0.000000e+00> : vector<16xf32>
    %314 = vector.multi_reduction <add>, %313, %cst_117 [1] : vector<16x64xf32> to vector<16xf32>
    %315 = vector.shape_cast %314 : vector<16xf32> to vector<16x1xf32>
    %cst_118 = arith.constant 6.400000e+01 : f32
    %316 = vector.broadcast %cst_118 : f32 to vector<16x1xf32>
    %317 = arith.divf %315, %316 : vector<16x1xf32>
    %cst_119 = arith.constant 9.99999997E-7 : f32
    %318 = vector.broadcast %cst_119 : f32 to vector<16x1xf32>
    %319 = arith.addf %317, %318 : vector<16x1xf32>
    %320 = math.rsqrt %319 : vector<16x1xf32>
    %321 = vector.broadcast %320 : vector<16x1xf32> to vector<16x64xf32>
    %322 = arith.mulf %312, %321 : vector<16x64xf32>
    %c0_120 = arith.constant 0 : index
    %c0_121 = arith.constant 0 : index
    %323 = vector.load %arg10[%c0_120, %c0_121] : memref<1x64xf32, #tpu.memory_space<vmem>>, vector<1x64xf32>
    %324 = vector.broadcast %323 : vector<1x64xf32> to vector<16x64xf32>
    %325 = arith.mulf %322, %324 : vector<16x64xf32>
    %326 = arith.truncf %325 : vector<16x64xf32> to vector<16x64xbf16>
    %c0_122 = arith.constant 0 : index
    %c0_123 = arith.constant 0 : index
    %327 = vector.load %arg11[%c0_122, %c0_123] : memref<64x512xbf16, #tpu.memory_space<vmem>>, vector<64x512xbf16>
    %cst_124 = arith.constant dense<0.000000e+00> : vector<16x512xf32>
    %328 = tpu.matmul %326, %327, %cst_124 {dimension_numbers = #tpu.dot_dimension_numbers<[1], [0], [0], [1], [0, 0, 1, 1], [], []>} : vector<16x64xbf16>, vector<64x512xbf16>, vector<16x512xf32> -> vector<16x512xf32>
    %c0_125 = arith.constant 0 : index
    %c0_126 = arith.constant 0 : index
    %329 = vector.load %arg12[%c0_125, %c0_126] : memref<16x512xf32, #tpu.memory_space<vmem>>, vector<16x512xf32>
    tpu.vector_store %arg12[%c0_125, %c0_126], %328 {strides = array<i32>} : memref<16x512xf32, #tpu.memory_space<vmem>>, vector<16x512xf32>,
    return
  }
}

</mosaic_0001>

<llo_original>
// kernel: tile.29
$region0: #{tile.29}
  %s0 = inlined_call_operand.vmem [shape: f32[8,2,16], index: 0, kind: input, shape index: {}]
  %s1 = inlined_call_operand.vmem [shape: f32[8,32], index: 1, kind: output, shape index: {}]
  $region1: #{tile.29} parent=0
    #allocation0 [shape = 'u8[32768]{0}', space=vmem, size = 0x8000, scoped, tag = 'scoped mem for input reshape']
    %s3 = sshll.u32 1, 2
    %s4 = ssub.s32 %s3, 1
    %s5 = smul.addr 2, 7
    %s6 = scalar_lea.vmem %s0, %s5
    %v7 = vld [vmem:[%s6] sm:%s4]
    %s8 = scalar_lea.vmem [#allocation0], 56
    %9 = vst [vmem:[%s8] sm:%s4] %v7
    %s10 = smul.addr 2, 6
    %s11 = scalar_lea.vmem %s0, %s10
    %v12 = vld [vmem:[%s11] sm:%s4]
    %s13 = scalar_lea.vmem [#allocation0], 48
    %14 = vst [vmem:[%s13] sm:%s4] %v12
    %s15 = smul.addr 2, 5
    %s16 = scalar_lea.vmem %s0, %s15
    %v17 = vld [vmem:[%s16] sm:%s4]
    %s18 = scalar_lea.vmem [#allocation0], 40
    %19 = vst [vmem:[%s18] sm:%s4] %v17
    %s20 = smul.addr 2, 4
    %s21 = scalar_lea.vmem %s0, %s20
    %v22 = vld [vmem:[%s21] sm:%s4]
    %s23 = scalar_lea.vmem [#allocation0], 32
    %24 = vst [vmem:[%s23] sm:%s4] %v22
    %s25 = smul.addr 2, 3
    %s26 = scalar_lea.vmem %s0, %s25
    %v27 = vld [vmem:[%s26] sm:%s4]
    %s28 = scalar_lea.vmem [#allocation0], 24
    %29 = vst [vmem:[%s28] sm:%s4] %v27
    %s30 = smul.addr 2, 2
    %s31 = scalar_lea.vmem %s0, %s30
    %v32 = vld [vmem:[%s31] sm:%s4]
    %s33 = scalar_lea.vmem [#allocation0], 16
    %34 = vst [vmem:[%s33] sm:%s4] %v32
    %s35 = scalar_lea.vmem %s0, 2
    %v36 = vld [vmem:[%s35] sm:%s4]
    %s37 = scalar_lea.vmem [#allocation0], 8
    %38 = vst [vmem:[%s37] sm:%s4] %v36
    %v39 = vld [vmem:[%s0] sm:%s4]
    %40 = vst [vmem:[#allocation0] sm:%s4] %v39
    %v41 = vld [vmem:[#allocation0] ss:$8 sm:$0xf]
    %v42 = vld [vmem:[#allocation0] ss:$8 sm:$0xf0]
    %vm43 = vcmask 1047556
    %v44 = vsel %vm43, %v42, %v41
    %vm45 = vcmask 130048
    %46 = vst.msk [vmem:[%s1] sm:$0xff] %vm45, %v44
    %s47 = scalar_lea.vmem [#allocation0], 1
    %v48 = vld [vmem:[%s47] ss:$8 sm:$0xf]
    %s49 = scalar_lea.vmem [#allocation0], 1
    %v50 = vld [vmem:[%s49] ss:$8 sm:$0xf0]
    %vm51 = vcmask 1047556
    %v52 = vsel %vm51, %v50, %v48
    %53 = vrot.lane.b32.xlu0 %v52, 16
    %v54 = vpop.permute.xlu0 %53
    %vm55 = vcmask 261248
    %56 = vst.msk [vmem:[%s1] sm:$0xff] %vm55, %v54

// kernel: tile.24
$region0: #{tile.24}
  %s0 = inlined_call_operand.vmem [shape: f32[8,4,16], index: 0, kind: input, shape index: {}]
  %s1 = inlined_call_operand.vmem [shape: f32[8,64], index: 1, kind: output, shape index: {}]
  $region1: #{tile.24} parent=0
    #allocation0 [shape = 'u8[32768]{0}', space=vmem, size = 0x8000, scoped, tag = 'scoped mem for input reshape']
    %s3 = sshll.u32 1, 4
    %s4 = ssub.s32 %s3, 1
    %s5 = smul.addr 4, 7
    %s6 = scalar_lea.vmem %s0, %s5
    %v7 = vld [vmem:[%s6] sm:%s4]
    %s8 = scalar_lea.vmem [#allocation0], 56
    %9 = vst [vmem:[%s8] sm:%s4] %v7
    %s10 = smul.addr 4, 6
    %s11 = scalar_lea.vmem %s0, %s10
    %v12 = vld [vmem:[%s11] sm:%s4]
    %s13 = scalar_lea.vmem [#allocation0], 48
    %14 = vst [vmem:[%s13] sm:%s4] %v12
    %s15 = smul.addr 4, 5
    %s16 = scalar_lea.vmem %s0, %s15
    %v17 = vld [vmem:[%s16] sm:%s4]
    %s18 = scalar_lea.vmem [#allocation0], 40
    %19 = vst [vmem:[%s18] sm:%s4] %v17
    %s20 = smul.addr 4, 4
    %s21 = scalar_lea.vmem %s0, %s20
    %v22 = vld [vmem:[%s21] sm:%s4]
    %s23 = scalar_lea.vmem [#allocation0], 32
    %24 = vst [vmem:[%s23] sm:%s4] %v22
    %s25 = smul.addr 4, 3
    %s26 = scalar_lea.vmem %s0, %s25
    %v27 = vld [vmem:[%s26] sm:%s4]
    %s28 = scalar_lea.vmem [#allocation0], 24
    %29 = vst [vmem:[%s28] sm:%s4] %v27
    %s30 = smul.addr 4, 2
    %s31 = scalar_lea.vmem %s0, %s30
    %v32 = vld [vmem:[%s31] sm:%s4]
    %s33 = scalar_lea.vmem [#allocation0], 16
    %34 = vst [vmem:[%s33] sm:%s4] %v32
    %s35 = scalar_lea.vmem %s0, 4
    %v36 = vld [vmem:[%s35] sm:%s4]
    %s37 = scalar_lea.vmem [#allocation0], 8
    %38 = vst [vmem:[%s37] sm:%s4] %v36
    %v39 = vld [vmem:[%s0] sm:%s4]
    %40 = vst [vmem:[#allocation0] sm:%s4] %v39
    %v41 = vld [vmem:[#allocation0] ss:$8 sm:$0xf]
    %v42 = vld [vmem:[#allocation0] ss:$8 sm:$0xf0]
    %vm43 = vcmask 1047556
    %v44 = vsel %vm43, %v42, %v41
    %vm45 = vcmask 130048
    %46 = vst.msk [vmem:[%s1] sm:$0xff] %vm45, %v44
    %s47 = scalar_lea.vmem [#allocation0], 3
    %v48 = vld [vmem:[%s47] ss:$8 sm:$0xf]
    %s49 = scalar_lea.vmem [#allocation0], 3
    %v50 = vld [vmem:[%s49] ss:$8 sm:$0xf0]
    %vm51 = vcmask 1047556
    %v52 = vsel %vm51, %v50, %v48
    %53 = vrot.lane.b32.xlu0 %v52, 48
    %v54 = vpop.permute.xlu0 %53
    %vm55 = vcmask 523648
    %56 = vst.msk [vmem:[%s1] sm:$0xff] %vm55, %v54
    %s57 = scalar_lea.vmem [#allocation0], 2
    %v58 = vld [vmem:[%s57] ss:$8 sm:$0xf]
    %s59 = scalar_lea.vmem [#allocation0], 2
    %v60 = vld [vmem:[%s59] ss:$8 sm:$0xf0]
    %vm61 = vcmask 1047556
    %v62 = vsel %vm61, %v60, %v58
    %63 = vrot.lane.b32.xlu0 %v62, 32
    %v64 = vpop.permute.xlu0 %63
    %vm65 = vcmask 392448
    %66 = vst.msk [vmem:[%s1] sm:$0xff] %vm65, %v64
    %s67 = scalar_lea.vmem [#allocation0], 1
    %v68 = vld [vmem:[%s67] ss:$8 sm:$0xf]
    %s69 = scalar_lea.vmem [#allocation0], 1
    %v70 = vld [vmem:[%s69] ss:$8 sm:$0xf0]
    %vm71 = vcmask 1047556
    %v72 = vsel %vm71, %v70, %v68
    %73 = vrot.lane.b32.xlu0 %v72, 16
    %v74 = vpop.permute.xlu0 %73
    %vm75 = vcmask 261248
    %76 = vst.msk [vmem:[%s1] sm:$0xff] %vm75, %v74

// kernel: forward.1
$region0: #{forward.1}
  #allocation0 [shape = 'u32[]', space=smem, size = 0x4, offset = 0x4, fixed_abs, tag = 'smem constant byte address 0x4 - core index']
  #allocation1 [shape = 'u32[144,128]{1,0:T(1,128)}', space=vmem, size = 0x12000, scoped, tag = 'internal scratch']
  %s0 = inlined_call_operand.vmem [shape: f32[16,64], index: 0, kind: input, shape index: {}]
  %s1 = inlined_call_operand.vmem [shape: f32[8,128], index: 1, kind: input, shape index: {}]
  %s2 = inlined_call_operand.vmem [shape: f32[8,128], index: 2, kind: input, shape index: {}]
  %s3 = inlined_call_operand.vmem [shape: bf16[2,64,128], index: 3, kind: input, shape index: {}]
  %s4 = inlined_call_operand.vmem [shape: bf16[2,64,128], index: 4, kind: input, shape index: {}]
  %s5 = inlined_call_operand.vmem [shape: bf16[2,64,64], index: 5, kind: input, shape index: {}]
  %s6 = inlined_call_operand.vmem [shape: f32[2,1,64], index: 6, kind: input, shape index: {}]
  %s7 = inlined_call_operand.vmem [shape: f32[2,1,64], index: 7, kind: input, shape index: {}]
  %s8 = inlined_call_operand.vmem [shape: bf16[2,64,256], index: 8, kind: input, shape index: {}]
  %s9 = inlined_call_operand.vmem [shape: bf16[2,128,64], index: 9, kind: input, shape index: {}]
  %s10 = inlined_call_operand.vmem [shape: f32[1,64], index: 10, kind: input, shape index: {}]
  %s11 = inlined_call_operand.vmem [shape: bf16[64,512], index: 11, kind: input, shape index: {}]
  %s12 = inlined_call_operand.hbm [shape: f32[16,512], index: 12, kind: output, shape index: {}]
  %s13 = sld [smem:[#allocation0]]
  $region58: #{forward.1} parent=0
    _
  %s15 = ssub.s32 1, %s13
  %s16 = scalar_select 0, %s15, %s13
  $region1: #{forward.1} parent=0
    #allocation2 [shape = 'u8[32768]{0}', space=vmem, size = 0x8000, scoped, tag = 'output window, operand 0, single buffered']
    #allocation3 [shape = 's32[1]{0}', space=sflag, size = 0x4, scoped, tag = 'scoped memory for forward.1']
    %17 = vsyncpa [#allocation3], 0
    // Predicated region
    $region2: #{forward.1} parent=1 // pred_check
      _
    $region3: #{forward.1} parent=1 // pred_check_branch
      %19 = sbr.rel (0) target = $region5
    $region4: #{forward.1} parent=1 // pred_region
      _
    $region5: #{forward.1} parent=1 // pred_fallthru
      _
    // Predicated region
    $region6: #{forward.1} parent=1 // pred_check
      _
    $region7: #{forward.1} parent=1 // pred_check_branch
      %21 = sbr.rel (0) target = $region9
    $region8: #{forward.1} parent=1 // pred_region
      _
    $region9: #{forward.1} parent=1 // pred_fallthru
      _
    // Predicated region
    $region10: #{forward.1} parent=1 // pred_check
      _
    $region11: #{forward.1} parent=1 // pred_check_branch
      %23 = sbr.rel (0) target = $region13
    $region12: #{forward.1} parent=1 // pred_region
      _
    $region13: #{forward.1} parent=1 // pred_fallthru
      _
    // Predicated region
    $region14: #{forward.1} parent=1 // pred_check
      _
    $region15: #{forward.1} parent=1 // pred_check_branch
      %25 = sbr.rel (0) target = $region17
    $region16: #{forward.1} parent=1 // pred_region
      _
    $region17: #{forward.1} parent=1 // pred_fallthru
      _
    // Predicated region
    $region18: #{forward.1} parent=1 // pred_check
      _
    $region19: #{forward.1} parent=1 // pred_check_branch
      %27 = sbr.rel (0) target = $region21
    $region20: #{forward.1} parent=1 // pred_region
      _
    $region21: #{forward.1} parent=1 // pred_fallthru
      _
    // Predicated region
    $region22: #{forward.1} parent=1 // pred_check
      _
    $region23: #{forward.1} parent=1 // pred_check_branch
      %29 = sbr.rel (0) target = $region25
    $region24: #{forward.1} parent=1 // pred_region
      _
    $region25: #{forward.1} parent=1 // pred_fallthru
      _
    // Predicated region
    $region26: #{forward.1} parent=1 // pred_check
      _
    $region27: #{forward.1} parent=1 // pred_check_branch
      %31 = sbr.rel (0) target = $region29
    $region28: #{forward.1} parent=1 // pred_region
      _
    $region29: #{forward.1} parent=1 // pred_fallthru
      _
    // Predicated region
    $region30: #{forward.1} parent=1 // pred_check
      _
    $region31: #{forward.1} parent=1 // pred_check_branch
      %33 = sbr.rel (0) target = $region33
    $region32: #{forward.1} parent=1 // pred_region
      _
    $region33: #{forward.1} parent=1 // pred_fallthru
      _
    // Predicated region
    $region34: #{forward.1} parent=1 // pred_check
      _
    $region35: #{forward.1} parent=1 // pred_check_branch
      %35 = sbr.rel (0) target = $region37
    $region36: #{forward.1} parent=1 // pred_region
      _
    $region37: #{forward.1} parent=1 // pred_fallthru
      _
    // Predicated region
    $region38: #{forward.1} parent=1 // pred_check
      _
    $region39: #{forward.1} parent=1 // pred_check_branch
      %37 = sbr.rel (0) target = $region41
    $region40: #{forward.1} parent=1 // pred_region
      _
    $region41: #{forward.1} parent=1 // pred_fallthru
      _
    // Predicated region
    $region42: #{forward.1} parent=1 // pred_check
      _
    $region43: #{forward.1} parent=1 // pred_check_branch
      %39 = sbr.rel (0) target = $region45
    $region44: #{forward.1} parent=1 // pred_region
      _
    $region45: #{forward.1} parent=1 // pred_fallthru
      _
    // Predicated region
    $region46: #{forward.1} parent=1 // pred_check
      _
    $region47: #{forward.1} parent=1 // pred_check_branch
      %41 = sbr.rel (0) target = $region49
    $region48: #{forward.1} parent=1 // pred_region
      _
    $region49: #{forward.1} parent=1 // pred_fallthru
      _
    %v43 = vld [vmem:[%s0] sm:$0xff]
    %v44 = vld [vmem:[%s0 + $0x8] sm:$0xff]
    %v45 = vld [vmem:[%s1] sm:$0xff]
    %v46 = vld [vmem:[%s2] sm:$0xff]
    %v47 = vlaneseq
    %v48 = vshrl.u32 %v47, 7
    %v49 = vlaneseq
    %v50 = vand.u32 %v49, 127
    %vm51 = vcmp.le.s32.totalorder %v50, %v48
    %v52 = vmul.f32 %v43, %v43
    %v53 = vmul.f32 %v44, %v44
    %vm54 = vcmask 523264
    %v55 = vsel %vm54, %v52, 0.0
    %56 = vadd.xlane.f32.xlu0 %v55
    %v57 = vpop.xlane.xlu0 %56
    %v58 = vsel %vm54, %v53, 0.0
    %59 = vadd.xlane.f32.xlu0 %v58
    %v60 = vpop.xlane.xlu0 %59
    %v61 = vrcp.pop 64.0
    %v62 = vmul.f32 %v57, %v61
    %v63 = vmul.f32 %v60, %v61
    %v64 = vadd.f32 %v62, 1e-06
    %v65 = vadd.f32 %v63, 1e-06
    %v66 = vrsqrt.pop %v64
    %v67 = vrsqrt.pop %v65
    %v68 = vmul.f32 %v43, %v66
    %v69 = vmul.f32 %v44, %v67
    %v70 = vld [vmem:[%s6] sm:$0x1]
    %v72 = vlaneseq
    %v73 = vshrl.u32 %v72, 7
    %v74 = vsub.s32 0, %v73
    %v75 = vrot.slane %v70, %v74
    %v77 = vmul.f32 %v68, %v75
    %v78 = vmul.f32 %v69, %v75
    %v79 = vpack.c.bf16 %v78, %v77
    %v80 = vld [vmem:[%s3] sm:$0xf]
    %v81 = vld [vmem:[%s3 + $0x4] sm:$0xf]
    %v82 = vld [vmem:[%s3 + $0x8] sm:$0xf]
    %v83 = vld [vmem:[%s3 + $0xc] sm:$0xf]
    %v84 = vld [vmem:[%s3 + $0x10] sm:$0xf]
    %v85 = vld [vmem:[%s3 + $0x14] sm:$0xf]
    %v86 = vld [vmem:[%s3 + $0x18] sm:$0xf]
    %v87 = vld [vmem:[%s3 + $0x1c] sm:$0xf]
    %v96 = vunpack.c.l.b16 %v80
    %v97 = vunpack.c.l.b16 %v81
    %v98 = vunpack.c.l.b16 %v82
    %v99 = vunpack.c.l.b16 %v83
    %v100 = vunpack.c.l.b16 %v84
    %v101 = vunpack.c.l.b16 %v85
    %v102 = vunpack.c.l.b16 %v86
    %v103 = vunpack.c.l.b16 %v87
    %v104 = vpack.c.b16 %v97, %v96
    %v105 = vpack.c.b16 %v99, %v98
    %v106 = vpack.c.b16 %v101, %v100
    %v107 = vpack.c.b16 %v103, %v102
    %v113 = vsel %vm54, %v79, 0
    %115 = vmatprep.subr.bf16.mxu0 0
    %116 = vmatpush1.bf16.msra.mxu0 0
    %117 = vmatprep.subr.bf16.mxu0 0
    %118 = vmatpush1.bf16.msra.mxu0 0
    %119 = vmatprep.subr.bf16.mxu0 0
    %120 = vmatpush1.bf16.msra.mxu0 0
    %121 = vmatprep.subr.bf16.mxu0 0
    %122 = vmatpush1.bf16.msra.mxu0 0
    %123 = vmatprep.subr.bf16.mxu0 0
    %124 = vmatpush1.bf16.msra.mxu0 %v107
    %125 = vmatprep.subr.bf16.mxu0 0
    %126 = vmatpush1.bf16.msra.mxu0 %v106
    %127 = vmatprep.subr.bf16.mxu0 0
    %128 = vmatpush1.bf16.msra.mxu0 %v105
    %129 = vmatprep.subr.bf16.mxu0 0
    %130 = vmatpush1.bf16.msra.mxu0 %v104
    %131 = vmatprep.subr.bf16.mxu0 0
    %132 = vmatpush2.bf16.msra.mxu0 0
    %133 = vmatprep.subr.bf16.mxu0 0
    %134 = vmatpush2.bf16.msra.mxu0 0
    %135 = vmatprep.subr.bf16.mxu0 0
    %136 = vmatpush2.bf16.msra.mxu0 0
    %137 = vmatprep.subr.bf16.mxu0 0
    %138 = vmatpush2.bf16.msra.mxu0 0
    %139 = vmatprep.subr.bf16.mxu0 0
    %140 = vmatpush2.bf16.msra.mxu0 0
    %141 = vmatprep.subr.bf16.mxu0 0
    %142 = vmatpush2.bf16.msra.mxu0 0
    %143 = vmatprep.subr.bf16.mxu0 0
    %144 = vmatpush2.bf16.msra.mxu0 0
    %145 = vmatprep.subr.bf16.mxu0 0
    %146 = vmatpush2.bf16.msra.mxu0 0
    %147 = vmatprep.mubr.bf16.mxu0 0
    %148 = vmatmul.mubr.bf16.gmra.mxu0 %v113
    %v149 = vpop.f32.mrf.mxu0
    %v150 = vadd.f32 0.0, %v149
    %v151 = vpop.f32.mrf.mxu0
    %v152 = vpop.f32.mrf.mxu0
    %v153 = vadd.f32 0.0, %v152
    %v154 = vpop.f32.mrf.mxu0
    %155 = vdwg.mxu0
    %v156 = vld [vmem:[%s4] sm:$0xf]
    %v157 = vld [vmem:[%s4 + $0x4] sm:$0xf]
    %v158 = vld [vmem:[%s4 + $0x8] sm:$0xf]
    %v159 = vld [vmem:[%s4 + $0xc] sm:$0xf]
    %v160 = vld [vmem:[%s4 + $0x10] sm:$0xf]
    %v161 = vld [vmem:[%s4 + $0x14] sm:$0xf]
    %v162 = vld [vmem:[%s4 + $0x18] sm:$0xf]
    %v163 = vld [vmem:[%s4 + $0x1c] sm:$0xf]
    %v172 = vunpack.c.l.b16 %v156
    %v173 = vunpack.c.l.b16 %v157
    %v174 = vunpack.c.l.b16 %v158
    %v175 = vunpack.c.l.b16 %v159
    %v176 = vunpack.c.l.b16 %v160
    %v177 = vunpack.c.l.b16 %v161
    %v178 = vunpack.c.l.b16 %v162
    %v179 = vunpack.c.l.b16 %v163
    %v180 = vpack.c.b16 %v173, %v172
    %v181 = vpack.c.b16 %v175, %v174
    %v182 = vpack.c.b16 %v177, %v176
    %v183 = vpack.c.b16 %v179, %v178
    %188 = vmatprep.subr.bf16.mxu0 0
    %189 = vmatpush1.bf16.msra.mxu0 0
    %190 = vmatprep.subr.bf16.mxu0 0
    %191 = vmatpush1.bf16.msra.mxu0 0
    %192 = vmatprep.subr.bf16.mxu0 0
    %193 = vmatpush1.bf16.msra.mxu0 0
    %194 = vmatprep.subr.bf16.mxu0 0
    %195 = vmatpush1.bf16.msra.mxu0 0
    %196 = vmatprep.subr.bf16.mxu0 0
    %197 = vmatpush1.bf16.msra.mxu0 %v183
    %198 = vmatprep.subr.bf16.mxu0 0
    %199 = vmatpush1.bf16.msra.mxu0 %v182
    %200 = vmatprep.subr.bf16.mxu0 0
    %201 = vmatpush1.bf16.msra.mxu0 %v181
    %202 = vmatprep.subr.bf16.mxu0 0
    %203 = vmatpush1.bf16.msra.mxu0 %v180
    %204 = vmatprep.subr.bf16.mxu0 0
    %205 = vmatpush2.bf16.msra.mxu0 0
    %206 = vmatprep.subr.bf16.mxu0 0
    %207 = vmatpush2.bf16.msra.mxu0 0
    %208 = vmatprep.subr.bf16.mxu0 0
    %209 = vmatpush2.bf16.msra.mxu0 0
    %210 = vmatprep.subr.bf16.mxu0 0
    %211 = vmatpush2.bf16.msra.mxu0 0
    %212 = vmatprep.subr.bf16.mxu0 0
    %213 = vmatpush2.bf16.msra.mxu0 0
    %214 = vmatprep.subr.bf16.mxu0 0
    %215 = vmatpush2.bf16.msra.mxu0 0
    %216 = vmatprep.subr.bf16.mxu0 0
    %217 = vmatpush2.bf16.msra.mxu0 0
    %218 = vmatprep.subr.bf16.mxu0 0
    %219 = vmatpush2.bf16.msra.mxu0 0
    %220 = vmatprep.mubr.bf16.mxu0 0
    %221 = vmatmul.mubr.bf16.gmra.mxu0 %v113
    %v222 = vpop.f32.mrf.mxu0
    %v223 = vadd.f32 0.0, %v222
    %v224 = vpop.f32.mrf.mxu0
    %v225 = vpop.f32.mrf.mxu0
    %v226 = vadd.f32 0.0, %v225
    %v227 = vpop.f32.mrf.mxu0
    %228 = vdwg.mxu0
    %v229 = vmul.f32 %v150, %v45
    %v230 = vmul.f32 %v153, %v45
    %v231 = vmul.f32 %v223, %v46
    %v232 = vmul.f32 %v226, %v46
    %v233 = vadd.f32 %v229, %v231
    %v234 = vadd.f32 %v230, %v232
    %v235 = vpack.c.bf16 %v234, %v233
    %v237 = vunpack.c.l.b16 %v235
    %v238 = vunpack.c.h.b16 %v235
    %v239 = vpack.c.b16 %v237, %v237
    %v240 = vpack.c.b16 %v238, %v238
    %241 = vrot.lane.b32.xlu0 %v239, 64
    %v242 = vpop.permute.xlu0 %241
    %vm243 = vcmask 130048
    %v245 = vsel %vm243, %v239, 0
    %v248 = vsel %vm243, %v242, 0
    %250 = vmatprep.subr.bf16.mxu0 0
    %251 = vmatpush1.bf16.xpose.msra.mxu0 0
    %252 = vmatprep.subr.bf16.mxu0 0
    %253 = vmatpush1.bf16.xpose.msra.mxu0 0
    %254 = vmatprep.subr.bf16.mxu0 0
    %255 = vmatpush1.bf16.xpose.msra.mxu0 0
    %256 = vmatprep.subr.bf16.mxu0 0
    %257 = vmatpush1.bf16.xpose.msra.mxu0 0
    %258 = vmatprep.subr.bf16.mxu0 0
    %259 = vmatpush1.bf16.xpose.msra.mxu0 0
    %260 = vmatprep.subr.bf16.mxu0 0
    %261 = vmatpush1.bf16.xpose.msra.mxu0 0
    %262 = vmatprep.subr.bf16.mxu0 0
    %263 = vmatpush1.bf16.xpose.msra.mxu0 0
    %264 = vmatprep.subr.bf16.mxu0 0
    %265 = vmatpush1.bf16.xpose.msra.mxu0 %v248
    %266 = vmatprep.subr.bf16.mxu0 0
    %267 = vmatpush2.bf16.xpose.msra.mxu0 0
    %268 = vmatprep.subr.bf16.mxu0 0
    %269 = vmatpush2.bf16.xpose.msra.mxu0 0
    %270 = vmatprep.subr.bf16.mxu0 0
    %271 = vmatpush2.bf16.xpose.msra.mxu0 0
    %272 = vmatprep.subr.bf16.mxu0 0
    %273 = vmatpush2.bf16.xpose.msra.mxu0 0
    %274 = vmatprep.subr.bf16.mxu0 0
    %275 = vmatpush2.bf16.xpose.msra.mxu0 0
    %276 = vmatprep.subr.bf16.mxu0 0
    %277 = vmatpush2.bf16.xpose.msra.mxu0 0
    %278 = vmatprep.subr.bf16.mxu0 0
    %279 = vmatpush2.bf16.xpose.msra.mxu0 0
    %280 = vmatprep.subr.bf16.mxu0 0
    %281 = vmatpush2.bf16.xpose.msra.mxu0 0
    %282 = vmatprep.mubr.bf16.mxu0 0
    %283 = vmatmul.mubr.bf16.gmra.mxu0 %v245
    %v284 = vpop.f32.mrf.mxu0
    %v285 = vadd.f32 0.0, %v284
    %v286 = vpop.f32.mrf.mxu0
    %v287 = vpop.f32.mrf.mxu0
    %v288 = vpop.f32.mrf.mxu0
    %289 = vdwg.mxu0
    %290 = vrot.lane.b32.xlu0 %v240, 64
    %v291 = vpop.permute.xlu0 %290
    %v293 = vsel %vm243, %v240, 0
    %v296 = vsel %vm243, %v291, 0
    %298 = vmatprep.subr.bf16.mxu0 0
    %299 = vmatpush1.bf16.xpose.msra.mxu0 0
    %300 = vmatprep.subr.bf16.mxu0 0
    %301 = vmatpush1.bf16.xpose.msra.mxu0 0
    %302 = vmatprep.subr.bf16.mxu0 0
    %303 = vmatpush1.bf16.xpose.msra.mxu0 0
    %304 = vmatprep.subr.bf16.mxu0 0
    %305 = vmatpush1.bf16.xpose.msra.mxu0 0
    %306 = vmatprep.subr.bf16.mxu0 0
    %307 = vmatpush1.bf16.xpose.msra.mxu0 0
    %308 = vmatprep.subr.bf16.mxu0 0
    %309 = vmatpush1.bf16.xpose.msra.mxu0 0
    %310 = vmatprep.subr.bf16.mxu0 0
    %311 = vmatpush1.bf16.xpose.msra.mxu0 0
    %312 = vmatprep.subr.bf16.mxu0 0
    %313 = vmatpush1.bf16.xpose.msra.mxu0 %v296
    %314 = vmatprep.subr.bf16.mxu0 0
    %315 = vmatpush2.bf16.xpose.msra.mxu0 0
    %316 = vmatprep.subr.bf16.mxu0 0
    %317 = vmatpush2.bf16.xpose.msra.mxu0 0
    %318 = vmatprep.subr.bf16.mxu0 0
    %319 = vmatpush2.bf16.xpose.msra.mxu0 0
    %320 = vmatprep.subr.bf16.mxu0 0
    %321 = vmatpush2.bf16.xpose.msra.mxu0 0
    %322 = vmatprep.subr.bf16.mxu0 0
    %323 = vmatpush2.bf16.xpose.msra.mxu0 0
    %324 = vmatprep.subr.bf16.mxu0 0
    %325 = vmatpush2.bf16.xpose.msra.mxu0 0
    %326 = vmatprep.subr.bf16.mxu0 0
    %327 = vmatpush2.bf16.xpose.msra.mxu0 0
    %328 = vmatprep.subr.bf16.mxu0 0
    %329 = vmatpush2.bf16.xpose.msra.mxu0 0
    %330 = vmatprep.mubr.bf16.mxu0 0
    %331 = vmatmul.mubr.bf16.gmra.mxu0 %v293
    %v332 = vpop.f32.mrf.mxu0
    %v333 = vadd.f32 0.0, %v332
    %v334 = vpop.f32.mrf.mxu0
    %v335 = vpop.f32.mrf.mxu0
    %v336 = vpop.f32.mrf.mxu0
    %337 = vdwg.mxu0
    %v338 = vmul.f32 %v285, 0.25
    %v339 = vmul.f32 %v333, 0.25
    %v340 = vsel %vm51, 1, 0
    %vm341 = vcmp.eq.s32.totalorder %v340, 1
    %v342 = vsel %vm341, %v338, -1e+30
    %v343 = vsel %vm341, %v339, -1e+30
    %vm344 = vcmask 64512
    %v345 = vsel %vm344, %v342, -inf
    %346 = vmax.xlane.f32.xlu0 %v345
    %v347 = vpop.xlane.xlu0 %346
    %v348 = vsel %vm344, %v343, -inf
    %349 = vmax.xlane.f32.xlu0 %v348
    %v350 = vpop.xlane.xlu0 %349
    %v351 = vsub.f32 %v342, %v347
    %v352 = vsub.f32 %v343, %v350
    %v353 = vmul.f32 %v351, 1.442695
    %v354 = vpow.pop %v353
    %v355 = vmul.f32 %v352, 1.442695
    %v356 = vpow.pop %v355
    %v357 = vsel %vm344, %v354, 0.0
    %358 = vadd.xlane.f32.xlu0 %v357
    %v359 = vpop.xlane.xlu0 %358
    %v360 = vsel %vm344, %v356, 0.0
    %361 = vadd.xlane.f32.xlu0 %v360
    %v362 = vpop.xlane.xlu0 %361
    %v363 = vrcp.pop %v359
    %v364 = vmul.f32 %v354, %v363
    %v365 = vrcp.pop %v362
    %v366 = vmul.f32 %v356, %v365
    %v367 = vpack.c.bf16 %v364, %v364
    %v368 = vpack.c.bf16 %v366, %v366
    %369 = vrot.lane.b32.xlu0 %v239, 32
    %v370 = vpop.permute.xlu0 %369
    %v372 = vsel %vm344, %v367, 0
    %vm374 = vcmask 1043456
    %v376 = vsel %vm374, %v370, 0
    %378 = vmatprep.subr.bf16.mxu0 0
    %379 = vmatpush1.bf16.msra.mxu0 0
    %380 = vmatprep.subr.bf16.mxu0 0
    %381 = vmatpush1.bf16.msra.mxu0 0
    %382 = vmatprep.subr.bf16.mxu0 0
    %383 = vmatpush1.bf16.msra.mxu0 0
    %384 = vmatprep.subr.bf16.mxu0 0
    %385 = vmatpush1.bf16.msra.mxu0 0
    %386 = vmatprep.subr.bf16.mxu0 0
    %387 = vmatpush1.bf16.msra.mxu0 0
    %388 = vmatprep.subr.bf16.mxu0 0
    %389 = vmatpush1.bf16.msra.mxu0 0
    %390 = vmatprep.subr.bf16.mxu0 0
    %391 = vmatpush1.bf16.msra.mxu0 0
    %392 = vmatprep.subr.bf16.mxu0 0
    %393 = vmatpush1.bf16.msra.mxu0 %v376
    %394 = vmatprep.subr.bf16.mxu0 0
    %395 = vmatpush2.bf16.msra.mxu0 0
    %396 = vmatprep.subr.bf16.mxu0 0
    %397 = vmatpush2.bf16.msra.mxu0 0
    %398 = vmatprep.subr.bf16.mxu0 0
    %399 = vmatpush2.bf16.msra.mxu0 0
    %400 = vmatprep.subr.bf16.mxu0 0
    %401 = vmatpush2.bf16.msra.mxu0 0
    %402 = vmatprep.subr.bf16.mxu0 0
    %403 = vmatpush2.bf16.msra.mxu0 0
    %404 = vmatprep.subr.bf16.mxu0 0
    %405 = vmatpush2.bf16.msra.mxu0 0
    %406 = vmatprep.subr.bf16.mxu0 0
    %407 = vmatpush2.bf16.msra.mxu0 0
    %408 = vmatprep.subr.bf16.mxu0 0
    %409 = vmatpush2.bf16.msra.mxu0 0
    %410 = vmatprep.mubr.bf16.mxu0 0
    %411 = vmatmul.mubr.bf16.gmra.mxu0 %v372
    %v412 = vpop.f32.mrf.mxu0
    %v413 = vadd.f32 0.0, %v412
    %v414 = vpop.f32.mrf.mxu0
    %v415 = vpop.f32.mrf.mxu0
    %v416 = vpop.f32.mrf.mxu0
    %417 = vdwg.mxu0
    %418 = vrot.lane.b32.xlu0 %v240, 32
    %v419 = vpop.permute.xlu0 %418
    %v421 = vsel %vm344, %v368, 0
    %v424 = vsel %vm374, %v419, 0
    %426 = vmatprep.subr.bf16.mxu0 0
    %427 = vmatpush1.bf16.msra.mxu0 0
    %428 = vmatprep.subr.bf16.mxu0 0
    %429 = vmatpush1.bf16.msra.mxu0 0
    %430 = vmatprep.subr.bf16.mxu0 0
    %431 = vmatpush1.bf16.msra.mxu0 0
    %432 = vmatprep.subr.bf16.mxu0 0
    %433 = vmatpush1.bf16.msra.mxu0 0
    %434 = vmatprep.subr.bf16.mxu0 0
    %435 = vmatpush1.bf16.msra.mxu0 0
    %436 = vmatprep.subr.bf16.mxu0 0
    %437 = vmatpush1.bf16.msra.mxu0 0
    %438 = vmatprep.subr.bf16.mxu0 0
    %439 = vmatpush1.bf16.msra.mxu0 0
    %440 = vmatprep.subr.bf16.mxu0 0
    %441 = vmatpush1.bf16.msra.mxu0 %v424
    %442 = vmatprep.subr.bf16.mxu0 0
    %443 = vmatpush2.bf16.msra.mxu0 0
    %444 = vmatprep.subr.bf16.mxu0 0
    %445 = vmatpush2.bf16.msra.mxu0 0
    %446 = vmatprep.subr.bf16.mxu0 0
    %447 = vmatpush2.bf16.msra.mxu0 0
    %448 = vmatprep.subr.bf16.mxu0 0
    %449 = vmatpush2.bf16.msra.mxu0 0
    %450 = vmatprep.subr.bf16.mxu0 0
    %451 = vmatpush2.bf16.msra.mxu0 0
    %452 = vmatprep.subr.bf16.mxu0 0
    %453 = vmatpush2.bf16.msra.mxu0 0
    %454 = vmatprep.subr.bf16.mxu0 0
    %455 = vmatpush2.bf16.msra.mxu0 0
    %456 = vmatprep.subr.bf16.mxu0 0
    %457 = vmatpush2.bf16.msra.mxu0 0
    %458 = vmatprep.mubr.bf16.mxu0 0
    %459 = vmatmul.mubr.bf16.gmra.mxu0 %v421
    %v460 = vpop.f32.mrf.mxu0
    %v461 = vadd.f32 0.0, %v460
    %v462 = vpop.f32.mrf.mxu0
    %v463 = vpop.f32.mrf.mxu0
    %v464 = vpop.f32.mrf.mxu0
    %465 = vdwg.mxu0
    %466 = vrot.lane.b32.xlu0 %v239, 112
    %v467 = vpop.permute.xlu0 %466
    %v469 = vsel %vm243, %v467, 0
    %471 = vmatprep.subr.bf16.mxu0 0
    %472 = vmatpush1.bf16.xpose.msra.mxu0 0
    %473 = vmatprep.subr.bf16.mxu0 0
    %474 = vmatpush1.bf16.xpose.msra.mxu0 0
    %475 = vmatprep.subr.bf16.mxu0 0
    %476 = vmatpush1.bf16.xpose.msra.mxu0 0
    %477 = vmatprep.subr.bf16.mxu0 0
    %478 = vmatpush1.bf16.xpose.msra.mxu0 0
    %479 = vmatprep.subr.bf16.mxu0 0
    %480 = vmatpush1.bf16.xpose.msra.mxu0 0
    %481 = vmatprep.subr.bf16.mxu0 0
    %482 = vmatpush1.bf16.xpose.msra.mxu0 0
    %483 = vmatprep.subr.bf16.mxu0 0
    %484 = vmatpush1.bf16.xpose.msra.mxu0 0
    %485 = vmatprep.subr.bf16.mxu0 0
    %486 = vmatpush1.bf16.xpose.msra.mxu0 %v248
    %487 = vmatprep.subr.bf16.mxu0 0
    %488 = vmatpush2.bf16.xpose.msra.mxu0 0
    %489 = vmatprep.subr.bf16.mxu0 0
    %490 = vmatpush2.bf16.xpose.msra.mxu0 0
    %491 = vmatprep.subr.bf16.mxu0 0
    %492 = vmatpush2.bf16.xpose.msra.mxu0 0
    %493 = vmatprep.subr.bf16.mxu0 0
    %494 = vmatpush2.bf16.xpose.msra.mxu0 0
    %495 = vmatprep.subr.bf16.mxu0 0
    %496 = vmatpush2.bf16.xpose.msra.mxu0 0
    %497 = vmatprep.subr.bf16.mxu0 0
    %498 = vmatpush2.bf16.xpose.msra.mxu0 0
    %499 = vmatprep.subr.bf16.mxu0 0
    %500 = vmatpush2.bf16.xpose.msra.mxu0 0
    %501 = vmatprep.subr.bf16.mxu0 0
    %502 = vmatpush2.bf16.xpose.msra.mxu0 0
    %503 = vmatprep.mubr.bf16.mxu0 0
    %504 = vmatmul.mubr.bf16.gmra.mxu0 %v469
    %v505 = vpop.f32.mrf.mxu0
    %v506 = vadd.f32 0.0, %v505
    %v507 = vpop.f32.mrf.mxu0
    %v508 = vpop.f32.mrf.mxu0
    %v509 = vpop.f32.mrf.mxu0
    %510 = vdwg.mxu0
    %511 = vrot.lane.b32.xlu0 %v240, 112
    %v512 = vpop.permute.xlu0 %511
    %v514 = vsel %vm243, %v512, 0
    %516 = vmatprep.subr.bf16.mxu0 0
    %517 = vmatpush1.bf16.xpose.msra.mxu0 0
    %518 = vmatprep.subr.bf16.mxu0 0
    %519 = vmatpush1.bf16.xpose.msra.mxu0 0
    %520 = vmatprep.subr.bf16.mxu0 0
    %521 = vmatpush1.bf16.xpose.msra.mxu0 0
    %522 = vmatprep.subr.bf16.mxu0 0
    %523 = vmatpush1.bf16.xpose.msra.mxu0 0
    %524 = vmatprep.subr.bf16.mxu0 0
    %525 = vmatpush1.bf16.xpose.msra.mxu0 0
    %526 = vmatprep.subr.bf16.mxu0 0
    %527 = vmatpush1.bf16.xpose.msra.mxu0 0
    %528 = vmatprep.subr.bf16.mxu0 0
    %529 = vmatpush1.bf16.xpose.msra.mxu0 0
    %530 = vmatprep.subr.bf16.mxu0 0
    %531 = vmatpush1.bf16.xpose.msra.mxu0 %v296
    %532 = vmatprep.subr.bf16.mxu0 0
    %533 = vmatpush2.bf16.xpose.msra.mxu0 0
    %534 = vmatprep.subr.bf16.mxu0 0
    %535 = vmatpush2.bf16.xpose.msra.mxu0 0
    %536 = vmatprep.subr.bf16.mxu0 0
    %537 = vmatpush2.bf16.xpose.msra.mxu0 0
    %538 = vmatprep.subr.bf16.mxu0 0
    %539 = vmatpush2.bf16.xpose.msra.mxu0 0
    %540 = vmatprep.subr.bf16.mxu0 0
    %541 = vmatpush2.bf16.xpose.msra.mxu0 0
    %542 = vmatprep.subr.bf16.mxu0 0
    %543 = vmatpush2.bf16.xpose.msra.mxu0 0
    %544 = vmatprep.subr.bf16.mxu0 0
    %545 = vmatpush2.bf16.xpose.msra.mxu0 0
    %546 = vmatprep.subr.bf16.mxu0 0
    %547 = vmatpush2.bf16.xpose.msra.mxu0 0
    %548 = vmatprep.mubr.bf16.mxu0 0
    %549 = vmatmul.mubr.bf16.gmra.mxu0 %v514
    %v550 = vpop.f32.mrf.mxu0
    %v551 = vadd.f32 0.0, %v550
    %v552 = vpop.f32.mrf.mxu0
    %v553 = vpop.f32.mrf.mxu0
    %v554 = vpop.f32.mrf.mxu0
    %555 = vdwg.mxu0
    %v556 = vmul.f32 %v506, 0.25
    %v557 = vmul.f32 %v551, 0.25
    %v558 = vsel %vm341, %v556, -1e+30
    %v559 = vsel %vm341, %v557, -1e+30
    %v560 = vsel %vm344, %v558, -inf
    %561 = vmax.xlane.f32.xlu0 %v560
    %v562 = vpop.xlane.xlu0 %561
    %v563 = vsel %vm344, %v559, -inf
    %564 = vmax.xlane.f32.xlu0 %v563
    %v565 = vpop.xlane.xlu0 %564
    %v566 = vsub.f32 %v558, %v562
    %v567 = vsub.f32 %v559, %v565
    %v568 = vmul.f32 %v566, 1.442695
    %v569 = vpow.pop %v568
    %v570 = vmul.f32 %v567, 1.442695
    %v571 = vpow.pop %v570
    %v572 = vsel %vm344, %v569, 0.0
    %573 = vadd.xlane.f32.xlu0 %v572
    %v574 = vpop.xlane.xlu0 %573
    %v575 = vsel %vm344, %v571, 0.0
    %576 = vadd.xlane.f32.xlu0 %v575
    %v577 = vpop.xlane.xlu0 %576
    %v578 = vrcp.pop %v574
    %v579 = vmul.f32 %v569, %v578
    %v580 = vrcp.pop %v577
    %v581 = vmul.f32 %v571, %v580
    %v582 = vpack.c.bf16 %v579, %v579
    %v583 = vpack.c.bf16 %v581, %v581
    %v585 = vsel %vm344, %v582, 0
    %587 = vmatprep.subr.bf16.mxu0 0
    %588 = vmatpush1.bf16.msra.mxu0 0
    %589 = vmatprep.subr.bf16.mxu0 0
    %590 = vmatpush1.bf16.msra.mxu0 0
    %591 = vmatprep.subr.bf16.mxu0 0
    %592 = vmatpush1.bf16.msra.mxu0 0
    %593 = vmatprep.subr.bf16.mxu0 0
    %594 = vmatpush1.bf16.msra.mxu0 0
    %595 = vmatprep.subr.bf16.mxu0 0
    %596 = vmatpush1.bf16.msra.mxu0 0
    %597 = vmatprep.subr.bf16.mxu0 0
    %598 = vmatpush1.bf16.msra.mxu0 0
    %599 = vmatprep.subr.bf16.mxu0 0
    %600 = vmatpush1.bf16.msra.mxu0 0
    %601 = vmatprep.subr.bf16.mxu0 0
    %602 = vmatpush1.bf16.msra.mxu0 %v376
    %603 = vmatprep.subr.bf16.mxu0 0
    %604 = vmatpush2.bf16.msra.mxu0 0
    %605 = vmatprep.subr.bf16.mxu0 0
    %606 = vmatpush2.bf16.msra.mxu0 0
    %607 = vmatprep.subr.bf16.mxu0 0
    %608 = vmatpush2.bf16.msra.mxu0 0
    %609 = vmatprep.subr.bf16.mxu0 0
    %610 = vmatpush2.bf16.msra.mxu0 0
    %611 = vmatprep.subr.bf16.mxu0 0
    %612 = vmatpush2.bf16.msra.mxu0 0
    %613 = vmatprep.subr.bf16.mxu0 0
    %614 = vmatpush2.bf16.msra.mxu0 0
    %615 = vmatprep.subr.bf16.mxu0 0
    %616 = vmatpush2.bf16.msra.mxu0 0
    %617 = vmatprep.subr.bf16.mxu0 0
    %618 = vmatpush2.bf16.msra.mxu0 0
    %619 = vmatprep.mubr.bf16.mxu0 0
    %620 = vmatmul.mubr.bf16.gmra.mxu0 %v585
    %v621 = vpop.f32.mrf.mxu0
    %v622 = vadd.f32 0.0, %v621
    %v623 = vpop.f32.mrf.mxu0
    %v624 = vpop.f32.mrf.mxu0
    %v625 = vpop.f32.mrf.mxu0
    %626 = vdwg.mxu0
    %v628 = vsel %vm344, %v583, 0
    %630 = vmatprep.subr.bf16.mxu0 0
    %631 = vmatpush1.bf16.msra.mxu0 0
    %632 = vmatprep.subr.bf16.mxu0 0
    %633 = vmatpush1.bf16.msra.mxu0 0
    %634 = vmatprep.subr.bf16.mxu0 0
    %635 = vmatpush1.bf16.msra.mxu0 0
    %636 = vmatprep.subr.bf16.mxu0 0
    %637 = vmatpush1.bf16.msra.mxu0 0
    %638 = vmatprep.subr.bf16.mxu0 0
    %639 = vmatpush1.bf16.msra.mxu0 0
    %640 = vmatprep.subr.bf16.mxu0 0
    %641 = vmatpush1.bf16.msra.mxu0 0
    %642 = vmatprep.subr.bf16.mxu0 0
    %643 = vmatpush1.bf16.msra.mxu0 0
    %644 = vmatprep.subr.bf16.mxu0 0
    %645 = vmatpush1.bf16.msra.mxu0 %v424
    %646 = vmatprep.subr.bf16.mxu0 0
    %647 = vmatpush2.bf16.msra.mxu0 0
    %648 = vmatprep.subr.bf16.mxu0 0
    %649 = vmatpush2.bf16.msra.mxu0 0
    %650 = vmatprep.subr.bf16.mxu0 0
    %651 = vmatpush2.bf16.msra.mxu0 0
    %652 = vmatprep.subr.bf16.mxu0 0
    %653 = vmatpush2.bf16.msra.mxu0 0
    %654 = vmatprep.subr.bf16.mxu0 0
    %655 = vmatpush2.bf16.msra.mxu0 0
    %656 = vmatprep.subr.bf16.mxu0 0
    %657 = vmatpush2.bf16.msra.mxu0 0
    %658 = vmatprep.subr.bf16.mxu0 0
    %659 = vmatpush2.bf16.msra.mxu0 0
    %660 = vmatprep.subr.bf16.mxu0 0
    %661 = vmatpush2.bf16.msra.mxu0 0
    %662 = vmatprep.mubr.bf16.mxu0 0
    %663 = vmatmul.mubr.bf16.gmra.mxu0 %v628
    %v664 = vpop.f32.mrf.mxu0
    %v665 = vadd.f32 0.0, %v664
    %v666 = vpop.f32.mrf.mxu0
    %v667 = vpop.f32.mrf.mxu0
    %v668 = vpop.f32.mrf.mxu0
    %669 = vdwg.mxu0
    %670 = vrot.lane.b32.xlu0 %v239, 96
    %v671 = vpop.permute.xlu0 %670
    %672 = vrot.lane.b32.xlu0 %v239, 48
    %v673 = vpop.permute.xlu0 %672
    %v675 = vsel %vm243, %v671, 0
    %v678 = vsel %vm243, %v673, 0
    %680 = vmatprep.subr.bf16.mxu0 0
    %681 = vmatpush1.bf16.xpose.msra.mxu0 0
    %682 = vmatprep.subr.bf16.mxu0 0
    %683 = vmatpush1.bf16.xpose.msra.mxu0 0
    %684 = vmatprep.subr.bf16.mxu0 0
    %685 = vmatpush1.bf16.xpose.msra.mxu0 0
    %686 = vmatprep.subr.bf16.mxu0 0
    %687 = vmatpush1.bf16.xpose.msra.mxu0 0
    %688 = vmatprep.subr.bf16.mxu0 0
    %689 = vmatpush1.bf16.xpose.msra.mxu0 0
    %690 = vmatprep.subr.bf16.mxu0 0
    %691 = vmatpush1.bf16.xpose.msra.mxu0 0
    %692 = vmatprep.subr.bf16.mxu0 0
    %693 = vmatpush1.bf16.xpose.msra.mxu0 0
    %694 = vmatprep.subr.bf16.mxu0 0
    %695 = vmatpush1.bf16.xpose.msra.mxu0 %v678
    %696 = vmatprep.subr.bf16.mxu0 0
    %697 = vmatpush2.bf16.xpose.msra.mxu0 0
    %698 = vmatprep.subr.bf16.mxu0 0
    %699 = vmatpush2.bf16.xpose.msra.mxu0 0
    %700 = vmatprep.subr.bf16.mxu0 0
    %701 = vmatpush2.bf16.xpose.msra.mxu0 0
    %702 = vmatprep.subr.bf16.mxu0 0
    %703 = vmatpush2.bf16.xpose.msra.mxu0 0
    %704 = vmatprep.subr.bf16.mxu0 0
    %705 = vmatpush2.bf16.xpose.msra.mxu0 0
    %706 = vmatprep.subr.bf16.mxu0 0
    %707 = vmatpush2.bf16.xpose.msra.mxu0 0
    %708 = vmatprep.subr.bf16.mxu0 0
    %709 = vmatpush2.bf16.xpose.msra.mxu0 0
    %710 = vmatprep.subr.bf16.mxu0 0
    %711 = vmatpush2.bf16.xpose.msra.mxu0 0
    %712 = vmatprep.mubr.bf16.mxu0 0
    %713 = vmatmul.mubr.bf16.gmra.mxu0 %v675
    %v714 = vpop.f32.mrf.mxu0
    %v715 = vadd.f32 0.0, %v714
    %v716 = vpop.f32.mrf.mxu0
    %v717 = vpop.f32.mrf.mxu0
    %v718 = vpop.f32.mrf.mxu0
    %719 = vdwg.mxu0
    %720 = vrot.lane.b32.xlu0 %v240, 96
    %v721 = vpop.permute.xlu0 %720
    %722 = vrot.lane.b32.xlu0 %v240, 48
    %v723 = vpop.permute.xlu0 %722
    %v725 = vsel %vm243, %v721, 0
    %v728 = vsel %vm243, %v723, 0
    %730 = vmatprep.subr.bf16.mxu0 0
    %731 = vmatpush1.bf16.xpose.msra.mxu0 0
    %732 = vmatprep.subr.bf16.mxu0 0
    %733 = vmatpush1.bf16.xpose.msra.mxu0 0
    %734 = vmatprep.subr.bf16.mxu0 0
    %735 = vmatpush1.bf16.xpose.msra.mxu0 0
    %736 = vmatprep.subr.bf16.mxu0 0
    %737 = vmatpush1.bf16.xpose.msra.mxu0 0
    %738 = vmatprep.subr.bf16.mxu0 0
    %739 = vmatpush1.bf16.xpose.msra.mxu0 0
    %740 = vmatprep.subr.bf16.mxu0 0
    %741 = vmatpush1.bf16.xpose.msra.mxu0 0
    %742 = vmatprep.subr.bf16.mxu0 0
    %743 = vmatpush1.bf16.xpose.msra.mxu0 0
    %744 = vmatprep.subr.bf16.mxu0 0
    %745 = vmatpush1.bf16.xpose.msra.mxu0 %v728
    %746 = vmatprep.subr.bf16.mxu0 0
    %747 = vmatpush2.bf16.xpose.msra.mxu0 0
    %748 = vmatprep.subr.bf16.mxu0 0
    %749 = vmatpush2.bf16.xpose.msra.mxu0 0
    %750 = vmatprep.subr.bf16.mxu0 0
    %751 = vmatpush2.bf16.xpose.msra.mxu0 0
    %752 = vmatprep.subr.bf16.mxu0 0
    %753 = vmatpush2.bf16.xpose.msra.mxu0 0
    %754 = vmatprep.subr.bf16.mxu0 0
    %755 = vmatpush2.bf16.xpose.msra.mxu0 0
    %756 = vmatprep.subr.bf16.mxu0 0
    %757 = vmatpush2.bf16.xpose.msra.mxu0 0
    %758 = vmatprep.subr.bf16.mxu0 0
    %759 = vmatpush2.bf16.xpose.msra.mxu0 0
    %760 = vmatprep.subr.bf16.mxu0 0
    %761 = vmatpush2.bf16.xpose.msra.mxu0 0
    %762 = vmatprep.mubr.bf16.mxu0 0
    %763 = vmatmul.mubr.bf16.gmra.mxu0 %v725
    %v764 = vpop.f32.mrf.mxu0
    %v765 = vadd.f32 0.0, %v764
    %v766 = vpop.f32.mrf.mxu0
    %v767 = vpop.f32.mrf.mxu0
    %v768 = vpop.f32.mrf.mxu0
    %769 = vdwg.mxu0
    %v770 = vmul.f32 %v715, 0.25
    %v771 = vmul.f32 %v765, 0.25
    %v772 = vsel %vm341, %v770, -1e+30
    %v773 = vsel %vm341, %v771, -1e+30
    %v774 = vsel %vm344, %v772, -inf
    %775 = vmax.xlane.f32.xlu0 %v774
    %v776 = vpop.xlane.xlu0 %775
    %v777 = vsel %vm344, %v773, -inf
    %778 = vmax.xlane.f32.xlu0 %v777
    %v779 = vpop.xlane.xlu0 %778
    %v780 = vsub.f32 %v772, %v776
    %v781 = vsub.f32 %v773, %v779
    %v782 = vmul.f32 %v780, 1.442695
    %v783 = vpow.pop %v782
    %v784 = vmul.f32 %v781, 1.442695
    %v785 = vpow.pop %v784
    %v786 = vsel %vm344, %v783, 0.0
    %787 = vadd.xlane.f32.xlu0 %v786
    %v788 = vpop.xlane.xlu0 %787
    %v789 = vsel %vm344, %v785, 0.0
    %790 = vadd.xlane.f32.xlu0 %v789
    %v791 = vpop.xlane.xlu0 %790
    %v792 = vrcp.pop %v788
    %v793 = vmul.f32 %v783, %v792
    %v794 = vrcp.pop %v791
    %v795 = vmul.f32 %v785, %v794
    %v796 = vpack.c.bf16 %v793, %v793
    %v797 = vpack.c.bf16 %v795, %v795
    %798 = vrot.lane.b32.xlu0 %v239, 16
    %v799 = vpop.permute.xlu0 %798
    %v801 = vsel %vm344, %v796, 0
    %v804 = vsel %vm374, %v799, 0
    %806 = vmatprep.subr.bf16.mxu0 0
    %807 = vmatpush1.bf16.msra.mxu0 0
    %808 = vmatprep.subr.bf16.mxu0 0
    %809 = vmatpush1.bf16.msra.mxu0 0
    %810 = vmatprep.subr.bf16.mxu0 0
    %811 = vmatpush1.bf16.msra.mxu0 0
    %812 = vmatprep.subr.bf16.mxu0 0
    %813 = vmatpush1.bf16.msra.mxu0 0
    %814 = vmatprep.subr.bf16.mxu0 0
    %815 = vmatpush1.bf16.msra.mxu0 0
    %816 = vmatprep.subr.bf16.mxu0 0
    %817 = vmatpush1.bf16.msra.mxu0 0
    %818 = vmatprep.subr.bf16.mxu0 0
    %819 = vmatpush1.bf16.msra.mxu0 0
    %820 = vmatprep.subr.bf16.mxu0 0
    %821 = vmatpush1.bf16.msra.mxu0 %v804
    %822 = vmatprep.subr.bf16.mxu0 0
    %823 = vmatpush2.bf16.msra.mxu0 0
    %824 = vmatprep.subr.bf16.mxu0 0
    %825 = vmatpush2.bf16.msra.mxu0 0
    %826 = vmatprep.subr.bf16.mxu0 0
    %827 = vmatpush2.bf16.msra.mxu0 0
    %828 = vmatprep.subr.bf16.mxu0 0
    %829 = vmatpush2.bf16.msra.mxu0 0
    %830 = vmatprep.subr.bf16.mxu0 0
    %831 = vmatpush2.bf16.msra.mxu0 0
    %832 = vmatprep.subr.bf16.mxu0 0
    %833 = vmatpush2.bf16.msra.mxu0 0
    %834 = vmatprep.subr.bf16.mxu0 0
    %835 = vmatpush2.bf16.msra.mxu0 0
    %836 = vmatprep.subr.bf16.mxu0 0
    %837 = vmatpush2.bf16.msra.mxu0 0
    %838 = vmatprep.mubr.bf16.mxu0 0
    %839 = vmatmul.mubr.bf16.gmra.mxu0 %v801
    %v840 = vpop.f32.mrf.mxu0
    %v841 = vadd.f32 0.0, %v840
    %v842 = vpop.f32.mrf.mxu0
    %v843 = vpop.f32.mrf.mxu0
    %v844 = vpop.f32.mrf.mxu0
    %845 = vdwg.mxu0
    %846 = vrot.lane.b32.xlu0 %v240, 16
    %v847 = vpop.permute.xlu0 %846
    %v849 = vsel %vm344, %v797, 0
    %v852 = vsel %vm374, %v847, 0
    %854 = vmatprep.subr.bf16.mxu0 0
    %855 = vmatpush1.bf16.msra.mxu0 0
    %856 = vmatprep.subr.bf16.mxu0 0
    %857 = vmatpush1.bf16.msra.mxu0 0
    %858 = vmatprep.subr.bf16.mxu0 0
    %859 = vmatpush1.bf16.msra.mxu0 0
    %860 = vmatprep.subr.bf16.mxu0 0
    %861 = vmatpush1.bf16.msra.mxu0 0
    %862 = vmatprep.subr.bf16.mxu0 0
    %863 = vmatpush1.bf16.msra.mxu0 0
    %864 = vmatprep.subr.bf16.mxu0 0
    %865 = vmatpush1.bf16.msra.mxu0 0
    %866 = vmatprep.subr.bf16.mxu0 0
    %867 = vmatpush1.bf16.msra.mxu0 0
    %868 = vmatprep.subr.bf16.mxu0 0
    %869 = vmatpush1.bf16.msra.mxu0 %v852
    %870 = vmatprep.subr.bf16.mxu0 0
    %871 = vmatpush2.bf16.msra.mxu0 0
    %872 = vmatprep.subr.bf16.mxu0 0
    %873 = vmatpush2.bf16.msra.mxu0 0
    %874 = vmatprep.subr.bf16.mxu0 0
    %875 = vmatpush2.bf16.msra.mxu0 0
    %876 = vmatprep.subr.bf16.mxu0 0
    %877 = vmatpush2.bf16.msra.mxu0 0
    %878 = vmatprep.subr.bf16.mxu0 0
    %879 = vmatpush2.bf16.msra.mxu0 0
    %880 = vmatprep.subr.bf16.mxu0 0
    %881 = vmatpush2.bf16.msra.mxu0 0
    %882 = vmatprep.subr.bf16.mxu0 0
    %883 = vmatpush2.bf16.msra.mxu0 0
    %884 = vmatprep.subr.bf16.mxu0 0
    %885 = vmatpush2.bf16.msra.mxu0 0
    %886 = vmatprep.mubr.bf16.mxu0 0
    %887 = vmatmul.mubr.bf16.gmra.mxu0 %v849
    %v888 = vpop.f32.mrf.mxu0
    %v889 = vadd.f32 0.0, %v888
    %v890 = vpop.f32.mrf.mxu0
    %v891 = vpop.f32.mrf.mxu0
    %v892 = vpop.f32.mrf.mxu0
    %893 = vdwg.mxu0
    %894 = vrot.lane.b32.xlu0 %v239, 80
    %v895 = vpop.permute.xlu0 %894
    %v897 = vsel %vm243, %v895, 0
    %899 = vmatprep.subr.bf16.mxu0 0
    %900 = vmatpush1.bf16.xpose.msra.mxu0 0
    %901 = vmatprep.subr.bf16.mxu0 0
    %902 = vmatpush1.bf16.xpose.msra.mxu0 0
    %903 = vmatprep.subr.bf16.mxu0 0
    %904 = vmatpush1.bf16.xpose.msra.mxu0 0
    %905 = vmatprep.subr.bf16.mxu0 0
    %906 = vmatpush1.bf16.xpose.msra.mxu0 0
    %907 = vmatprep.subr.bf16.mxu0 0
    %908 = vmatpush1.bf16.xpose.msra.mxu0 0
    %909 = vmatprep.subr.bf16.mxu0 0
    %910 = vmatpush1.bf16.xpose.msra.mxu0 0
    %911 = vmatprep.subr.bf16.mxu0 0
    %912 = vmatpush1.bf16.xpose.msra.mxu0 0
    %913 = vmatprep.subr.bf16.mxu0 0
    %914 = vmatpush1.bf16.xpose.msra.mxu0 %v678
    %915 = vmatprep.subr.bf16.mxu0 0
    %916 = vmatpush2.bf16.xpose.msra.mxu0 0
    %917 = vmatprep.subr.bf16.mxu0 0
    %918 = vmatpush2.bf16.xpose.msra.mxu0 0
    %919 = vmatprep.subr.bf16.mxu0 0
    %920 = vmatpush2.bf16.xpose.msra.mxu0 0
    %921 = vmatprep.subr.bf16.mxu0 0
    %922 = vmatpush2.bf16.xpose.msra.mxu0 0
    %923 = vmatprep.subr.bf16.mxu0 0
    %924 = vmatpush2.bf16.xpose.msra.mxu0 0
    %925 = vmatprep.subr.bf16.mxu0 0
    %926 = vmatpush2.bf16.xpose.msra.mxu0 0
    %927 = vmatprep.subr.bf16.mxu0 0
    %928 = vmatpush2.bf16.xpose.msra.mxu0 0
    %929 = vmatprep.subr.bf16.mxu0 0
    %930 = vmatpush2.bf16.xpose.msra.mxu0 0
    %931 = vmatprep.mubr.bf16.mxu0 0
    %932 = vmatmul.mubr.bf16.gmra.mxu0 %v897
    %v933 = vpop.f32.mrf.mxu0
    %v934 = vadd.f32 0.0, %v933
    %v935 = vpop.f32.mrf.mxu0
    %v936 = vpop.f32.mrf.mxu0
    %v937 = vpop.f32.mrf.mxu0
    %938 = vdwg.mxu0
    %939 = vrot.lane.b32.xlu0 %v240, 80
    %v940 = vpop.permute.xlu0 %939
    %v942 = vsel %vm243, %v940, 0
    %944 = vmatprep.subr.bf16.mxu0 0
    %945 = vmatpush1.bf16.xpose.msra.mxu0 0
    %946 = vmatprep.subr.bf16.mxu0 0
    %947 = vmatpush1.bf16.xpose.msra.mxu0 0
    %948 = vmatprep.subr.bf16.mxu0 0
    %949 = vmatpush1.bf16.xpose.msra.mxu0 0
    %950 = vmatprep.subr.bf16.mxu0 0
    %951 = vmatpush1.bf16.xpose.msra.mxu0 0
    %952 = vmatprep.subr.bf16.mxu0 0
    %953 = vmatpush1.bf16.xpose.msra.mxu0 0
    %954 = vmatprep.subr.bf16.mxu0 0
    %955 = vmatpush1.bf16.xpose.msra.mxu0 0
    %956 = vmatprep.subr.bf16.mxu0 0
    %957 = vmatpush1.bf16.xpose.msra.mxu0 0
    %958 = vmatprep.subr.bf16.mxu0 0
    %959 = vmatpush1.bf16.xpose.msra.mxu0 %v728
    %960 = vmatprep.subr.bf16.mxu0 0
    %961 = vmatpush2.bf16.xpose.msra.mxu0 0
    %962 = vmatprep.subr.bf16.mxu0 0
    %963 = vmatpush2.bf16.xpose.msra.mxu0 0
    %964 = vmatprep.subr.bf16.mxu0 0
    %965 = vmatpush2.bf16.xpose.msra.mxu0 0
    %966 = vmatprep.subr.bf16.mxu0 0
    %967 = vmatpush2.bf16.xpose.msra.mxu0 0
    %968 = vmatprep.subr.bf16.mxu0 0
    %969 = vmatpush2.bf16.xpose.msra.mxu0 0
    %970 = vmatprep.subr.bf16.mxu0 0
    %971 = vmatpush2.bf16.xpose.msra.mxu0 0
    %972 = vmatprep.subr.bf16.mxu0 0
    %973 = vmatpush2.bf16.xpose.msra.mxu0 0
    %974 = vmatprep.subr.bf16.mxu0 0
    %975 = vmatpush2.bf16.xpose.msra.mxu0 0
    %976 = vmatprep.mubr.bf16.mxu0 0
    %977 = vmatmul.mubr.bf16.gmra.mxu0 %v942
    %v978 = vpop.f32.mrf.mxu0
    %v979 = vadd.f32 0.0, %v978
    %v980 = vpop.f32.mrf.mxu0
    %v981 = vpop.f32.mrf.mxu0
    %v982 = vpop.f32.mrf.mxu0
    %983 = vdwg.mxu0
    %v984 = vmul.f32 %v934, 0.25
    %v985 = vmul.f32 %v979, 0.25
    %v986 = vsel %vm341, %v984, -1e+30
    %v987 = vsel %vm341, %v985, -1e+30
    %v988 = vsel %vm344, %v986, -inf
    %989 = vmax.xlane.f32.xlu0 %v988
    %v990 = vpop.xlane.xlu0 %989
    %v991 = vsel %vm344, %v987, -inf
    %992 = vmax.xlane.f32.xlu0 %v991
    %v993 = vpop.xlane.xlu0 %992
    %v994 = vsub.f32 %v986, %v990
    %v995 = vsub.f32 %v987, %v993
    %v996 = vmul.f32 %v994, 1.442695
    %v997 = vpow.pop %v996
    %v998 = vmul.f32 %v995, 1.442695
    %v999 = vpow.pop %v998
    %v1000 = vsel %vm344, %v997, 0.0
    %1001 = vadd.xlane.f32.xlu0 %v1000
    %v1002 = vpop.xlane.xlu0 %1001
    %v1003 = vsel %vm344, %v999, 0.0
    %1004 = vadd.xlane.f32.xlu0 %v1003
    %v1005 = vpop.xlane.xlu0 %1004
    %v1006 = vrcp.pop %v1002
    %v1007 = vmul.f32 %v997, %v1006
    %v1008 = vrcp.pop %v1005
    %v1009 = vmul.f32 %v999, %v1008
    %v1010 = vpack.c.bf16 %v1007, %v1007
    %v1011 = vpack.c.bf16 %v1009, %v1009
    %v1013 = vsel %vm344, %v1010, 0
    %1015 = vmatprep.subr.bf16.mxu0 0
    %1016 = vmatpush1.bf16.msra.mxu0 0
    %1017 = vmatprep.subr.bf16.mxu0 0
    %1018 = vmatpush1.bf16.msra.mxu0 0
    %1019 = vmatprep.subr.bf16.mxu0 0
    %1020 = vmatpush1.bf16.msra.mxu0 0
    %1021 = vmatprep.subr.bf16.mxu0 0
    %1022 = vmatpush1.bf16.msra.mxu0 0
    %1023 = vmatprep.subr.bf16.mxu0 0
    %1024 = vmatpush1.bf16.msra.mxu0 0
    %1025 = vmatprep.subr.bf16.mxu0 0
    %1026 = vmatpush1.bf16.msra.mxu0 0
    %1027 = vmatprep.subr.bf16.mxu0 0
    %1028 = vmatpush1.bf16.msra.mxu0 0
    %1029 = vmatprep.subr.bf16.mxu0 0
    %1030 = vmatpush1.bf16.msra.mxu0 %v804
    %1031 = vmatprep.subr.bf16.mxu0 0
    %1032 = vmatpush2.bf16.msra.mxu0 0
    %1033 = vmatprep.subr.bf16.mxu0 0
    %1034 = vmatpush2.bf16.msra.mxu0 0
    %1035 = vmatprep.subr.bf16.mxu0 0
    %1036 = vmatpush2.bf16.msra.mxu0 0
    %1037 = vmatprep.subr.bf16.mxu0 0
    %1038 = vmatpush2.bf16.msra.mxu0 0
    %1039 = vmatprep.subr.bf16.mxu0 0
    %1040 = vmatpush2.bf16.msra.mxu0 0
    %1041 = vmatprep.subr.bf16.mxu0 0
    %1042 = vmatpush2.bf16.msra.mxu0 0
    %1043 = vmatprep.subr.bf16.mxu0 0
    %1044 = vmatpush2.bf16.msra.mxu0 0
    %1045 = vmatprep.subr.bf16.mxu0 0
    %1046 = vmatpush2.bf16.msra.mxu0 0
    %1047 = vmatprep.mubr.bf16.mxu0 0
    %1048 = vmatmul.mubr.bf16.gmra.mxu0 %v1013
    %v1049 = vpop.f32.mrf.mxu0
    %v1050 = vadd.f32 0.0, %v1049
    %v1051 = vpop.f32.mrf.mxu0
    %v1052 = vpop.f32.mrf.mxu0
    %v1053 = vpop.f32.mrf.mxu0
    %1054 = vdwg.mxu0
    %v1056 = vsel %vm344, %v1011, 0
    %1058 = vmatprep.subr.bf16.mxu0 0
    %1059 = vmatpush1.bf16.msra.mxu0 0
    %1060 = vmatprep.subr.bf16.mxu0 0
    %1061 = vmatpush1.bf16.msra.mxu0 0
    %1062 = vmatprep.subr.bf16.mxu0 0
    %1063 = vmatpush1.bf16.msra.mxu0 0
    %1064 = vmatprep.subr.bf16.mxu0 0
    %1065 = vmatpush1.bf16.msra.mxu0 0
    %1066 = vmatprep.subr.bf16.mxu0 0
    %1067 = vmatpush1.bf16.msra.mxu0 0
    %1068 = vmatprep.subr.bf16.mxu0 0
    %1069 = vmatpush1.bf16.msra.mxu0 0
    %1070 = vmatprep.subr.bf16.mxu0 0
    %1071 = vmatpush1.bf16.msra.mxu0 0
    %1072 = vmatprep.subr.bf16.mxu0 0
    %1073 = vmatpush1.bf16.msra.mxu0 %v852
    %1074 = vmatprep.subr.bf16.mxu0 0
    %1075 = vmatpush2.bf16.msra.mxu0 0
    %1076 = vmatprep.subr.bf16.mxu0 0
    %1077 = vmatpush2.bf16.msra.mxu0 0
    %1078 = vmatprep.subr.bf16.mxu0 0
    %1079 = vmatpush2.bf16.msra.mxu0 0
    %1080 = vmatprep.subr.bf16.mxu0 0
    %1081 = vmatpush2.bf16.msra.mxu0 0
    %1082 = vmatprep.subr.bf16.mxu0 0
    %1083 = vmatpush2.bf16.msra.mxu0 0
    %1084 = vmatprep.subr.bf16.mxu0 0
    %1085 = vmatpush2.bf16.msra.mxu0 0
    %1086 = vmatprep.subr.bf16.mxu0 0
    %1087 = vmatpush2.bf16.msra.mxu0 0
    %1088 = vmatprep.subr.bf16.mxu0 0
    %1089 = vmatpush2.bf16.msra.mxu0 0
    %1090 = vmatprep.mubr.bf16.mxu0 0
    %1091 = vmatmul.mubr.bf16.gmra.mxu0 %v1056
    %v1092 = vpop.f32.mrf.mxu0
    %v1093 = vadd.f32 0.0, %v1092
    %v1094 = vpop.f32.mrf.mxu0
    %v1095 = vpop.f32.mrf.mxu0
    %v1096 = vpop.f32.mrf.mxu0
    %1097 = vdwg.mxu0
    %1100 = vrot.lane.b32.xlu0 %v622, 16
    %v1101 = vpop.permute.xlu0 %1100
    %1102 = vrot.lane.b32.xlu0 %v665, 16
    %v1103 = vpop.permute.xlu0 %1102
    %1108 = vrot.lane.b32.xlu0 %v841, 32
    %v1109 = vpop.permute.xlu0 %1108
    %1110 = vrot.lane.b32.xlu0 %v889, 32
    %v1111 = vpop.permute.xlu0 %1110
    %1116 = vrot.lane.b32.xlu0 %v1050, 48
    %v1117 = vpop.permute.xlu0 %1116
    %1118 = vrot.lane.b32.xlu0 %v1093, 48
    %v1119 = vpop.permute.xlu0 %1118
    %v1122 = vsel %vm243, %v413, %v1101
    %v1123 = vsel %vm243, %v461, %v1103
    %vm1124 = vcmask 261120
    %v1125 = vsel %vm1124, %v1122, %v1109
    %v1126 = vsel %vm1124, %v1123, %v1111
    %vm1127 = vcmask 392192
    %v1128 = vsel %vm1127, %v1125, %v1117
    %v1129 = vsel %vm1127, %v1126, %v1119
    %v1130 = vpack.c.bf16 %v1129, %v1128
    %v1131 = vld [vmem:[%s5] sm:$0xf]
    %v1132 = vld [vmem:[%s5 + $0x4] sm:$0xf]
    %v1133 = vld [vmem:[%s5 + $0x8] sm:$0xf]
    %v1134 = vld [vmem:[%s5 + $0xc] sm:$0xf]
    %v1135 = vld [vmem:[%s5 + $0x10] sm:$0xf]
    %v1136 = vld [vmem:[%s5 + $0x14] sm:$0xf]
    %v1137 = vld [vmem:[%s5 + $0x18] sm:$0xf]
    %v1138 = vld [vmem:[%s5 + $0x1c] sm:$0xf]
    %v1147 = vunpack.c.l.b16 %v1131
    %v1148 = vunpack.c.l.b16 %v1132
    %v1149 = vunpack.c.l.b16 %v1133
    %v1150 = vunpack.c.l.b16 %v1134
    %v1151 = vunpack.c.l.b16 %v1135
    %v1152 = vunpack.c.l.b16 %v1136
    %v1153 = vunpack.c.l.b16 %v1137
    %v1154 = vunpack.c.l.b16 %v1138
    %v1155 = vpack.c.b16 %v1148, %v1147
    %v1156 = vpack.c.b16 %v1150, %v1149
    %v1157 = vpack.c.b16 %v1152, %v1151
    %v1158 = vpack.c.b16 %v1154, %v1153
    %v1164 = vsel %vm54, %v1130, 0
    %1166 = vmatprep.subr.bf16.mxu0 0
    %1167 = vmatpush1.bf16.msra.mxu0 0
    %1168 = vmatprep.subr.bf16.mxu0 0
    %1169 = vmatpush1.bf16.msra.mxu0 0
    %1170 = vmatprep.subr.bf16.mxu0 0
    %1171 = vmatpush1.bf16.msra.mxu0 0
    %1172 = vmatprep.subr.bf16.mxu0 0
    %1173 = vmatpush1.bf16.msra.mxu0 0
    %1174 = vmatprep.subr.bf16.mxu0 0
    %1175 = vmatpush1.bf16.msra.mxu0 %v1158
    %1176 = vmatprep.subr.bf16.mxu0 0
    %1177 = vmatpush1.bf16.msra.mxu0 %v1157
    %1178 = vmatprep.subr.bf16.mxu0 0
    %1179 = vmatpush1.bf16.msra.mxu0 %v1156
    %1180 = vmatprep.subr.bf16.mxu0 0
    %1181 = vmatpush1.bf16.msra.mxu0 %v1155
    %1182 = vmatprep.subr.bf16.mxu0 0
    %1183 = vmatpush2.bf16.msra.mxu0 0
    %1184 = vmatprep.subr.bf16.mxu0 0
    %1185 = vmatpush2.bf16.msra.mxu0 0
    %1186 = vmatprep.subr.bf16.mxu0 0
    %1187 = vmatpush2.bf16.msra.mxu0 0
    %1188 = vmatprep.subr.bf16.mxu0 0
    %1189 = vmatpush2.bf16.msra.mxu0 0
    %1190 = vmatprep.subr.bf16.mxu0 0
    %1191 = vmatpush2.bf16.msra.mxu0 0
    %1192 = vmatprep.subr.bf16.mxu0 0
    %1193 = vmatpush2.bf16.msra.mxu0 0
    %1194 = vmatprep.subr.bf16.mxu0 0
    %1195 = vmatpush2.bf16.msra.mxu0 0
    %1196 = vmatprep.subr.bf16.mxu0 0
    %1197 = vmatpush2.bf16.msra.mxu0 0
    %1198 = vmatprep.mubr.bf16.mxu0 0
    %1199 = vmatmul.mubr.bf16.gmra.mxu0 %v1164
    %v1200 = vpop.f32.mrf.mxu0
    %v1201 = vadd.f32 0.0, %v1200
    %v1202 = vpop.f32.mrf.mxu0
    %v1203 = vpop.f32.mrf.mxu0
    %v1204 = vadd.f32 0.0, %v1203
    %v1205 = vpop.f32.mrf.mxu0
    %1206 = vdwg.mxu0
    %v1207 = vadd.f32 %v43, %v1201
    %v1208 = vadd.f32 %v44, %v1204
    %v1209 = vmul.f32 %v1207, %v1207
    %v1210 = vmul.f32 %v1208, %v1208
    %v1211 = vsel %vm54, %v1209, 0.0
    %1212 = vadd.xlane.f32.xlu0 %v1211
    %v1213 = vpop.xlane.xlu0 %1212
    %v1214 = vsel %vm54, %v1210, 0.0
    %1215 = vadd.xlane.f32.xlu0 %v1214
    %v1216 = vpop.xlane.xlu0 %1215
    %v1217 = vmul.f32 %v1213, %v61
    %v1218 = vmul.f32 %v1216, %v61
    %v1219 = vadd.f32 %v1217, 1e-06
    %v1220 = vadd.f32 %v1218, 1e-06
    %v1221 = vrsqrt.pop %v1219
    %v1222 = vrsqrt.pop %v1220
    %v1223 = vmul.f32 %v1207, %v1221
    %v1224 = vmul.f32 %v1208, %v1222
    %v1225 = vld [vmem:[%s7] sm:$0x1]
    %v1227 = vlaneseq
    %v1228 = vshrl.u32 %v1227, 7
    %v1229 = vsub.s32 0, %v1228
    %v1230 = vrot.slane %v1225, %v1229
    %v1232 = vmul.f32 %v1223, %v1230
    %v1233 = vmul.f32 %v1224, %v1230
    %v1234 = vpack.c.bf16 %v1233, %v1232
    %v1235 = vld [vmem:[%s8] sm:$0xff]
    %v1236 = vld [vmem:[%s8 + $0x8] sm:$0xff]
    %v1237 = vld [vmem:[%s8 + $0x10] sm:$0xff]
    %v1238 = vld [vmem:[%s8 + $0x18] sm:$0xff]
    %v1239 = vld [vmem:[%s8 + $0x20] sm:$0xff]
    %v1240 = vld [vmem:[%s8 + $0x28] sm:$0xff]
    %v1241 = vld [vmem:[%s8 + $0x30] sm:$0xff]
    %v1242 = vld [vmem:[%s8 + $0x38] sm:$0xff]
    %v1251 = vunpack.c.l.b16 %v1235
    %v1252 = vunpack.c.h.b16 %v1235
    %v1253 = vunpack.c.l.b16 %v1236
    %v1254 = vunpack.c.h.b16 %v1236
    %v1255 = vunpack.c.l.b16 %v1237
    %v1256 = vunpack.c.h.b16 %v1237
    %v1257 = vunpack.c.l.b16 %v1238
    %v1258 = vunpack.c.h.b16 %v1238
    %v1259 = vunpack.c.l.b16 %v1239
    %v1260 = vunpack.c.h.b16 %v1239
    %v1261 = vunpack.c.l.b16 %v1240
    %v1262 = vunpack.c.h.b16 %v1240
    %v1263 = vunpack.c.l.b16 %v1241
    %v1264 = vunpack.c.h.b16 %v1241
    %v1265 = vunpack.c.l.b16 %v1242
    %v1266 = vunpack.c.h.b16 %v1242
    %v1267 = vpack.c.b16 %v1253, %v1251
    %v1268 = vpack.c.b16 %v1254, %v1252
    %v1269 = vpack.c.b16 %v1257, %v1255
    %v1270 = vpack.c.b16 %v1258, %v1256
    %v1271 = vpack.c.b16 %v1261, %v1259
    %v1272 = vpack.c.b16 %v1262, %v1260
    %v1273 = vpack.c.b16 %v1265, %v1263
    %v1274 = vpack.c.b16 %v1266, %v1264
    %v1284 = vsel %vm54, %v1234, 0
    %1286 = vmatprep.subr.bf16.mxu0 0
    %1287 = vmatpush1.bf16.msra.mxu0 0
    %1288 = vmatprep.subr.bf16.mxu0 0
    %1289 = vmatpush1.bf16.msra.mxu0 0
    %1290 = vmatprep.subr.bf16.mxu0 0
    %1291 = vmatpush1.bf16.msra.mxu0 0
    %1292 = vmatprep.subr.bf16.mxu0 0
    %1293 = vmatpush1.bf16.msra.mxu0 0
    %1294 = vmatprep.subr.bf16.mxu0 %v1274
    %1295 = vmatpush1.bf16.msra.mxu0 %v1273
    %1296 = vmatprep.subr.bf16.mxu0 %v1272
    %1297 = vmatpush1.bf16.msra.mxu0 %v1271
    %1298 = vmatprep.subr.bf16.mxu0 %v1270
    %1299 = vmatpush1.bf16.msra.mxu0 %v1269
    %1300 = vmatprep.subr.bf16.mxu0 %v1268
    %1301 = vmatpush1.bf16.msra.mxu0 %v1267
    %1302 = vmatprep.subr.bf16.mxu0 0
    %1303 = vmatpush2.bf16.msra.mxu0 0
    %1304 = vmatprep.subr.bf16.mxu0 0
    %1305 = vmatpush2.bf16.msra.mxu0 0
    %1306 = vmatprep.subr.bf16.mxu0 0
    %1307 = vmatpush2.bf16.msra.mxu0 0
    %1308 = vmatprep.subr.bf16.mxu0 0
    %1309 = vmatpush2.bf16.msra.mxu0 0
    %1310 = vmatprep.subr.bf16.mxu0 0
    %1311 = vmatpush2.bf16.msra.mxu0 0
    %1312 = vmatprep.subr.bf16.mxu0 0
    %1313 = vmatpush2.bf16.msra.mxu0 0
    %1314 = vmatprep.subr.bf16.mxu0 0
    %1315 = vmatpush2.bf16.msra.mxu0 0
    %1316 = vmatprep.subr.bf16.mxu0 0
    %1317 = vmatpush2.bf16.msra.mxu0 0
    %1318 = vmatprep.mubr.bf16.mxu0 0
    %1319 = vmatmul.mubr.bf16.gmra.mxu0 %v1284
    %v1320 = vpop.f32.mrf.mxu0
    %v1321 = vadd.f32 0.0, %v1320
    %v1322 = vpop.f32.mrf.mxu0
    %v1323 = vadd.f32 0.0, %v1322
    %v1324 = vpop.f32.mrf.mxu0
    %v1325 = vadd.f32 0.0, %v1324
    %v1326 = vpop.f32.mrf.mxu0
    %v1327 = vadd.f32 0.0, %v1326
    %1328 = vdwg.mxu0
    %v1329 = vxor.u32 %v1321, 2147483648
    %v1330 = vxor.u32 %v1325, 2147483648
    %v1331 = vmul.f32 %v1329, 1.442695
    %v1332 = vpow.pop %v1331
    %v1333 = vmul.f32 %v1330, 1.442695
    %v1334 = vpow.pop %v1333
    %v1335 = vadd.f32 %v1332, 1.0
    %v1336 = vadd.f32 %v1334, 1.0
    %v1337 = vrcp.pop %v1335
    %v1338 = vmul.f32 1.0, %v1337
    %v1339 = vrcp.pop %v1336
    %v1340 = vmul.f32 1.0, %v1339
    %v1341 = vmul.f32 %v1321, %v1338
    %v1342 = vmul.f32 %v1325, %v1340
    %v1343 = vmul.f32 %v1341, %v1323
    %v1344 = vmul.f32 %v1342, %v1327
    %v1345 = vpack.c.bf16 %v1344, %v1343
    %v1346 = vld [vmem:[%s9] sm:$0xf]
    %v1347 = vld [vmem:[%s9 + $0x4] sm:$0xf]
    %v1348 = vld [vmem:[%s9 + $0x8] sm:$0xf]
    %v1349 = vld [vmem:[%s9 + $0xc] sm:$0xf]
    %v1350 = vld [vmem:[%s9 + $0x10] sm:$0xf]
    %v1351 = vld [vmem:[%s9 + $0x14] sm:$0xf]
    %v1352 = vld [vmem:[%s9 + $0x18] sm:$0xf]
    %v1353 = vld [vmem:[%s9 + $0x1c] sm:$0xf]
    %v1354 = vld [vmem:[%s9 + $0x20] sm:$0xf]
    %v1355 = vld [vmem:[%s9 + $0x24] sm:$0xf]
    %v1356 = vld [vmem:[%s9 + $0x28] sm:$0xf]
    %v1357 = vld [vmem:[%s9 + $0x2c] sm:$0xf]
    %v1358 = vld [vmem:[%s9 + $0x30] sm:$0xf]
    %v1359 = vld [vmem:[%s9 + $0x34] sm:$0xf]
    %v1360 = vld [vmem:[%s9 + $0x38] sm:$0xf]
    %v1361 = vld [vmem:[%s9 + $0x3c] sm:$0xf]
    %v1378 = vunpack.c.l.b16 %v1346
    %v1379 = vunpack.c.l.b16 %v1347
    %v1380 = vunpack.c.l.b16 %v1348
    %v1381 = vunpack.c.l.b16 %v1349
    %v1382 = vunpack.c.l.b16 %v1350
    %v1383 = vunpack.c.l.b16 %v1351
    %v1384 = vunpack.c.l.b16 %v1352
    %v1385 = vunpack.c.l.b16 %v1353
    %v1386 = vunpack.c.l.b16 %v1354
    %v1387 = vunpack.c.l.b16 %v1355
    %v1388 = vunpack.c.l.b16 %v1356
    %v1389 = vunpack.c.l.b16 %v1357
    %v1390 = vunpack.c.l.b16 %v1358
    %v1391 = vunpack.c.l.b16 %v1359
    %v1392 = vunpack.c.l.b16 %v1360
    %v1393 = vunpack.c.l.b16 %v1361
    %v1394 = vpack.c.b16 %v1379, %v1378
    %v1395 = vpack.c.b16 %v1381, %v1380
    %v1396 = vpack.c.b16 %v1383, %v1382
    %v1397 = vpack.c.b16 %v1385, %v1384
    %v1398 = vpack.c.b16 %v1387, %v1386
    %v1399 = vpack.c.b16 %v1389, %v1388
    %v1400 = vpack.c.b16 %v1391, %v1390
    %v1401 = vpack.c.b16 %v1393, %v1392
    %1410 = vmatprep.subr.bf16.mxu0 0
    %1411 = vmatpush1.bf16.msra.mxu0 %v1401
    %1412 = vmatprep.subr.bf16.mxu0 0
    %1413 = vmatpush1.bf16.msra.mxu0 %v1400
    %1414 = vmatprep.subr.bf16.mxu0 0
    %1415 = vmatpush1.bf16.msra.mxu0 %v1399
    %1416 = vmatprep.subr.bf16.mxu0 0
    %1417 = vmatpush1.bf16.msra.mxu0 %v1398
    %1418 = vmatprep.subr.bf16.mxu0 0
    %1419 = vmatpush1.bf16.msra.mxu0 %v1397
    %1420 = vmatprep.subr.bf16.mxu0 0
    %1421 = vmatpush1.bf16.msra.mxu0 %v1396
    %1422 = vmatprep.subr.bf16.mxu0 0
    %1423 = vmatpush1.bf16.msra.mxu0 %v1395
    %1424 = vmatprep.subr.bf16.mxu0 0
    %1425 = vmatpush1.bf16.msra.mxu0 %v1394
    %1426 = vmatprep.subr.bf16.mxu0 0
    %1427 = vmatpush2.bf16.msra.mxu0 0
    %1428 = vmatprep.subr.bf16.mxu0 0
    %1429 = vmatpush2.bf16.msra.mxu0 0
    %1430 = vmatprep.subr.bf16.mxu0 0
    %1431 = vmatpush2.bf16.msra.mxu0 0
    %1432 = vmatprep.subr.bf16.mxu0 0
    %1433 = vmatpush2.bf16.msra.mxu0 0
    %1434 = vmatprep.subr.bf16.mxu0 0
    %1435 = vmatpush2.bf16.msra.mxu0 0
    %1436 = vmatprep.subr.bf16.mxu0 0
    %1437 = vmatpush2.bf16.msra.mxu0 0
    %1438 = vmatprep.subr.bf16.mxu0 0
    %1439 = vmatpush2.bf16.msra.mxu0 0
    %1440 = vmatprep.subr.bf16.mxu0 0
    %1441 = vmatpush2.bf16.msra.mxu0 0
    %1442 = vmatprep.mubr.bf16.mxu0 0
    %1443 = vmatmul.mubr.bf16.gmra.mxu0 %v1345
    %v1444 = vpop.f32.mrf.mxu0
    %v1445 = vadd.f32 0.0, %v1444
    %v1446 = vpop.f32.mrf.mxu0
    %v1447 = vpop.f32.mrf.mxu0
    %v1448 = vadd.f32 0.0, %v1447
    %v1449 = vpop.f32.mrf.mxu0
    %1450 = vdwg.mxu0
    %v1451 = vadd.f32 %v1207, %v1445
    %v1452 = vadd.f32 %v1208, %v1448
    %v1453 = vmul.f32 %v1451, %v1451
    %v1454 = vmul.f32 %v1452, %v1452
    %v1455 = vsel %vm54, %v1453, 0.0
    %1456 = vadd.xlane.f32.xlu0 %v1455
    %v1457 = vpop.xlane.xlu0 %1456
    %v1458 = vsel %vm54, %v1454, 0.0
    %1459 = vadd.xlane.f32.xlu0 %v1458
    %v1460 = vpop.xlane.xlu0 %1459
    %v1461 = vmul.f32 %v1457, %v61
    %v1462 = vmul.f32 %v1460, %v61
    %v1463 = vadd.f32 %v1461, 1e-06
    %v1464 = vadd.f32 %v1462, 1e-06
    %v1465 = vrsqrt.pop %v1463
    %v1466 = vrsqrt.pop %v1464
    %v1467 = vmul.f32 %v1451, %v1465
    %v1468 = vmul.f32 %v1452, %v1466
    %s1469 = scalar_lea.vmem %s6, 1
    %v1470 = vld [vmem:[%s1469] sm:$0x1]
    %v1472 = vlaneseq
    %v1473 = vshrl.u32 %v1472, 7
    %v1474 = vsub.s32 0, %v1473
    %v1475 = vrot.slane %v1470, %v1474
    %v1477 = vmul.f32 %v1467, %v1475
    %v1478 = vmul.f32 %v1468, %v1475
    %v1479 = vpack.c.bf16 %v1478, %v1477
    %s1480 = scalar_lea.vmem %s3, 32
    %v1481 = vld [vmem:[%s1480] sm:$0xf]
    %v1482 = vld [vmem:[%s1480 + $0x4] sm:$0xf]
    %v1483 = vld [vmem:[%s1480 + $0x8] sm:$0xf]
    %v1484 = vld [vmem:[%s1480 + $0xc] sm:$0xf]
    %v1485 = vld [vmem:[%s1480 + $0x10] sm:$0xf]
    %v1486 = vld [vmem:[%s1480 + $0x14] sm:$0xf]
    %v1487 = vld [vmem:[%s1480 + $0x18] sm:$0xf]
    %v1488 = vld [vmem:[%s1480 + $0x1c] sm:$0xf]
    %v1497 = vunpack.c.l.b16 %v1481
    %v1498 = vunpack.c.l.b16 %v1482
    %v1499 = vunpack.c.l.b16 %v1483
    %v1500 = vunpack.c.l.b16 %v1484
    %v1501 = vunpack.c.l.b16 %v1485
    %v1502 = vunpack.c.l.b16 %v1486
    %v1503 = vunpack.c.l.b16 %v1487
    %v1504 = vunpack.c.l.b16 %v1488
    %v1505 = vpack.c.b16 %v1498, %v1497
    %v1506 = vpack.c.b16 %v1500, %v1499
    %v1507 = vpack.c.b16 %v1502, %v1501
    %v1508 = vpack.c.b16 %v1504, %v1503
    %v1514 = vsel %vm54, %v1479, 0
    %1516 = vmatprep.subr.bf16.mxu0 0
    %1517 = vmatpush1.bf16.msra.mxu0 0
    %1518 = vmatprep.subr.bf16.mxu0 0
    %1519 = vmatpush1.bf16.msra.mxu0 0
    %1520 = vmatprep.subr.bf16.mxu0 0
    %1521 = vmatpush1.bf16.msra.mxu0 0
    %1522 = vmatprep.subr.bf16.mxu0 0
    %1523 = vmatpush1.bf16.msra.mxu0 0
    %1524 = vmatprep.subr.bf16.mxu0 0
    %1525 = vmatpush1.bf16.msra.mxu0 %v1508
    %1526 = vmatprep.subr.bf16.mxu0 0
    %1527 = vmatpush1.bf16.msra.mxu0 %v1507
    %1528 = vmatprep.subr.bf16.mxu0 0
    %1529 = vmatpush1.bf16.msra.mxu0 %v1506
    %1530 = vmatprep.subr.bf16.mxu0 0
    %1531 = vmatpush1.bf16.msra.mxu0 %v1505
    %1532 = vmatprep.subr.bf16.mxu0 0
    %1533 = vmatpush2.bf16.msra.mxu0 0
    %1534 = vmatprep.subr.bf16.mxu0 0
    %1535 = vmatpush2.bf16.msra.mxu0 0
    %1536 = vmatprep.subr.bf16.mxu0 0
    %1537 = vmatpush2.bf16.msra.mxu0 0
    %1538 = vmatprep.subr.bf16.mxu0 0
    %1539 = vmatpush2.bf16.msra.mxu0 0
    %1540 = vmatprep.subr.bf16.mxu0 0
    %1541 = vmatpush2.bf16.msra.mxu0 0
    %1542 = vmatprep.subr.bf16.mxu0 0
    %1543 = vmatpush2.bf16.msra.mxu0 0
    %1544 = vmatprep.subr.bf16.mxu0 0
    %1545 = vmatpush2.bf16.msra.mxu0 0
    %1546 = vmatprep.subr.bf16.mxu0 0
    %1547 = vmatpush2.bf16.msra.mxu0 0
    %1548 = vmatprep.mubr.bf16.mxu0 0
    %1549 = vmatmul.mubr.bf16.gmra.mxu0 %v1514
    %v1550 = vpop.f32.mrf.mxu0
    %v1551 = vadd.f32 0.0, %v1550
    %v1552 = vpop.f32.mrf.mxu0
    %v1553 = vpop.f32.mrf.mxu0
    %v1554 = vadd.f32 0.0, %v1553
    %v1555 = vpop.f32.mrf.mxu0
    %1556 = vdwg.mxu0
    %s1557 = scalar_lea.vmem %s4, 32
    %v1558 = vld [vmem:[%s1557] sm:$0xf]
    %v1559 = vld [vmem:[%s1557 + $0x4] sm:$0xf]
    %v1560 = vld [vmem:[%s1557 + $0x8] sm:$0xf]
    %v1561 = vld [vmem:[%s1557 + $0xc] sm:$0xf]
    %v1562 = vld [vmem:[%s1557 + $0x10] sm:$0xf]
    %v1563 = vld [vmem:[%s1557 + $0x14] sm:$0xf]
    %v1564 = vld [vmem:[%s1557 + $0x18] sm:$0xf]
    %v1565 = vld [vmem:[%s1557 + $0x1c] sm:$0xf]
    %v1574 = vunpack.c.l.b16 %v1558
    %v1575 = vunpack.c.l.b16 %v1559
    %v1576 = vunpack.c.l.b16 %v1560
    %v1577 = vunpack.c.l.b16 %v1561
    %v1578 = vunpack.c.l.b16 %v1562
    %v1579 = vunpack.c.l.b16 %v1563
    %v1580 = vunpack.c.l.b16 %v1564
    %v1581 = vunpack.c.l.b16 %v1565
    %v1582 = vpack.c.b16 %v1575, %v1574
    %v1583 = vpack.c.b16 %v1577, %v1576
    %v1584 = vpack.c.b16 %v1579, %v1578
    %v1585 = vpack.c.b16 %v1581, %v1580
    %1590 = vmatprep.subr.bf16.mxu0 0
    %1591 = vmatpush1.bf16.msra.mxu0 0
    %1592 = vmatprep.subr.bf16.mxu0 0
    %1593 = vmatpush1.bf16.msra.mxu0 0
    %1594 = vmatprep.subr.bf16.mxu0 0
    %1595 = vmatpush1.bf16.msra.mxu0 0
    %1596 = vmatprep.subr.bf16.mxu0 0
    %1597 = vmatpush1.bf16.msra.mxu0 0
    %1598 = vmatprep.subr.bf16.mxu0 0
    %1599 = vmatpush1.bf16.msra.mxu0 %v1585
    %1600 = vmatprep.subr.bf16.mxu0 0
    %1601 = vmatpush1.bf16.msra.mxu0 %v1584
    %1602 = vmatprep.subr.bf16.mxu0 0
    %1603 = vmatpush1.bf16.msra.mxu0 %v1583
    %1604 = vmatprep.subr.bf16.mxu0 0
    %1605 = vmatpush1.bf16.msra.mxu0 %v1582
    %1606 = vmatprep.subr.bf16.mxu0 0
    %1607 = vmatpush2.bf16.msra.mxu0 0
    %1608 = vmatprep.subr.bf16.mxu0 0
    %1609 = vmatpush2.bf16.msra.mxu0 0
    %1610 = vmatprep.subr.bf16.mxu0 0
    %1611 = vmatpush2.bf16.msra.mxu0 0
    %1612 = vmatprep.subr.bf16.mxu0 0
    %1613 = vmatpush2.bf16.msra.mxu0 0
    %1614 = vmatprep.subr.bf16.mxu0 0
    %1615 = vmatpush2.bf16.msra.mxu0 0
    %1616 = vmatprep.subr.bf16.mxu0 0
    %1617 = vmatpush2.bf16.msra.mxu0 0
    %1618 = vmatprep.subr.bf16.mxu0 0
    %1619 = vmatpush2.bf16.msra.mxu0 0
    %1620 = vmatprep.subr.bf16.mxu0 0
    %1621 = vmatpush2.bf16.msra.mxu0 0
    %1622 = vmatprep.mubr.bf16.mxu0 0
    %1623 = vmatmul.mubr.bf16.gmra.mxu0 %v1514
    %v1624 = vpop.f32.mrf.mxu0
    %v1625 = vadd.f32 0.0, %v1624
    %v1626 = vpop.f32.mrf.mxu0
    %v1627 = vpop.f32.mrf.mxu0
    %v1628 = vadd.f32 0.0, %v1627
    %v1629 = vpop.f32.mrf.mxu0
    %1630 = vdwg.mxu0
    %v1631 = vmul.f32 %v1551, %v45
    %v1632 = vmul.f32 %v1554, %v45
    %v1633 = vmul.f32 %v1625, %v46
    %v1634 = vmul.f32 %v1628, %v46
    %v1635 = vadd.f32 %v1631, %v1633
    %v1636 = vadd.f32 %v1632, %v1634
    %v1637 = vpack.c.bf16 %v1636, %v1635
    %v1639 = vunpack.c.l.b16 %v1637
    %v1640 = vunpack.c.h.b16 %v1637
    %v1641 = vpack.c.b16 %v1639, %v1639
    %v1642 = vpack.c.b16 %v1640, %v1640
    %1643 = vrot.lane.b32.xlu0 %v1641, 64
    %v1644 = vpop.permute.xlu0 %1643
    %v1646 = vsel %vm243, %v1641, 0
    %v1649 = vsel %vm243, %v1644, 0
    %1651 = vmatprep.subr.bf16.mxu0 0
    %1652 = vmatpush1.bf16.xpose.msra.mxu0 0
    %1653 = vmatprep.subr.bf16.mxu0 0
    %1654 = vmatpush1.bf16.xpose.msra.mxu0 0
    %1655 = vmatprep.subr.bf16.mxu0 0
    %1656 = vmatpush1.bf16.xpose.msra.mxu0 0
    %1657 = vmatprep.subr.bf16.mxu0 0
    %1658 = vmatpush1.bf16.xpose.msra.mxu0 0
    %1659 = vmatprep.subr.bf16.mxu0 0
    %1660 = vmatpush1.bf16.xpose.msra.mxu0 0
    %1661 = vmatprep.subr.bf16.mxu0 0
    %1662 = vmatpush1.bf16.xpose.msra.mxu0 0
    %1663 = vmatprep.subr.bf16.mxu0 0
    %1664 = vmatpush1.bf16.xpose.msra.mxu0 0
    %1665 = vmatprep.subr.bf16.mxu0 0
    %1666 = vmatpush1.bf16.xpose.msra.mxu0 %v1649
    %1667 = vmatprep.subr.bf16.mxu0 0
    %1668 = vmatpush2.bf16.xpose.msra.mxu0 0
    %1669 = vmatprep.subr.bf16.mxu0 0
    %1670 = vmatpush2.bf16.xpose.msra.mxu0 0
    %1671 = vmatprep.subr.bf16.mxu0 0
    %1672 = vmatpush2.bf16.xpose.msra.mxu0 0
    %1673 = vmatprep.subr.bf16.mxu0 0
    %1674 = vmatpush2.bf16.xpose.msra.mxu0 0
    %1675 = vmatprep.subr.bf16.mxu0 0
    %1676 = vmatpush2.bf16.xpose.msra.mxu0 0
    %1677 = vmatprep.subr.bf16.mxu0 0
    %1678 = vmatpush2.bf16.xpose.msra.mxu0 0
    %1679 = vmatprep.subr.bf16.mxu0 0
    %1680 = vmatpush2.bf16.xpose.msra.mxu0 0
    %1681 = vmatprep.subr.bf16.mxu0 0
    %1682 = vmatpush2.bf16.xpose.msra.mxu0 0
    %1683 = vmatprep.mubr.bf16.mxu0 0
    %1684 = vmatmul.mubr.bf16.gmra.mxu0 %v1646
    %v1685 = vpop.f32.mrf.mxu0
    %v1686 = vadd.f32 0.0, %v1685
    %v1687 = vpop.f32.mrf.mxu0
    %v1688 = vpop.f32.mrf.mxu0
    %v1689 = vpop.f32.mrf.mxu0
    %1690 = vdwg.mxu0
    %1691 = vrot.lane.b32.xlu0 %v1642, 64
    %v1692 = vpop.permute.xlu0 %1691
    %v1694 = vsel %vm243, %v1642, 0
    %v1697 = vsel %vm243, %v1692, 0
    %1699 = vmatprep.subr.bf16.mxu0 0
    %1700 = vmatpush1.bf16.xpose.msra.mxu0 0
    %1701 = vmatprep.subr.bf16.mxu0 0
    %1702 = vmatpush1.bf16.xpose.msra.mxu0 0
    %1703 = vmatprep.subr.bf16.mxu0 0
    %1704 = vmatpush1.bf16.xpose.msra.mxu0 0
    %1705 = vmatprep.subr.bf16.mxu0 0
    %1706 = vmatpush1.bf16.xpose.msra.mxu0 0
    %1707 = vmatprep.subr.bf16.mxu0 0
    %1708 = vmatpush1.bf16.xpose.msra.mxu0 0
    %1709 = vmatprep.subr.bf16.mxu0 0
    %1710 = vmatpush1.bf16.xpose.msra.mxu0 0
    %1711 = vmatprep.subr.bf16.mxu0 0
    %1712 = vmatpush1.bf16.xpose.msra.mxu0 0
    %1713 = vmatprep.subr.bf16.mxu0 0
    %1714 = vmatpush1.bf16.xpose.msra.mxu0 %v1697
    %1715 = vmatprep.subr.bf16.mxu0 0
    %1716 = vmatpush2.bf16.xpose.msra.mxu0 0
    %1717 = vmatprep.subr.bf16.mxu0 0
    %1718 = vmatpush2.bf16.xpose.msra.mxu0 0
    %1719 = vmatprep.subr.bf16.mxu0 0
    %1720 = vmatpush2.bf16.xpose.msra.mxu0 0
    %1721 = vmatprep.subr.bf16.mxu0 0
    %1722 = vmatpush2.bf16.xpose.msra.mxu0 0
    %1723 = vmatprep.subr.bf16.mxu0 0
    %1724 = vmatpush2.bf16.xpose.msra.mxu0 0
    %1725 = vmatprep.subr.bf16.mxu0 0
    %1726 = vmatpush2.bf16.xpose.msra.mxu0 0
    %1727 = vmatprep.subr.bf16.mxu0 0
    %1728 = vmatpush2.bf16.xpose.msra.mxu0 0
    %1729 = vmatprep.subr.bf16.mxu0 0
    %1730 = vmatpush2.bf16.xpose.msra.mxu0 0
    %1731 = vmatprep.mubr.bf16.mxu0 0
    %1732 = vmatmul.mubr.bf16.gmra.mxu0 %v1694
    %v1733 = vpop.f32.mrf.mxu0
    %v1734 = vadd.f32 0.0, %v1733
    %v1735 = vpop.f32.mrf.mxu0
    %v1736 = vpop.f32.mrf.mxu0
    %v1737 = vpop.f32.mrf.mxu0
    %1738 = vdwg.mxu0
    %v1739 = vmul.f32 %v1686, 0.25
    %v1740 = vmul.f32 %v1734, 0.25
    %v1741 = vsel %vm341, %v1739, -1e+30
    %v1742 = vsel %vm341, %v1740, -1e+30
    %v1743 = vsel %vm344, %v1741, -inf
    %1744 = vmax.xlane.f32.xlu0 %v1743
    %v1745 = vpop.xlane.xlu0 %1744
    %v1746 = vsel %vm344, %v1742, -inf
    %1747 = vmax.xlane.f32.xlu0 %v1746
    %v1748 = vpop.xlane.xlu0 %1747
    %v1749 = vsub.f32 %v1741, %v1745
    %v1750 = vsub.f32 %v1742, %v1748
    %v1751 = vmul.f32 %v1749, 1.442695
    %v1752 = vpow.pop %v1751
    %v1753 = vmul.f32 %v1750, 1.442695
    %v1754 = vpow.pop %v1753
    %v1755 = vsel %vm344, %v1752, 0.0
    %1756 = vadd.xlane.f32.xlu0 %v1755
    %v1757 = vpop.xlane.xlu0 %1756
    %v1758 = vsel %vm344, %v1754, 0.0
    %1759 = vadd.xlane.f32.xlu0 %v1758
    %v1760 = vpop.xlane.xlu0 %1759
    %v1761 = vrcp.pop %v1757
    %v1762 = vmul.f32 %v1752, %v1761
    %v1763 = vrcp.pop %v1760
    %v1764 = vmul.f32 %v1754, %v1763
    %v1765 = vpack.c.bf16 %v1762, %v1762
    %v1766 = vpack.c.bf16 %v1764, %v1764
    %1767 = vrot.lane.b32.xlu0 %v1641, 32
    %v1768 = vpop.permute.xlu0 %1767
    %v1770 = vsel %vm344, %v1765, 0
    %v1773 = vsel %vm374, %v1768, 0
    %1775 = vmatprep.subr.bf16.mxu0 0
    %1776 = vmatpush1.bf16.msra.mxu0 0
    %1777 = vmatprep.subr.bf16.mxu0 0
    %1778 = vmatpush1.bf16.msra.mxu0 0
    %1779 = vmatprep.subr.bf16.mxu0 0
    %1780 = vmatpush1.bf16.msra.mxu0 0
    %1781 = vmatprep.subr.bf16.mxu0 0
    %1782 = vmatpush1.bf16.msra.mxu0 0
    %1783 = vmatprep.subr.bf16.mxu0 0
    %1784 = vmatpush1.bf16.msra.mxu0 0
    %1785 = vmatprep.subr.bf16.mxu0 0
    %1786 = vmatpush1.bf16.msra.mxu0 0
    %1787 = vmatprep.subr.bf16.mxu0 0
    %1788 = vmatpush1.bf16.msra.mxu0 0
    %1789 = vmatprep.subr.bf16.mxu0 0
    %1790 = vmatpush1.bf16.msra.mxu0 %v1773
    %1791 = vmatprep.subr.bf16.mxu0 0
    %1792 = vmatpush2.bf16.msra.mxu0 0
    %1793 = vmatprep.subr.bf16.mxu0 0
    %1794 = vmatpush2.bf16.msra.mxu0 0
    %1795 = vmatprep.subr.bf16.mxu0 0
    %1796 = vmatpush2.bf16.msra.mxu0 0
    %1797 = vmatprep.subr.bf16.mxu0 0
    %1798 = vmatpush2.bf16.msra.mxu0 0
    %1799 = vmatprep.subr.bf16.mxu0 0
    %1800 = vmatpush2.bf16.msra.mxu0 0
    %1801 = vmatprep.subr.bf16.mxu0 0
    %1802 = vmatpush2.bf16.msra.mxu0 0
    %1803 = vmatprep.subr.bf16.mxu0 0
    %1804 = vmatpush2.bf16.msra.mxu0 0
    %1805 = vmatprep.subr.bf16.mxu0 0
    %1806 = vmatpush2.bf16.msra.mxu0 0
    %1807 = vmatprep.mubr.bf16.mxu0 0
    %1808 = vmatmul.mubr.bf16.gmra.mxu0 %v1770
    %v1809 = vpop.f32.mrf.mxu0
    %v1810 = vadd.f32 0.0, %v1809
    %v1811 = vpop.f32.mrf.mxu0
    %v1812 = vpop.f32.mrf.mxu0
    %v1813 = vpop.f32.mrf.mxu0
    %1814 = vdwg.mxu0
    %1815 = vrot.lane.b32.xlu0 %v1642, 32
    %v1816 = vpop.permute.xlu0 %1815
    %v1818 = vsel %vm344, %v1766, 0
    %v1821 = vsel %vm374, %v1816, 0
    %1823 = vmatprep.subr.bf16.mxu0 0
    %1824 = vmatpush1.bf16.msra.mxu0 0
    %1825 = vmatprep.subr.bf16.mxu0 0
    %1826 = vmatpush1.bf16.msra.mxu0 0
    %1827 = vmatprep.subr.bf16.mxu0 0
    %1828 = vmatpush1.bf16.msra.mxu0 0
    %1829 = vmatprep.subr.bf16.mxu0 0
    %1830 = vmatpush1.bf16.msra.mxu0 0
    %1831 = vmatprep.subr.bf16.mxu0 0
    %1832 = vmatpush1.bf16.msra.mxu0 0
    %1833 = vmatprep.subr.bf16.mxu0 0
    %1834 = vmatpush1.bf16.msra.mxu0 0
    %1835 = vmatprep.subr.bf16.mxu0 0
    %1836 = vmatpush1.bf16.msra.mxu0 0
    %1837 = vmatprep.subr.bf16.mxu0 0
    %1838 = vmatpush1.bf16.msra.mxu0 %v1821
    %1839 = vmatprep.subr.bf16.mxu0 0
    %1840 = vmatpush2.bf16.msra.mxu0 0
    %1841 = vmatprep.subr.bf16.mxu0 0
    %1842 = vmatpush2.bf16.msra.mxu0 0
    %1843 = vmatprep.subr.bf16.mxu0 0
    %1844 = vmatpush2.bf16.msra.mxu0 0
    %1845 = vmatprep.subr.bf16.mxu0 0
    %1846 = vmatpush2.bf16.msra.mxu0 0
    %1847 = vmatprep.subr.bf16.mxu0 0
    %1848 = vmatpush2.bf16.msra.mxu0 0
    %1849 = vmatprep.subr.bf16.mxu0 0
    %1850 = vmatpush2.bf16.msra.mxu0 0
    %1851 = vmatprep.subr.bf16.mxu0 0
    %1852 = vmatpush2.bf16.msra.mxu0 0
    %1853 = vmatprep.subr.bf16.mxu0 0
    %1854 = vmatpush2.bf16.msra.mxu0 0
    %1855 = vmatprep.mubr.bf16.mxu0 0
    %1856 = vmatmul.mubr.bf16.gmra.mxu0 %v1818
    %v1857 = vpop.f32.mrf.mxu0
    %v1858 = vadd.f32 0.0, %v1857
    %v1859 = vpop.f32.mrf.mxu0
    %v1860 = vpop.f32.mrf.mxu0
    %v1861 = vpop.f32.mrf.mxu0
    %1862 = vdwg.mxu0
    %1863 = vrot.lane.b32.xlu0 %v1641, 112
    %v1864 = vpop.permute.xlu0 %1863
    %v1866 = vsel %vm243, %v1864, 0
    %1868 = vmatprep.subr.bf16.mxu0 0
    %1869 = vmatpush1.bf16.xpose.msra.mxu0 0
    %1870 = vmatprep.subr.bf16.mxu0 0
    %1871 = vmatpush1.bf16.xpose.msra.mxu0 0
    %1872 = vmatprep.subr.bf16.mxu0 0
    %1873 = vmatpush1.bf16.xpose.msra.mxu0 0
    %1874 = vmatprep.subr.bf16.mxu0 0
    %1875 = vmatpush1.bf16.xpose.msra.mxu0 0
    %1876 = vmatprep.subr.bf16.mxu0 0
    %1877 = vmatpush1.bf16.xpose.msra.mxu0 0
    %1878 = vmatprep.subr.bf16.mxu0 0
    %1879 = vmatpush1.bf16.xpose.msra.mxu0 0
    %1880 = vmatprep.subr.bf16.mxu0 0
    %1881 = vmatpush1.bf16.xpose.msra.mxu0 0
    %1882 = vmatprep.subr.bf16.mxu0 0
    %1883 = vmatpush1.bf16.xpose.msra.mxu0 %v1649
    %1884 = vmatprep.subr.bf16.mxu0 0
    %1885 = vmatpush2.bf16.xpose.msra.mxu0 0
    %1886 = vmatprep.subr.bf16.mxu0 0
    %1887 = vmatpush2.bf16.xpose.msra.mxu0 0
    %1888 = vmatprep.subr.bf16.mxu0 0
    %1889 = vmatpush2.bf16.xpose.msra.mxu0 0
    %1890 = vmatprep.subr.bf16.mxu0 0
    %1891 = vmatpush2.bf16.xpose.msra.mxu0 0
    %1892 = vmatprep.subr.bf16.mxu0 0
    %1893 = vmatpush2.bf16.xpose.msra.mxu0 0
    %1894 = vmatprep.subr.bf16.mxu0 0
    %1895 = vmatpush2.bf16.xpose.msra.mxu0 0
    %1896 = vmatprep.subr.bf16.mxu0 0
    %1897 = vmatpush2.bf16.xpose.msra.mxu0 0
    %1898 = vmatprep.subr.bf16.mxu0 0
    %1899 = vmatpush2.bf16.xpose.msra.mxu0 0
    %1900 = vmatprep.mubr.bf16.mxu0 0
    %1901 = vmatmul.mubr.bf16.gmra.mxu0 %v1866
    %v1902 = vpop.f32.mrf.mxu0
    %v1903 = vadd.f32 0.0, %v1902
    %v1904 = vpop.f32.mrf.mxu0
    %v1905 = vpop.f32.mrf.mxu0
    %v1906 = vpop.f32.mrf.mxu0
    %1907 = vdwg.mxu0
    %1908 = vrot.lane.b32.xlu0 %v1642, 112
    %v1909 = vpop.permute.xlu0 %1908
    %v1911 = vsel %vm243, %v1909, 0
    %1913 = vmatprep.subr.bf16.mxu0 0
    %1914 = vmatpush1.bf16.xpose.msra.mxu0 0
    %1915 = vmatprep.subr.bf16.mxu0 0
    %1916 = vmatpush1.bf16.xpose.msra.mxu0 0
    %1917 = vmatprep.subr.bf16.mxu0 0
    %1918 = vmatpush1.bf16.xpose.msra.mxu0 0
    %1919 = vmatprep.subr.bf16.mxu0 0
    %1920 = vmatpush1.bf16.xpose.msra.mxu0 0
    %1921 = vmatprep.subr.bf16.mxu0 0
    %1922 = vmatpush1.bf16.xpose.msra.mxu0 0
    %1923 = vmatprep.subr.bf16.mxu0 0
    %1924 = vmatpush1.bf16.xpose.msra.mxu0 0
    %1925 = vmatprep.subr.bf16.mxu0 0
    %1926 = vmatpush1.bf16.xpose.msra.mxu0 0
    %1927 = vmatprep.subr.bf16.mxu0 0
    %1928 = vmatpush1.bf16.xpose.msra.mxu0 %v1697
    %1929 = vmatprep.subr.bf16.mxu0 0
    %1930 = vmatpush2.bf16.xpose.msra.mxu0 0
    %1931 = vmatprep.subr.bf16.mxu0 0
    %1932 = vmatpush2.bf16.xpose.msra.mxu0 0
    %1933 = vmatprep.subr.bf16.mxu0 0
    %1934 = vmatpush2.bf16.xpose.msra.mxu0 0
    %1935 = vmatprep.subr.bf16.mxu0 0
    %1936 = vmatpush2.bf16.xpose.msra.mxu0 0
    %1937 = vmatprep.subr.bf16.mxu0 0
    %1938 = vmatpush2.bf16.xpose.msra.mxu0 0
    %1939 = vmatprep.subr.bf16.mxu0 0
    %1940 = vmatpush2.bf16.xpose.msra.mxu0 0
    %1941 = vmatprep.subr.bf16.mxu0 0
    %1942 = vmatpush2.bf16.xpose.msra.mxu0 0
    %1943 = vmatprep.subr.bf16.mxu0 0
    %1944 = vmatpush2.bf16.xpose.msra.mxu0 0
    %1945 = vmatprep.mubr.bf16.mxu0 0
    %1946 = vmatmul.mubr.bf16.gmra.mxu0 %v1911
    %v1947 = vpop.f32.mrf.mxu0
    %v1948 = vadd.f32 0.0, %v1947
    %v1949 = vpop.f32.mrf.mxu0
    %v1950 = vpop.f32.mrf.mxu0
    %v1951 = vpop.f32.mrf.mxu0
    %1952 = vdwg.mxu0
    %v1953 = vmul.f32 %v1903, 0.25
    %v1954 = vmul.f32 %v1948, 0.25
    %v1955 = vsel %vm341, %v1953, -1e+30
    %v1956 = vsel %vm341, %v1954, -1e+30
    %v1957 = vsel %vm344, %v1955, -inf
    %1958 = vmax.xlane.f32.xlu0 %v1957
    %v1959 = vpop.xlane.xlu0 %1958
    %v1960 = vsel %vm344, %v1956, -inf
    %1961 = vmax.xlane.f32.xlu0 %v1960
    %v1962 = vpop.xlane.xlu0 %1961
    %v1963 = vsub.f32 %v1955, %v1959
    %v1964 = vsub.f32 %v1956, %v1962
    %v1965 = vmul.f32 %v1963, 1.442695
    %v1966 = vpow.pop %v1965
    %v1967 = vmul.f32 %v1964, 1.442695
    %v1968 = vpow.pop %v1967
    %v1969 = vsel %vm344, %v1966, 0.0
    %1970 = vadd.xlane.f32.xlu0 %v1969
    %v1971 = vpop.xlane.xlu0 %1970
    %v1972 = vsel %vm344, %v1968, 0.0
    %1973 = vadd.xlane.f32.xlu0 %v1972
    %v1974 = vpop.xlane.xlu0 %1973
    %v1975 = vrcp.pop %v1971
    %v1976 = vmul.f32 %v1966, %v1975
    %v1977 = vrcp.pop %v1974
    %v1978 = vmul.f32 %v1968, %v1977
    %v1979 = vpack.c.bf16 %v1976, %v1976
    %v1980 = vpack.c.bf16 %v1978, %v1978
    %v1982 = vsel %vm344, %v1979, 0
    %1984 = vmatprep.subr.bf16.mxu0 0
    %1985 = vmatpush1.bf16.msra.mxu0 0
    %1986 = vmatprep.subr.bf16.mxu0 0
    %1987 = vmatpush1.bf16.msra.mxu0 0
    %1988 = vmatprep.subr.bf16.mxu0 0
    %1989 = vmatpush1.bf16.msra.mxu0 0
    %1990 = vmatprep.subr.bf16.mxu0 0
    %1991 = vmatpush1.bf16.msra.mxu0 0
    %1992 = vmatprep.subr.bf16.mxu0 0
    %1993 = vmatpush1.bf16.msra.mxu0 0
    %1994 = vmatprep.subr.bf16.mxu0 0
    %1995 = vmatpush1.bf16.msra.mxu0 0
    %1996 = vmatprep.subr.bf16.mxu0 0
    %1997 = vmatpush1.bf16.msra.mxu0 0
    %1998 = vmatprep.subr.bf16.mxu0 0
    %1999 = vmatpush1.bf16.msra.mxu0 %v1773
    %2000 = vmatprep.subr.bf16.mxu0 0
    %2001 = vmatpush2.bf16.msra.mxu0 0
    %2002 = vmatprep.subr.bf16.mxu0 0
    %2003 = vmatpush2.bf16.msra.mxu0 0
    %2004 = vmatprep.subr.bf16.mxu0 0
    %2005 = vmatpush2.bf16.msra.mxu0 0
    %2006 = vmatprep.subr.bf16.mxu0 0
    %2007 = vmatpush2.bf16.msra.mxu0 0
    %2008 = vmatprep.subr.bf16.mxu0 0
    %2009 = vmatpush2.bf16.msra.mxu0 0
    %2010 = vmatprep.subr.bf16.mxu0 0
    %2011 = vmatpush2.bf16.msra.mxu0 0
    %2012 = vmatprep.subr.bf16.mxu0 0
    %2013 = vmatpush2.bf16.msra.mxu0 0
    %2014 = vmatprep.subr.bf16.mxu0 0
    %2015 = vmatpush2.bf16.msra.mxu0 0
    %2016 = vmatprep.mubr.bf16.mxu0 0
    %2017 = vmatmul.mubr.bf16.gmra.mxu0 %v1982
    %v2018 = vpop.f32.mrf.mxu0
    %v2019 = vadd.f32 0.0, %v2018
    %v2020 = vpop.f32.mrf.mxu0
    %v2021 = vpop.f32.mrf.mxu0
    %v2022 = vpop.f32.mrf.mxu0
    %2023 = vdwg.mxu0
    %v2025 = vsel %vm344, %v1980, 0
    %2027 = vmatprep.subr.bf16.mxu0 0
    %2028 = vmatpush1.bf16.msra.mxu0 0
    %2029 = vmatprep.subr.bf16.mxu0 0
    %2030 = vmatpush1.bf16.msra.mxu0 0
    %2031 = vmatprep.subr.bf16.mxu0 0
    %2032 = vmatpush1.bf16.msra.mxu0 0
    %2033 = vmatprep.subr.bf16.mxu0 0
    %2034 = vmatpush1.bf16.msra.mxu0 0
    %2035 = vmatprep.subr.bf16.mxu0 0
    %2036 = vmatpush1.bf16.msra.mxu0 0
    %2037 = vmatprep.subr.bf16.mxu0 0
    %2038 = vmatpush1.bf16.msra.mxu0 0
    %2039 = vmatprep.subr.bf16.mxu0 0
    %2040 = vmatpush1.bf16.msra.mxu0 0
    %2041 = vmatprep.subr.bf16.mxu0 0
    %2042 = vmatpush1.bf16.msra.mxu0 %v1821
    %2043 = vmatprep.subr.bf16.mxu0 0
    %2044 = vmatpush2.bf16.msra.mxu0 0
    %2045 = vmatprep.subr.bf16.mxu0 0
    %2046 = vmatpush2.bf16.msra.mxu0 0
    %2047 = vmatprep.subr.bf16.mxu0 0
    %2048 = vmatpush2.bf16.msra.mxu0 0
    %2049 = vmatprep.subr.bf16.mxu0 0
    %2050 = vmatpush2.bf16.msra.mxu0 0
    %2051 = vmatprep.subr.bf16.mxu0 0
    %2052 = vmatpush2.bf16.msra.mxu0 0
    %2053 = vmatprep.subr.bf16.mxu0 0
    %2054 = vmatpush2.bf16.msra.mxu0 0
    %2055 = vmatprep.subr.bf16.mxu0 0
    %2056 = vmatpush2.bf16.msra.mxu0 0
    %2057 = vmatprep.subr.bf16.mxu0 0
    %2058 = vmatpush2.bf16.msra.mxu0 0
    %2059 = vmatprep.mubr.bf16.mxu0 0
    %2060 = vmatmul.mubr.bf16.gmra.mxu0 %v2025
    %v2061 = vpop.f32.mrf.mxu0
    %v2062 = vadd.f32 0.0, %v2061
    %v2063 = vpop.f32.mrf.mxu0
    %v2064 = vpop.f32.mrf.mxu0
    %v2065 = vpop.f32.mrf.mxu0
    %2066 = vdwg.mxu0
    %2067 = vrot.lane.b32.xlu0 %v1641, 96
    %v2068 = vpop.permute.xlu0 %2067
    %2069 = vrot.lane.b32.xlu0 %v1641, 48
    %v2070 = vpop.permute.xlu0 %2069
    %v2072 = vsel %vm243, %v2068, 0
    %v2075 = vsel %vm243, %v2070, 0
    %2077 = vmatprep.subr.bf16.mxu0 0
    %2078 = vmatpush1.bf16.xpose.msra.mxu0 0
    %2079 = vmatprep.subr.bf16.mxu0 0
    %2080 = vmatpush1.bf16.xpose.msra.mxu0 0
    %2081 = vmatprep.subr.bf16.mxu0 0
    %2082 = vmatpush1.bf16.xpose.msra.mxu0 0
    %2083 = vmatprep.subr.bf16.mxu0 0
    %2084 = vmatpush1.bf16.xpose.msra.mxu0 0
    %2085 = vmatprep.subr.bf16.mxu0 0
    %2086 = vmatpush1.bf16.xpose.msra.mxu0 0
    %2087 = vmatprep.subr.bf16.mxu0 0
    %2088 = vmatpush1.bf16.xpose.msra.mxu0 0
    %2089 = vmatprep.subr.bf16.mxu0 0
    %2090 = vmatpush1.bf16.xpose.msra.mxu0 0
    %2091 = vmatprep.subr.bf16.mxu0 0
    %2092 = vmatpush1.bf16.xpose.msra.mxu0 %v2075
    %2093 = vmatprep.subr.bf16.mxu0 0
    %2094 = vmatpush2.bf16.xpose.msra.mxu0 0
    %2095 = vmatprep.subr.bf16.mxu0 0
    %2096 = vmatpush2.bf16.xpose.msra.mxu0 0
    %2097 = vmatprep.subr.bf16.mxu0 0
    %2098 = vmatpush2.bf16.xpose.msra.mxu0 0
    %2099 = vmatprep.subr.bf16.mxu0 0
    %2100 = vmatpush2.bf16.xpose.msra.mxu0 0
    %2101 = vmatprep.subr.bf16.mxu0 0
    %2102 = vmatpush2.bf16.xpose.msra.mxu0 0
    %2103 = vmatprep.subr.bf16.mxu0 0
    %2104 = vmatpush2.bf16.xpose.msra.mxu0 0
    %2105 = vmatprep.subr.bf16.mxu0 0
    %2106 = vmatpush2.bf16.xpose.msra.mxu0 0
    %2107 = vmatprep.subr.bf16.mxu0 0
    %2108 = vmatpush2.bf16.xpose.msra.mxu0 0
    %2109 = vmatprep.mubr.bf16.mxu0 0
    %2110 = vmatmul.mubr.bf16.gmra.mxu0 %v2072
    %v2111 = vpop.f32.mrf.mxu0
    %v2112 = vadd.f32 0.0, %v2111
    %v2113 = vpop.f32.mrf.mxu0
    %v2114 = vpop.f32.mrf.mxu0
    %v2115 = vpop.f32.mrf.mxu0
    %2116 = vdwg.mxu0
    %2117 = vrot.lane.b32.xlu0 %v1642, 96
    %v2118 = vpop.permute.xlu0 %2117
    %2119 = vrot.lane.b32.xlu0 %v1642, 48
    %v2120 = vpop.permute.xlu0 %2119
    %v2122 = vsel %vm243, %v2118, 0
    %v2125 = vsel %vm243, %v2120, 0
    %2127 = vmatprep.subr.bf16.mxu0 0
    %2128 = vmatpush1.bf16.xpose.msra.mxu0 0
    %2129 = vmatprep.subr.bf16.mxu0 0
    %2130 = vmatpush1.bf16.xpose.msra.mxu0 0
    %2131 = vmatprep.subr.bf16.mxu0 0
    %2132 = vmatpush1.bf16.xpose.msra.mxu0 0
    %2133 = vmatprep.subr.bf16.mxu0 0
    %2134 = vmatpush1.bf16.xpose.msra.mxu0 0
    %2135 = vmatprep.subr.bf16.mxu0 0
    %2136 = vmatpush1.bf16.xpose.msra.mxu0 0
    %2137 = vmatprep.subr.bf16.mxu0 0
    %2138 = vmatpush1.bf16.xpose.msra.mxu0 0
    %2139 = vmatprep.subr.bf16.mxu0 0
    %2140 = vmatpush1.bf16.xpose.msra.mxu0 0
    %2141 = vmatprep.subr.bf16.mxu0 0
    %2142 = vmatpush1.bf16.xpose.msra.mxu0 %v2125
    %2143 = vmatprep.subr.bf16.mxu0 0
    %2144 = vmatpush2.bf16.xpose.msra.mxu0 0
    %2145 = vmatprep.subr.bf16.mxu0 0
    %2146 = vmatpush2.bf16.xpose.msra.mxu0 0
    %2147 = vmatprep.subr.bf16.mxu0 0
    %2148 = vmatpush2.bf16.xpose.msra.mxu0 0
    %2149 = vmatprep.subr.bf16.mxu0 0
    %2150 = vmatpush2.bf16.xpose.msra.mxu0 0
    %2151 = vmatprep.subr.bf16.mxu0 0
    %2152 = vmatpush2.bf16.xpose.msra.mxu0 0
    %2153 = vmatprep.subr.bf16.mxu0 0
    %2154 = vmatpush2.bf16.xpose.msra.mxu0 0
    %2155 = vmatprep.subr.bf16.mxu0 0
    %2156 = vmatpush2.bf16.xpose.msra.mxu0 0
    %2157 = vmatprep.subr.bf16.mxu0 0
    %2158 = vmatpush2.bf16.xpose.msra.mxu0 0
    %2159 = vmatprep.mubr.bf16.mxu0 0
    %2160 = vmatmul.mubr.bf16.gmra.mxu0 %v2122
    %v2161 = vpop.f32.mrf.mxu0
    %v2162 = vadd.f32 0.0, %v2161
    %v2163 = vpop.f32.mrf.mxu0
    %v2164 = vpop.f32.mrf.mxu0
    %v2165 = vpop.f32.mrf.mxu0
    %2166 = vdwg.mxu0
    %v2167 = vmul.f32 %v2112, 0.25
    %v2168 = vmul.f32 %v2162, 0.25
    %v2169 = vsel %vm341, %v2167, -1e+30
    %v2170 = vsel %vm341, %v2168, -1e+30
    %v2171 = vsel %vm344, %v2169, -inf
    %2172 = vmax.xlane.f32.xlu0 %v2171
    %v2173 = vpop.xlane.xlu0 %2172
    %v2174 = vsel %vm344, %v2170, -inf
    %2175 = vmax.xlane.f32.xlu0 %v2174
    %v2176 = vpop.xlane.xlu0 %2175
    %v2177 = vsub.f32 %v2169, %v2173
    %v2178 = vsub.f32 %v2170, %v2176
    %v2179 = vmul.f32 %v2177, 1.442695
    %v2180 = vpow.pop %v2179
    %v2181 = vmul.f32 %v2178, 1.442695
    %v2182 = vpow.pop %v2181
    %v2183 = vsel %vm344, %v2180, 0.0
    %2184 = vadd.xlane.f32.xlu0 %v2183
    %v2185 = vpop.xlane.xlu0 %2184
    %v2186 = vsel %vm344, %v2182, 0.0
    %2187 = vadd.xlane.f32.xlu0 %v2186
    %v2188 = vpop.xlane.xlu0 %2187
    %v2189 = vrcp.pop %v2185
    %v2190 = vmul.f32 %v2180, %v2189
    %v2191 = vrcp.pop %v2188
    %v2192 = vmul.f32 %v2182, %v2191
    %v2193 = vpack.c.bf16 %v2190, %v2190
    %v2194 = vpack.c.bf16 %v2192, %v2192
    %2195 = vrot.lane.b32.xlu0 %v1641, 16
    %v2196 = vpop.permute.xlu0 %2195
    %v2198 = vsel %vm344, %v2193, 0
    %v2201 = vsel %vm374, %v2196, 0
    %2203 = vmatprep.subr.bf16.mxu0 0
    %2204 = vmatpush1.bf16.msra.mxu0 0
    %2205 = vmatprep.subr.bf16.mxu0 0
    %2206 = vmatpush1.bf16.msra.mxu0 0
    %2207 = vmatprep.subr.bf16.mxu0 0
    %2208 = vmatpush1.bf16.msra.mxu0 0
    %2209 = vmatprep.subr.bf16.mxu0 0
    %2210 = vmatpush1.bf16.msra.mxu0 0
    %2211 = vmatprep.subr.bf16.mxu0 0
    %2212 = vmatpush1.bf16.msra.mxu0 0
    %2213 = vmatprep.subr.bf16.mxu0 0
    %2214 = vmatpush1.bf16.msra.mxu0 0
    %2215 = vmatprep.subr.bf16.mxu0 0
    %2216 = vmatpush1.bf16.msra.mxu0 0
    %2217 = vmatprep.subr.bf16.mxu0 0
    %2218 = vmatpush1.bf16.msra.mxu0 %v2201
    %2219 = vmatprep.subr.bf16.mxu0 0
    %2220 = vmatpush2.bf16.msra.mxu0 0
    %2221 = vmatprep.subr.bf16.mxu0 0
    %2222 = vmatpush2.bf16.msra.mxu0 0
    %2223 = vmatprep.subr.bf16.mxu0 0
    %2224 = vmatpush2.bf16.msra.mxu0 0
    %2225 = vmatprep.subr.bf16.mxu0 0
    %2226 = vmatpush2.bf16.msra.mxu0 0
    %2227 = vmatprep.subr.bf16.mxu0 0
    %2228 = vmatpush2.bf16.msra.mxu0 0
    %2229 = vmatprep.subr.bf16.mxu0 0
    %2230 = vmatpush2.bf16.msra.mxu0 0
    %2231 = vmatprep.subr.bf16.mxu0 0
    %2232 = vmatpush2.bf16.msra.mxu0 0
    %2233 = vmatprep.subr.bf16.mxu0 0
    %2234 = vmatpush2.bf16.msra.mxu0 0
    %2235 = vmatprep.mubr.bf16.mxu0 0
    %2236 = vmatmul.mubr.bf16.gmra.mxu0 %v2198
    %v2237 = vpop.f32.mrf.mxu0
    %v2238 = vadd.f32 0.0, %v2237
    %v2239 = vpop.f32.mrf.mxu0
    %v2240 = vpop.f32.mrf.mxu0
    %v2241 = vpop.f32.mrf.mxu0
    %2242 = vdwg.mxu0
    %2243 = vrot.lane.b32.xlu0 %v1642, 16
    %v2244 = vpop.permute.xlu0 %2243
    %v2246 = vsel %vm344, %v2194, 0
    %v2249 = vsel %vm374, %v2244, 0
    %2251 = vmatprep.subr.bf16.mxu0 0
    %2252 = vmatpush1.bf16.msra.mxu0 0
    %2253 = vmatprep.subr.bf16.mxu0 0
    %2254 = vmatpush1.bf16.msra.mxu0 0
    %2255 = vmatprep.subr.bf16.mxu0 0
    %2256 = vmatpush1.bf16.msra.mxu0 0
    %2257 = vmatprep.subr.bf16.mxu0 0
    %2258 = vmatpush1.bf16.msra.mxu0 0
    %2259 = vmatprep.subr.bf16.mxu0 0
    %2260 = vmatpush1.bf16.msra.mxu0 0
    %2261 = vmatprep.subr.bf16.mxu0 0
    %2262 = vmatpush1.bf16.msra.mxu0 0
    %2263 = vmatprep.subr.bf16.mxu0 0
    %2264 = vmatpush1.bf16.msra.mxu0 0
    %2265 = vmatprep.subr.bf16.mxu0 0
    %2266 = vmatpush1.bf16.msra.mxu0 %v2249
    %2267 = vmatprep.subr.bf16.mxu0 0
    %2268 = vmatpush2.bf16.msra.mxu0 0
    %2269 = vmatprep.subr.bf16.mxu0 0
    %2270 = vmatpush2.bf16.msra.mxu0 0
    %2271 = vmatprep.subr.bf16.mxu0 0
    %2272 = vmatpush2.bf16.msra.mxu0 0
    %2273 = vmatprep.subr.bf16.mxu0 0
    %2274 = vmatpush2.bf16.msra.mxu0 0
    %2275 = vmatprep.subr.bf16.mxu0 0
    %2276 = vmatpush2.bf16.msra.mxu0 0
    %2277 = vmatprep.subr.bf16.mxu0 0
    %2278 = vmatpush2.bf16.msra.mxu0 0
    %2279 = vmatprep.subr.bf16.mxu0 0
    %2280 = vmatpush2.bf16.msra.mxu0 0
    %2281 = vmatprep.subr.bf16.mxu0 0
    %2282 = vmatpush2.bf16.msra.mxu0 0
    %2283 = vmatprep.mubr.bf16.mxu0 0
    %2284 = vmatmul.mubr.bf16.gmra.mxu0 %v2246
    %v2285 = vpop.f32.mrf.mxu0
    %v2286 = vadd.f32 0.0, %v2285
    %v2287 = vpop.f32.mrf.mxu0
    %v2288 = vpop.f32.mrf.mxu0
    %v2289 = vpop.f32.mrf.mxu0
    %2290 = vdwg.mxu0
    %2291 = vrot.lane.b32.xlu0 %v1641, 80
    %v2292 = vpop.permute.xlu0 %2291
    %v2294 = vsel %vm243, %v2292, 0
    %2296 = vmatprep.subr.bf16.mxu0 0
    %2297 = vmatpush1.bf16.xpose.msra.mxu0 0
    %2298 = vmatprep.subr.bf16.mxu0 0
    %2299 = vmatpush1.bf16.xpose.msra.mxu0 0
    %2300 = vmatprep.subr.bf16.mxu0 0
    %2301 = vmatpush1.bf16.xpose.msra.mxu0 0
    %2302 = vmatprep.subr.bf16.mxu0 0
    %2303 = vmatpush1.bf16.xpose.msra.mxu0 0
    %2304 = vmatprep.subr.bf16.mxu0 0
    %2305 = vmatpush1.bf16.xpose.msra.mxu0 0
    %2306 = vmatprep.subr.bf16.mxu0 0
    %2307 = vmatpush1.bf16.xpose.msra.mxu0 0
    %2308 = vmatprep.subr.bf16.mxu0 0
    %2309 = vmatpush1.bf16.xpose.msra.mxu0 0
    %2310 = vmatprep.subr.bf16.mxu0 0
    %2311 = vmatpush1.bf16.xpose.msra.mxu0 %v2075
    %2312 = vmatprep.subr.bf16.mxu0 0
    %2313 = vmatpush2.bf16.xpose.msra.mxu0 0
    %2314 = vmatprep.subr.bf16.mxu0 0
    %2315 = vmatpush2.bf16.xpose.msra.mxu0 0
    %2316 = vmatprep.subr.bf16.mxu0 0
    %2317 = vmatpush2.bf16.xpose.msra.mxu0 0
    %2318 = vmatprep.subr.bf16.mxu0 0
    %2319 = vmatpush2.bf16.xpose.msra.mxu0 0
    %2320 = vmatprep.subr.bf16.mxu0 0
    %2321 = vmatpush2.bf16.xpose.msra.mxu0 0
    %2322 = vmatprep.subr.bf16.mxu0 0
    %2323 = vmatpush2.bf16.xpose.msra.mxu0 0
    %2324 = vmatprep.subr.bf16.mxu0 0
    %2325 = vmatpush2.bf16.xpose.msra.mxu0 0
    %2326 = vmatprep.subr.bf16.mxu0 0
    %2327 = vmatpush2.bf16.xpose.msra.mxu0 0
    %2328 = vmatprep.mubr.bf16.mxu0 0
    %2329 = vmatmul.mubr.bf16.gmra.mxu0 %v2294
    %v2330 = vpop.f32.mrf.mxu0
    %v2331 = vadd.f32 0.0, %v2330
    %v2332 = vpop.f32.mrf.mxu0
    %v2333 = vpop.f32.mrf.mxu0
    %v2334 = vpop.f32.mrf.mxu0
    %2335 = vdwg.mxu0
    %2336 = vrot.lane.b32.xlu0 %v1642, 80
    %v2337 = vpop.permute.xlu0 %2336
    %v2339 = vsel %vm243, %v2337, 0
    %2341 = vmatprep.subr.bf16.mxu0 0
    %2342 = vmatpush1.bf16.xpose.msra.mxu0 0
    %2343 = vmatprep.subr.bf16.mxu0 0
    %2344 = vmatpush1.bf16.xpose.msra.mxu0 0
    %2345 = vmatprep.subr.bf16.mxu0 0
    %2346 = vmatpush1.bf16.xpose.msra.mxu0 0
    %2347 = vmatprep.subr.bf16.mxu0 0
    %2348 = vmatpush1.bf16.xpose.msra.mxu0 0
    %2349 = vmatprep.subr.bf16.mxu0 0
    %2350 = vmatpush1.bf16.xpose.msra.mxu0 0
    %2351 = vmatprep.subr.bf16.mxu0 0
    %2352 = vmatpush1.bf16.xpose.msra.mxu0 0
    %2353 = vmatprep.subr.bf16.mxu0 0
    %2354 = vmatpush1.bf16.xpose.msra.mxu0 0
    %2355 = vmatprep.subr.bf16.mxu0 0
    %2356 = vmatpush1.bf16.xpose.msra.mxu0 %v2125
    %2357 = vmatprep.subr.bf16.mxu0 0
    %2358 = vmatpush2.bf16.xpose.msra.mxu0 0
    %2359 = vmatprep.subr.bf16.mxu0 0
    %2360 = vmatpush2.bf16.xpose.msra.mxu0 0
    %2361 = vmatprep.subr.bf16.mxu0 0
    %2362 = vmatpush2.bf16.xpose.msra.mxu0 0
    %2363 = vmatprep.subr.bf16.mxu0 0
    %2364 = vmatpush2.bf16.xpose.msra.mxu0 0
    %2365 = vmatprep.subr.bf16.mxu0 0
    %2366 = vmatpush2.bf16.xpose.msra.mxu0 0
    %2367 = vmatprep.subr.bf16.mxu0 0
    %2368 = vmatpush2.bf16.xpose.msra.mxu0 0
    %2369 = vmatprep.subr.bf16.mxu0 0
    %2370 = vmatpush2.bf16.xpose.msra.mxu0 0
    %2371 = vmatprep.subr.bf16.mxu0 0
    %2372 = vmatpush2.bf16.xpose.msra.mxu0 0
    %2373 = vmatprep.mubr.bf16.mxu0 0
    %2374 = vmatmul.mubr.bf16.gmra.mxu0 %v2339
    %v2375 = vpop.f32.mrf.mxu0
    %v2376 = vadd.f32 0.0, %v2375
    %v2377 = vpop.f32.mrf.mxu0
    %v2378 = vpop.f32.mrf.mxu0
    %v2379 = vpop.f32.mrf.mxu0
    %2380 = vdwg.mxu0
    %v2381 = vmul.f32 %v2331, 0.25
    %v2382 = vmul.f32 %v2376, 0.25
    %v2383 = vsel %vm341, %v2381, -1e+30
    %v2384 = vsel %vm341, %v2382, -1e+30
    %v2385 = vsel %vm344, %v2383, -inf
    %2386 = vmax.xlane.f32.xlu0 %v2385
    %v2387 = vpop.xlane.xlu0 %2386
    %v2388 = vsel %vm344, %v2384, -inf
    %2389 = vmax.xlane.f32.xlu0 %v2388
    %v2390 = vpop.xlane.xlu0 %2389
    %v2391 = vsub.f32 %v2383, %v2387
    %v2392 = vsub.f32 %v2384, %v2390
    %v2393 = vmul.f32 %v2391, 1.442695
    %v2394 = vpow.pop %v2393
    %v2395 = vmul.f32 %v2392, 1.442695
    %v2396 = vpow.pop %v2395
    %v2397 = vsel %vm344, %v2394, 0.0
    %2398 = vadd.xlane.f32.xlu0 %v2397
    %v2399 = vpop.xlane.xlu0 %2398
    %v2400 = vsel %vm344, %v2396, 0.0
    %2401 = vadd.xlane.f32.xlu0 %v2400
    %v2402 = vpop.xlane.xlu0 %2401
    %v2403 = vrcp.pop %v2399
    %v2404 = vmul.f32 %v2394, %v2403
    %v2405 = vrcp.pop %v2402
    %v2406 = vmul.f32 %v2396, %v2405
    %v2407 = vpack.c.bf16 %v2404, %v2404
    %v2408 = vpack.c.bf16 %v2406, %v2406
    %v2410 = vsel %vm344, %v2407, 0
    %2412 = vmatprep.subr.bf16.mxu0 0
    %2413 = vmatpush1.bf16.msra.mxu0 0
    %2414 = vmatprep.subr.bf16.mxu0 0
    %2415 = vmatpush1.bf16.msra.mxu0 0
    %2416 = vmatprep.subr.bf16.mxu0 0
    %2417 = vmatpush1.bf16.msra.mxu0 0
    %2418 = vmatprep.subr.bf16.mxu0 0
    %2419 = vmatpush1.bf16.msra.mxu0 0
    %2420 = vmatprep.subr.bf16.mxu0 0
    %2421 = vmatpush1.bf16.msra.mxu0 0
    %2422 = vmatprep.subr.bf16.mxu0 0
    %2423 = vmatpush1.bf16.msra.mxu0 0
    %2424 = vmatprep.subr.bf16.mxu0 0
    %2425 = vmatpush1.bf16.msra.mxu0 0
    %2426 = vmatprep.subr.bf16.mxu0 0
    %2427 = vmatpush1.bf16.msra.mxu0 %v2201
    %2428 = vmatprep.subr.bf16.mxu0 0
    %2429 = vmatpush2.bf16.msra.mxu0 0
    %2430 = vmatprep.subr.bf16.mxu0 0
    %2431 = vmatpush2.bf16.msra.mxu0 0
    %2432 = vmatprep.subr.bf16.mxu0 0
    %2433 = vmatpush2.bf16.msra.mxu0 0
    %2434 = vmatprep.subr.bf16.mxu0 0
    %2435 = vmatpush2.bf16.msra.mxu0 0
    %2436 = vmatprep.subr.bf16.mxu0 0
    %2437 = vmatpush2.bf16.msra.mxu0 0
    %2438 = vmatprep.subr.bf16.mxu0 0
    %2439 = vmatpush2.bf16.msra.mxu0 0
    %2440 = vmatprep.subr.bf16.mxu0 0
    %2441 = vmatpush2.bf16.msra.mxu0 0
    %2442 = vmatprep.subr.bf16.mxu0 0
    %2443 = vmatpush2.bf16.msra.mxu0 0
    %2444 = vmatprep.mubr.bf16.mxu0 0
    %2445 = vmatmul.mubr.bf16.gmra.mxu0 %v2410
    %v2446 = vpop.f32.mrf.mxu0
    %v2447 = vadd.f32 0.0, %v2446
    %v2448 = vpop.f32.mrf.mxu0
    %v2449 = vpop.f32.mrf.mxu0
    %v2450 = vpop.f32.mrf.mxu0
    %2451 = vdwg.mxu0
    %v2453 = vsel %vm344, %v2408, 0
    %2455 = vmatprep.subr.bf16.mxu0 0
    %2456 = vmatpush1.bf16.msra.mxu0 0
    %2457 = vmatprep.subr.bf16.mxu0 0
    %2458 = vmatpush1.bf16.msra.mxu0 0
    %2459 = vmatprep.subr.bf16.mxu0 0
    %2460 = vmatpush1.bf16.msra.mxu0 0
    %2461 = vmatprep.subr.bf16.mxu0 0
    %2462 = vmatpush1.bf16.msra.mxu0 0
    %2463 = vmatprep.subr.bf16.mxu0 0
    %2464 = vmatpush1.bf16.msra.mxu0 0
    %2465 = vmatprep.subr.bf16.mxu0 0
    %2466 = vmatpush1.bf16.msra.mxu0 0
    %2467 = vmatprep.subr.bf16.mxu0 0
    %2468 = vmatpush1.bf16.msra.mxu0 0
    %2469 = vmatprep.subr.bf16.mxu0 0
    %2470 = vmatpush1.bf16.msra.mxu0 %v2249
    %2471 = vmatprep.subr.bf16.mxu0 0
    %2472 = vmatpush2.bf16.msra.mxu0 0
    %2473 = vmatprep.subr.bf16.mxu0 0
    %2474 = vmatpush2.bf16.msra.mxu0 0
    %2475 = vmatprep.subr.bf16.mxu0 0
    %2476 = vmatpush2.bf16.msra.mxu0 0
    %2477 = vmatprep.subr.bf16.mxu0 0
    %2478 = vmatpush2.bf16.msra.mxu0 0
    %2479 = vmatprep.subr.bf16.mxu0 0
    %2480 = vmatpush2.bf16.msra.mxu0 0
    %2481 = vmatprep.subr.bf16.mxu0 0
    %2482 = vmatpush2.bf16.msra.mxu0 0
    %2483 = vmatprep.subr.bf16.mxu0 0
    %2484 = vmatpush2.bf16.msra.mxu0 0
    %2485 = vmatprep.subr.bf16.mxu0 0
    %2486 = vmatpush2.bf16.msra.mxu0 0
    %2487 = vmatprep.mubr.bf16.mxu0 0
    %2488 = vmatmul.mubr.bf16.gmra.mxu0 %v2453
    %v2489 = vpop.f32.mrf.mxu0
    %v2490 = vadd.f32 0.0, %v2489
    %v2491 = vpop.f32.mrf.mxu0
    %v2492 = vpop.f32.mrf.mxu0
    %v2493 = vpop.f32.mrf.mxu0
    %2494 = vdwg.mxu0
    %2497 = vrot.lane.b32.xlu0 %v2019, 16
    %v2498 = vpop.permute.xlu0 %2497
    %2499 = vrot.lane.b32.xlu0 %v2062, 16
    %v2500 = vpop.permute.xlu0 %2499
    %2505 = vrot.lane.b32.xlu0 %v2238, 32
    %v2506 = vpop.permute.xlu0 %2505
    %2507 = vrot.lane.b32.xlu0 %v2286, 32
    %v2508 = vpop.permute.xlu0 %2507
    %2513 = vrot.lane.b32.xlu0 %v2447, 48
    %v2514 = vpop.permute.xlu0 %2513
    %2515 = vrot.lane.b32.xlu0 %v2490, 48
    %v2516 = vpop.permute.xlu0 %2515
    %v2519 = vsel %vm243, %v1810, %v2498
    %v2520 = vsel %vm243, %v1858, %v2500
    %v2521 = vsel %vm1124, %v2519, %v2506
    %v2522 = vsel %vm1124, %v2520, %v2508
    %v2523 = vsel %vm1127, %v2521, %v2514
    %v2524 = vsel %vm1127, %v2522, %v2516
    %v2525 = vpack.c.bf16 %v2524, %v2523
    %s2526 = scalar_lea.vmem %s5, 32
    %v2527 = vld [vmem:[%s2526] sm:$0xf]
    %v2528 = vld [vmem:[%s2526 + $0x4] sm:$0xf]
    %v2529 = vld [vmem:[%s2526 + $0x8] sm:$0xf]
    %v2530 = vld [vmem:[%s2526 + $0xc] sm:$0xf]
    %v2531 = vld [vmem:[%s2526 + $0x10] sm:$0xf]
    %v2532 = vld [vmem:[%s2526 + $0x14] sm:$0xf]
    %v2533 = vld [vmem:[%s2526 + $0x18] sm:$0xf]
    %v2534 = vld [vmem:[%s2526 + $0x1c] sm:$0xf]
    %v2543 = vunpack.c.l.b16 %v2527
    %v2544 = vunpack.c.l.b16 %v2528
    %v2545 = vunpack.c.l.b16 %v2529
    %v2546 = vunpack.c.l.b16 %v2530
    %v2547 = vunpack.c.l.b16 %v2531
    %v2548 = vunpack.c.l.b16 %v2532
    %v2549 = vunpack.c.l.b16 %v2533
    %v2550 = vunpack.c.l.b16 %v2534
    %v2551 = vpack.c.b16 %v2544, %v2543
    %v2552 = vpack.c.b16 %v2546, %v2545
    %v2553 = vpack.c.b16 %v2548, %v2547
    %v2554 = vpack.c.b16 %v2550, %v2549
    %v2560 = vsel %vm54, %v2525, 0
    %2562 = vmatprep.subr.bf16.mxu0 0
    %2563 = vmatpush1.bf16.msra.mxu0 0
    %2564 = vmatprep.subr.bf16.mxu0 0
    %2565 = vmatpush1.bf16.msra.mxu0 0
    %2566 = vmatprep.subr.bf16.mxu0 0
    %2567 = vmatpush1.bf16.msra.mxu0 0
    %2568 = vmatprep.subr.bf16.mxu0 0
    %2569 = vmatpush1.bf16.msra.mxu0 0
    %2570 = vmatprep.subr.bf16.mxu0 0
    %2571 = vmatpush1.bf16.msra.mxu0 %v2554
    %2572 = vmatprep.subr.bf16.mxu0 0
    %2573 = vmatpush1.bf16.msra.mxu0 %v2553
    %2574 = vmatprep.subr.bf16.mxu0 0
    %2575 = vmatpush1.bf16.msra.mxu0 %v2552
    %2576 = vmatprep.subr.bf16.mxu0 0
    %2577 = vmatpush1.bf16.msra.mxu0 %v2551
    %2578 = vmatprep.subr.bf16.mxu0 0
    %2579 = vmatpush2.bf16.msra.mxu0 0
    %2580 = vmatprep.subr.bf16.mxu0 0
    %2581 = vmatpush2.bf16.msra.mxu0 0
    %2582 = vmatprep.subr.bf16.mxu0 0
    %2583 = vmatpush2.bf16.msra.mxu0 0
    %2584 = vmatprep.subr.bf16.mxu0 0
    %2585 = vmatpush2.bf16.msra.mxu0 0
    %2586 = vmatprep.subr.bf16.mxu0 0
    %2587 = vmatpush2.bf16.msra.mxu0 0
    %2588 = vmatprep.subr.bf16.mxu0 0
    %2589 = vmatpush2.bf16.msra.mxu0 0
    %2590 = vmatprep.subr.bf16.mxu0 0
    %2591 = vmatpush2.bf16.msra.mxu0 0
    %2592 = vmatprep.subr.bf16.mxu0 0
    %2593 = vmatpush2.bf16.msra.mxu0 0
    %2594 = vmatprep.mubr.bf16.mxu0 0
    %2595 = vmatmul.mubr.bf16.gmra.mxu0 %v2560
    %v2596 = vpop.f32.mrf.mxu0
    %v2597 = vadd.f32 0.0, %v2596
    %v2598 = vpop.f32.mrf.mxu0
    %v2599 = vpop.f32.mrf.mxu0
    %v2600 = vadd.f32 0.0, %v2599
    %v2601 = vpop.f32.mrf.mxu0
    %2602 = vdwg.mxu0
    %v2603 = vadd.f32 %v1451, %v2597
    %v2604 = vadd.f32 %v1452, %v2600
    %v2605 = vmul.f32 %v2603, %v2603
    %v2606 = vmul.f32 %v2604, %v2604
    %v2607 = vsel %vm54, %v2605, 0.0
    %2608 = vadd.xlane.f32.xlu0 %v2607
    %v2609 = vpop.xlane.xlu0 %2608
    %v2610 = vsel %vm54, %v2606, 0.0
    %2611 = vadd.xlane.f32.xlu0 %v2610
    %v2612 = vpop.xlane.xlu0 %2611
    %v2613 = vmul.f32 %v2609, %v61
    %v2614 = vmul.f32 %v2612, %v61
    %v2615 = vadd.f32 %v2613, 1e-06
    %v2616 = vadd.f32 %v2614, 1e-06
    %v2617 = vrsqrt.pop %v2615
    %v2618 = vrsqrt.pop %v2616
    %v2619 = vmul.f32 %v2603, %v2617
    %v2620 = vmul.f32 %v2604, %v2618
    %s2621 = scalar_lea.vmem %s7, 1
    %v2622 = vld [vmem:[%s2621] sm:$0x1]
    %v2624 = vlaneseq
    %v2625 = vshrl.u32 %v2624, 7
    %v2626 = vsub.s32 0, %v2625
    %v2627 = vrot.slane %v2622, %v2626
    %v2629 = vmul.f32 %v2619, %v2627
    %v2630 = vmul.f32 %v2620, %v2627
    %v2631 = vpack.c.bf16 %v2630, %v2629
    %s2632 = scalar_lea.vmem %s8, 64
    %v2633 = vld [vmem:[%s2632] sm:$0xff]
    %v2634 = vld [vmem:[%s2632 + $0x8] sm:$0xff]
    %v2635 = vld [vmem:[%s2632 + $0x10] sm:$0xff]
    %v2636 = vld [vmem:[%s2632 + $0x18] sm:$0xff]
    %v2637 = vld [vmem:[%s2632 + $0x20] sm:$0xff]
    %v2638 = vld [vmem:[%s2632 + $0x28] sm:$0xff]
    %v2639 = vld [vmem:[%s2632 + $0x30] sm:$0xff]
    %v2640 = vld [vmem:[%s2632 + $0x38] sm:$0xff]
    %v2649 = vunpack.c.l.b16 %v2633
    %v2650 = vunpack.c.h.b16 %v2633
    %v2651 = vunpack.c.l.b16 %v2634
    %v2652 = vunpack.c.h.b16 %v2634
    %v2653 = vunpack.c.l.b16 %v2635
    %v2654 = vunpack.c.h.b16 %v2635
    %v2655 = vunpack.c.l.b16 %v2636
    %v2656 = vunpack.c.h.b16 %v2636
    %v2657 = vunpack.c.l.b16 %v2637
    %v2658 = vunpack.c.h.b16 %v2637
    %v2659 = vunpack.c.l.b16 %v2638
    %v2660 = vunpack.c.h.b16 %v2638
    %v2661 = vunpack.c.l.b16 %v2639
    %v2662 = vunpack.c.h.b16 %v2639
    %v2663 = vunpack.c.l.b16 %v2640
    %v2664 = vunpack.c.h.b16 %v2640
    %v2665 = vpack.c.b16 %v2651, %v2649
    %v2666 = vpack.c.b16 %v2652, %v2650
    %v2667 = vpack.c.b16 %v2655, %v2653
    %v2668 = vpack.c.b16 %v2656, %v2654
    %v2669 = vpack.c.b16 %v2659, %v2657
    %v2670 = vpack.c.b16 %v2660, %v2658
    %v2671 = vpack.c.b16 %v2663, %v2661
    %v2672 = vpack.c.b16 %v2664, %v2662
    %v2682 = vsel %vm54, %v2631, 0
    %2684 = vmatprep.subr.bf16.mxu0 0
    %2685 = vmatpush1.bf16.msra.mxu0 0
    %2686 = vmatprep.subr.bf16.mxu0 0
    %2687 = vmatpush1.bf16.msra.mxu0 0
    %2688 = vmatprep.subr.bf16.mxu0 0
    %2689 = vmatpush1.bf16.msra.mxu0 0
    %2690 = vmatprep.subr.bf16.mxu0 0
    %2691 = vmatpush1.bf16.msra.mxu0 0
    %2692 = vmatprep.subr.bf16.mxu0 %v2672
    %2693 = vmatpush1.bf16.msra.mxu0 %v2671
    %2694 = vmatprep.subr.bf16.mxu0 %v2670
    %2695 = vmatpush1.bf16.msra.mxu0 %v2669
    %2696 = vmatprep.subr.bf16.mxu0 %v2668
    %2697 = vmatpush1.bf16.msra.mxu0 %v2667
    %2698 = vmatprep.subr.bf16.mxu0 %v2666
    %2699 = vmatpush1.bf16.msra.mxu0 %v2665
    %2700 = vmatprep.subr.bf16.mxu0 0
    %2701 = vmatpush2.bf16.msra.mxu0 0
    %2702 = vmatprep.subr.bf16.mxu0 0
    %2703 = vmatpush2.bf16.msra.mxu0 0
    %2704 = vmatprep.subr.bf16.mxu0 0
    %2705 = vmatpush2.bf16.msra.mxu0 0
    %2706 = vmatprep.subr.bf16.mxu0 0
    %2707 = vmatpush2.bf16.msra.mxu0 0
    %2708 = vmatprep.subr.bf16.mxu0 0
    %2709 = vmatpush2.bf16.msra.mxu0 0
    %2710 = vmatprep.subr.bf16.mxu0 0
    %2711 = vmatpush2.bf16.msra.mxu0 0
    %2712 = vmatprep.subr.bf16.mxu0 0
    %2713 = vmatpush2.bf16.msra.mxu0 0
    %2714 = vmatprep.subr.bf16.mxu0 0
    %2715 = vmatpush2.bf16.msra.mxu0 0
    %2716 = vmatprep.mubr.bf16.mxu0 0
    %2717 = vmatmul.mubr.bf16.gmra.mxu0 %v2682
    %v2718 = vpop.f32.mrf.mxu0
    %v2719 = vadd.f32 0.0, %v2718
    %v2720 = vpop.f32.mrf.mxu0
    %v2721 = vadd.f32 0.0, %v2720
    %v2722 = vpop.f32.mrf.mxu0
    %v2723 = vadd.f32 0.0, %v2722
    %v2724 = vpop.f32.mrf.mxu0
    %v2725 = vadd.f32 0.0, %v2724
    %2726 = vdwg.mxu0
    %v2727 = vxor.u32 %v2719, 2147483648
    %v2728 = vxor.u32 %v2723, 2147483648
    %v2729 = vmul.f32 %v2727, 1.442695
    %v2730 = vpow.pop %v2729
    %v2731 = vmul.f32 %v2728, 1.442695
    %v2732 = vpow.pop %v2731
    %v2733 = vadd.f32 %v2730, 1.0
    %v2734 = vadd.f32 %v2732, 1.0
    %v2735 = vrcp.pop %v2733
    %v2736 = vmul.f32 1.0, %v2735
    %v2737 = vrcp.pop %v2734
    %v2738 = vmul.f32 1.0, %v2737
    %v2739 = vmul.f32 %v2719, %v2736
    %v2740 = vmul.f32 %v2723, %v2738
    %v2741 = vmul.f32 %v2739, %v2721
    %v2742 = vmul.f32 %v2740, %v2725
    %v2743 = vpack.c.bf16 %v2742, %v2741
    %s2744 = scalar_lea.vmem %s9, 64
    %v2745 = vld [vmem:[%s2744] sm:$0xf]
    %v2746 = vld [vmem:[%s2744 + $0x4] sm:$0xf]
    %v2747 = vld [vmem:[%s2744 + $0x8] sm:$0xf]
    %v2748 = vld [vmem:[%s2744 + $0xc] sm:$0xf]
    %v2749 = vld [vmem:[%s2744 + $0x10] sm:$0xf]
    %v2750 = vld [vmem:[%s2744 + $0x14] sm:$0xf]
    %v2751 = vld [vmem:[%s2744 + $0x18] sm:$0xf]
    %v2752 = vld [vmem:[%s2744 + $0x1c] sm:$0xf]
    %v2753 = vld [vmem:[%s2744 + $0x20] sm:$0xf]
    %v2754 = vld [vmem:[%s2744 + $0x24] sm:$0xf]
    %v2755 = vld [vmem:[%s2744 + $0x28] sm:$0xf]
    %v2756 = vld [vmem:[%s2744 + $0x2c] sm:$0xf]
    %v2757 = vld [vmem:[%s2744 + $0x30] sm:$0xf]
    %v2758 = vld [vmem:[%s2744 + $0x34] sm:$0xf]
    %v2759 = vld [vmem:[%s2744 + $0x38] sm:$0xf]
    %v2760 = vld [vmem:[%s2744 + $0x3c] sm:$0xf]
    %v2777 = vunpack.c.l.b16 %v2745
    %v2778 = vunpack.c.l.b16 %v2746
    %v2779 = vunpack.c.l.b16 %v2747
    %v2780 = vunpack.c.l.b16 %v2748
    %v2781 = vunpack.c.l.b16 %v2749
    %v2782 = vunpack.c.l.b16 %v2750
    %v2783 = vunpack.c.l.b16 %v2751
    %v2784 = vunpack.c.l.b16 %v2752
    %v2785 = vunpack.c.l.b16 %v2753
    %v2786 = vunpack.c.l.b16 %v2754
    %v2787 = vunpack.c.l.b16 %v2755
    %v2788 = vunpack.c.l.b16 %v2756
    %v2789 = vunpack.c.l.b16 %v2757
    %v2790 = vunpack.c.l.b16 %v2758
    %v2791 = vunpack.c.l.b16 %v2759
    %v2792 = vunpack.c.l.b16 %v2760
    %v2793 = vpack.c.b16 %v2778, %v2777
    %v2794 = vpack.c.b16 %v2780, %v2779
    %v2795 = vpack.c.b16 %v2782, %v2781
    %v2796 = vpack.c.b16 %v2784, %v2783
    %v2797 = vpack.c.b16 %v2786, %v2785
    %v2798 = vpack.c.b16 %v2788, %v2787
    %v2799 = vpack.c.b16 %v2790, %v2789
    %v2800 = vpack.c.b16 %v2792, %v2791
    %2809 = vmatprep.subr.bf16.mxu0 0
    %2810 = vmatpush1.bf16.msra.mxu0 %v2800
    %2811 = vmatprep.subr.bf16.mxu0 0
    %2812 = vmatpush1.bf16.msra.mxu0 %v2799
    %2813 = vmatprep.subr.bf16.mxu0 0
    %2814 = vmatpush1.bf16.msra.mxu0 %v2798
    %2815 = vmatprep.subr.bf16.mxu0 0
    %2816 = vmatpush1.bf16.msra.mxu0 %v2797
    %2817 = vmatprep.subr.bf16.mxu0 0
    %2818 = vmatpush1.bf16.msra.mxu0 %v2796
    %2819 = vmatprep.subr.bf16.mxu0 0
    %2820 = vmatpush1.bf16.msra.mxu0 %v2795
    %2821 = vmatprep.subr.bf16.mxu0 0
    %2822 = vmatpush1.bf16.msra.mxu0 %v2794
    %2823 = vmatprep.subr.bf16.mxu0 0
    %2824 = vmatpush1.bf16.msra.mxu0 %v2793
    %2825 = vmatprep.subr.bf16.mxu0 0
    %2826 = vmatpush2.bf16.msra.mxu0 0
    %2827 = vmatprep.subr.bf16.mxu0 0
    %2828 = vmatpush2.bf16.msra.mxu0 0
    %2829 = vmatprep.subr.bf16.mxu0 0
    %2830 = vmatpush2.bf16.msra.mxu0 0
    %2831 = vmatprep.subr.bf16.mxu0 0
    %2832 = vmatpush2.bf16.msra.mxu0 0
    %2833 = vmatprep.subr.bf16.mxu0 0
    %2834 = vmatpush2.bf16.msra.mxu0 0
    %2835 = vmatprep.subr.bf16.mxu0 0
    %2836 = vmatpush2.bf16.msra.mxu0 0
    %2837 = vmatprep.subr.bf16.mxu0 0
    %2838 = vmatpush2.bf16.msra.mxu0 0
    %2839 = vmatprep.subr.bf16.mxu0 0
    %2840 = vmatpush2.bf16.msra.mxu0 0
    %2841 = vmatprep.mubr.bf16.mxu0 0
    %2842 = vmatmul.mubr.bf16.gmra.mxu0 %v2743
    %v2843 = vpop.f32.mrf.mxu0
    %v2844 = vadd.f32 0.0, %v2843
    %v2845 = vpop.f32.mrf.mxu0
    %v2846 = vpop.f32.mrf.mxu0
    %v2847 = vadd.f32 0.0, %v2846
    %v2848 = vpop.f32.mrf.mxu0
    %2849 = vdwg.mxu0
    %v2850 = vadd.f32 %v2603, %v2844
    %v2851 = vadd.f32 %v2604, %v2847
    %v2852 = vmul.f32 %v2850, %v2850
    %v2853 = vmul.f32 %v2851, %v2851
    %v2854 = vsel %vm54, %v2852, 0.0
    %2855 = vadd.xlane.f32.xlu0 %v2854
    %v2856 = vpop.xlane.xlu0 %2855
    %v2857 = vsel %vm54, %v2853, 0.0
    %2858 = vadd.xlane.f32.xlu0 %v2857
    %v2859 = vpop.xlane.xlu0 %2858
    %v2860 = vmul.f32 %v2856, %v61
    %v2861 = vmul.f32 %v2859, %v61
    %v2862 = vadd.f32 %v2860, 1e-06
    %v2863 = vadd.f32 %v2861, 1e-06
    %v2864 = vrsqrt.pop %v2862
    %v2865 = vrsqrt.pop %v2863
    %v2866 = vmul.f32 %v2850, %v2864
    %v2867 = vmul.f32 %v2851, %v2865
    %v2868 = vld [vmem:[%s10] sm:$0x1]
    %v2870 = vlaneseq
    %v2871 = vshrl.u32 %v2870, 7
    %v2872 = vsub.s32 0, %v2871
    %v2873 = vrot.slane %v2868, %v2872
    %v2875 = vmul.f32 %v2866, %v2873
    %v2876 = vmul.f32 %v2867, %v2873
    %v2877 = vpack.c.bf16 %v2876, %v2875
    %v2878 = vld [vmem:[%s11] sm:$0xff]
    %v2879 = vld [vmem:[%s11 + $0x8] sm:$0xff]
    %v2880 = vld [vmem:[%s11 + $0x10] sm:$0xff]
    %v2881 = vld [vmem:[%s11 + $0x18] sm:$0xff]
    %v2882 = vld [vmem:[%s11 + $0x20] sm:$0xff]
    %v2883 = vld [vmem:[%s11 + $0x28] sm:$0xff]
    %v2884 = vld [vmem:[%s11 + $0x30] sm:$0xff]
    %v2885 = vld [vmem:[%s11 + $0x38] sm:$0xff]
    %v2886 = vld [vmem:[%s11 + $0x40] sm:$0xff]
    %v2887 = vld [vmem:[%s11 + $0x48] sm:$0xff]
    %v2888 = vld [vmem:[%s11 + $0x50] sm:$0xff]
    %v2889 = vld [vmem:[%s11 + $0x58] sm:$0xff]
    %v2890 = vld [vmem:[%s11 + $0x60] sm:$0xff]
    %v2891 = vld [vmem:[%s11 + $0x68] sm:$0xff]
    %v2892 = vld [vmem:[%s11 + $0x70] sm:$0xff]
    %v2893 = vld [vmem:[%s11 + $0x78] sm:$0xff]
    %v2910 = vunpack.c.l.b16 %v2878
    %v2911 = vunpack.c.h.b16 %v2878
    %v2912 = vunpack.c.l.b16 %v2879
    %v2913 = vunpack.c.h.b16 %v2879
    %v2914 = vunpack.c.l.b16 %v2880
    %v2915 = vunpack.c.h.b16 %v2880
    %v2916 = vunpack.c.l.b16 %v2881
    %v2917 = vunpack.c.h.b16 %v2881
    %v2918 = vunpack.c.l.b16 %v2882
    %v2919 = vunpack.c.h.b16 %v2882
    %v2920 = vunpack.c.l.b16 %v2883
    %v2921 = vunpack.c.h.b16 %v2883
    %v2922 = vunpack.c.l.b16 %v2884
    %v2923 = vunpack.c.h.b16 %v2884
    %v2924 = vunpack.c.l.b16 %v2885
    %v2925 = vunpack.c.h.b16 %v2885
    %v2926 = vunpack.c.l.b16 %v2886
    %v2927 = vunpack.c.h.b16 %v2886
    %v2928 = vunpack.c.l.b16 %v2887
    %v2929 = vunpack.c.h.b16 %v2887
    %v2930 = vunpack.c.l.b16 %v2888
    %v2931 = vunpack.c.h.b16 %v2888
    %v2932 = vunpack.c.l.b16 %v2889
    %v2933 = vunpack.c.h.b16 %v2889
    %v2934 = vunpack.c.l.b16 %v2890
    %v2935 = vunpack.c.h.b16 %v2890
    %v2936 = vunpack.c.l.b16 %v2891
    %v2937 = vunpack.c.h.b16 %v2891
    %v2938 = vunpack.c.l.b16 %v2892
    %v2939 = vunpack.c.h.b16 %v2892
    %v2940 = vunpack.c.l.b16 %v2893
    %v2941 = vunpack.c.h.b16 %v2893
    %v2942 = vpack.c.b16 %v2914, %v2910
    %v2943 = vpack.c.b16 %v2915, %v2911
    %v2944 = vpack.c.b16 %v2916, %v2912
    %v2945 = vpack.c.b16 %v2917, %v2913
    %v2946 = vpack.c.b16 %v2922, %v2918
    %v2947 = vpack.c.b16 %v2923, %v2919
    %v2948 = vpack.c.b16 %v2924, %v2920
    %v2949 = vpack.c.b16 %v2925, %v2921
    %v2950 = vpack.c.b16 %v2930, %v2926
    %v2951 = vpack.c.b16 %v2931, %v2927
    %v2952 = vpack.c.b16 %v2932, %v2928
    %v2953 = vpack.c.b16 %v2933, %v2929
    %v2954 = vpack.c.b16 %v2938, %v2934
    %v2955 = vpack.c.b16 %v2939, %v2935
    %v2956 = vpack.c.b16 %v2940, %v2936
    %v2957 = vpack.c.b16 %v2941, %v2937
    %v2975 = vsel %vm54, %v2877, 0
    %2977 = vmatprep.subr.bf16.mxu0 0
    %2978 = vmatpush1.bf16.msra.mxu0 0
    %2979 = vmatprep.subr.bf16.mxu0 0
    %2980 = vmatpush1.bf16.msra.mxu0 0
    %2981 = vmatprep.subr.bf16.mxu0 0
    %2982 = vmatpush1.bf16.msra.mxu0 0
    %2983 = vmatprep.subr.bf16.mxu0 0
    %2984 = vmatpush1.bf16.msra.mxu0 0
    %2985 = vmatprep.subr.bf16.mxu0 %v2955
    %2986 = vmatpush1.bf16.msra.mxu0 %v2954
    %2987 = vmatprep.subr.bf16.mxu0 %v2951
    %2988 = vmatpush1.bf16.msra.mxu0 %v2950
    %2989 = vmatprep.subr.bf16.mxu0 %v2947
    %2990 = vmatpush1.bf16.msra.mxu0 %v2946
    %2991 = vmatprep.subr.bf16.mxu0 %v2943
    %2992 = vmatpush1.bf16.msra.mxu0 %v2942
    %2993 = vmatprep.subr.bf16.mxu0 0
    %2994 = vmatpush2.bf16.msra.mxu0 0
    %2995 = vmatprep.subr.bf16.mxu0 0
    %2996 = vmatpush2.bf16.msra.mxu0 0
    %2997 = vmatprep.subr.bf16.mxu0 0
    %2998 = vmatpush2.bf16.msra.mxu0 0
    %2999 = vmatprep.subr.bf16.mxu0 0
    %3000 = vmatpush2.bf16.msra.mxu0 0
    %3001 = vmatprep.subr.bf16.mxu0 0
    %3002 = vmatpush2.bf16.msra.mxu0 0
    %3003 = vmatprep.subr.bf16.mxu0 0
    %3004 = vmatpush2.bf16.msra.mxu0 0
    %3005 = vmatprep.subr.bf16.mxu0 0
    %3006 = vmatpush2.bf16.msra.mxu0 0
    %3007 = vmatprep.subr.bf16.mxu0 0
    %3008 = vmatpush2.bf16.msra.mxu0 0
    %3009 = vmatprep.mubr.bf16.mxu0 0
    %3010 = vmatmul.mubr.bf16.gmra.mxu0 %v2975
    %v3011 = vpop.f32.mrf.mxu0
    %v3012 = vadd.f32 0.0, %v3011
    %v3013 = vpop.f32.mrf.mxu0
    %v3014 = vadd.f32 0.0, %v3013
    %v3015 = vpop.f32.mrf.mxu0
    %v3016 = vadd.f32 0.0, %v3015
    %v3017 = vpop.f32.mrf.mxu0
    %v3018 = vadd.f32 0.0, %v3017
    %3019 = vdwg.mxu0
    %3020 = vmatprep.subr.bf16.mxu0 0
    %3021 = vmatpush1.bf16.msra.mxu0 0
    %3022 = vmatprep.subr.bf16.mxu0 0
    %3023 = vmatpush1.bf16.msra.mxu0 0
    %3024 = vmatprep.subr.bf16.mxu0 0
    %3025 = vmatpush1.bf16.msra.mxu0 0
    %3026 = vmatprep.subr.bf16.mxu0 0
    %3027 = vmatpush1.bf16.msra.mxu0 0
    %3028 = vmatprep.subr.bf16.mxu0 %v2957
    %3029 = vmatpush1.bf16.msra.mxu0 %v2956
    %3030 = vmatprep.subr.bf16.mxu0 %v2953
    %3031 = vmatpush1.bf16.msra.mxu0 %v2952
    %3032 = vmatprep.subr.bf16.mxu0 %v2949
    %3033 = vmatpush1.bf16.msra.mxu0 %v2948
    %3034 = vmatprep.subr.bf16.mxu0 %v2945
    %3035 = vmatpush1.bf16.msra.mxu0 %v2944
    %3036 = vmatprep.subr.bf16.mxu0 0
    %3037 = vmatpush2.bf16.msra.mxu0 0
    %3038 = vmatprep.subr.bf16.mxu0 0
    %3039 = vmatpush2.bf16.msra.mxu0 0
    %3040 = vmatprep.subr.bf16.mxu0 0
    %3041 = vmatpush2.bf16.msra.mxu0 0
    %3042 = vmatprep.subr.bf16.mxu0 0
    %3043 = vmatpush2.bf16.msra.mxu0 0
    %3044 = vmatprep.subr.bf16.mxu0 0
    %3045 = vmatpush2.bf16.msra.mxu0 0
    %3046 = vmatprep.subr.bf16.mxu0 0
    %3047 = vmatpush2.bf16.msra.mxu0 0
    %3048 = vmatprep.subr.bf16.mxu0 0
    %3049 = vmatpush2.bf16.msra.mxu0 0
    %3050 = vmatprep.subr.bf16.mxu0 0
    %3051 = vmatpush2.bf16.msra.mxu0 0
    %3052 = vmatprep.mubr.bf16.mxu0 0
    %3053 = vmatmul.mubr.bf16.gmra.mxu0 %v2975
    %v3054 = vpop.f32.mrf.mxu0
    %v3055 = vadd.f32 0.0, %v3054
    %v3056 = vpop.f32.mrf.mxu0
    %v3057 = vadd.f32 0.0, %v3056
    %v3058 = vpop.f32.mrf.mxu0
    %v3059 = vadd.f32 0.0, %v3058
    %v3060 = vpop.f32.mrf.mxu0
    %v3061 = vadd.f32 0.0, %v3060
    %3062 = vdwg.mxu0
    %3063 = vst [vmem:[#allocation2] sm:$0xff] %v3012
    %3064 = vst [vmem:[#allocation2 + $0x8] sm:$0xff] %v3014
    %3065 = vst [vmem:[#allocation2 + $0x10] sm:$0xff] %v3055
    %3066 = vst [vmem:[#allocation2 + $0x18] sm:$0xff] %v3057
    %3067 = vst [vmem:[#allocation2 + $0x20] sm:$0xff] %v3016
    %3068 = vst [vmem:[#allocation2 + $0x28] sm:$0xff] %v3018
    %3069 = vst [vmem:[#allocation2 + $0x30] sm:$0xff] %v3059
    %3070 = vst [vmem:[#allocation2 + $0x38] sm:$0xff] %v3061
    // Predicated region
    $region50: #{forward.1} parent=1 // pred_check
      _
    $region51: #{forward.1} parent=1 // pred_check_branch
      %3072 = sbr.rel (0) target = $region53
    $region52: #{forward.1} parent=1 // pred_region
      %s3074 = ssub.s32 1024, 1024
      %3075 = vsyncadd [#allocation3], %s3074
      %s3076 = sshll.u32 [#allocation2], 4
      %s3077 = int_to_ptr.vmem [resolvable:$true] %s3076
      %3082 = dma.vmem_to_hbm [thread:$0]  %s3077, 1024, %s12, [#allocation3], 512, 512, 32
    $region53: #{forward.1} parent=1 // pred_fallthru
      _
    // Predicated region
    $region54: #{forward.1} parent=1 // pred_check
      _
    $region55: #{forward.1} parent=1 // pred_check_branch
      %3084 = sbr.rel (0) target = $region57
    $region56: #{forward.1} parent=1 // pred_region
      %3085 = dma.done [#allocation3], 1024
    $region57: #{forward.1} parent=1 // pred_fallthru
      _
    %3086 = vsyncpa [#allocation3], 1

</llo_original>
